<compile_context>
chip_gen: v7x
topology: tpu7x:2x2x1
jax: 0.10.0
libtpu: 0.0.40
codegen_flags: <defaults>
</compile_context>

<pallas_src>
import functools

import jax
import jax.numpy as jnp
import numpy as np
from jax.experimental import pallas as pl
from jax.experimental.pallas import tpu as pltpu

EPS = 1e-5            # nn.BatchNorm2d default eps
NEG_SLOPE = 0.01      # nn.LeakyReLU(0.01)
LANES = 128
_VMEM_LIMIT = 64 * 1024 * 1024       # scoped-VMEM headroom (tune per generation)
_PASS1_BUDGET = 8 * 1024 * 1024      # target working set for one pass-1 tile
_PASS2_BLOCK_BYTES = 4 * 1024 * 1024 # target f32 block size for pass 2


def _round_up(x, m):
    return (x + m - 1) // m * m


def _pass1_tile_h(H, W_p, Cin):
    """Rows per pass-1 tile so x (+3 kw-shifted bf16 copies), the f32 acc and the bf16
    y tile stay around _PASS1_BUDGET of VMEM."""
    cin_l = _round_up(Cin, LANES)                   # VMEM lane footprint of the input tile
    per_row = W_p * (LANES * 4                      # f32 accumulator
                     + 4 * cin_l * 2                # x tile + 3 kw-shifted copies (bf16)
                     + 2 * LANES * 2)               # bf16 y tile, double-buffered
    t = max(8, (_PASS1_BUDGET // per_row) // 8 * 8)
    return min(t, _round_up(H, 8))


def _pass2_tile_rows(rows_tot, W_p, C):
    """Largest multiple-of-8 divisor of rows_tot whose f32 block is <= ~4 MiB."""
    best = 8
    for t in range(8, rows_tot + 1, 8):
        if rows_tot % t == 0 and t * W_p * C * 4 <= _PASS2_BLOCK_BYTES:
            best = t
    return best


def _conv_stats_kernel(x_ref, halo_ref, w_ref, y_ref, stats_ref, *, H, W, need_mask):
    # x_ref:     (1, tH, W_p+2, Cin)   bf16  main rows of the spatially padded input tile
    # halo_ref:  (1, 2, W_p+2, Cin)    bf16  the 2 halo rows just below the tile
    # w_ref:     (3, 3, Cin, Cout_p)   bf16  HWIO weights (Cout zero-padded to 128)
    # y_ref:     (1, tH, W_p, Cout_p)  bf16  conv output tile (pre-BN)
    # stats_ref: (1, 1, 2, Cout_p)     f32   [sum, sum-of-squares] over valid pixels of this tile
    _, tH, Wp, Cout = y_ref.shape
    Cin = x_ref.shape[-1]

    x = jnp.concatenate([x_ref[0], halo_ref[0]], axis=0)     # (tH+2, Wp+2, Cin)

    # 3x3 conv = 9 back-to-back accumulating MXU matmuls into one f32 accumulator.
    # Only the kw shift touches the sublane axis (hoisted: 3 shifted copies per tile, not 9);
    # the kh shift is a major-dim slice, and the flatten to (tH*Wp, Cin) is layout-preserving
    # because Wp % 16 == 0.
    acc = jnp.zeros((tH * Wp, Cout), jnp.float32)
    for kw in range(3):
        xs = x[:, kw:kw + Wp, :]                              # (tH+2, Wp, Cin)
        for kh in range(3):
            patch = xs[kh:kh + tH].reshape(tH * Wp, Cin)
            acc += jnp.dot(patch, w_ref[kh, kw],
                           preferred_element_type=jnp.float32)
    # conv bias intentionally NOT added: training-mode BN mean subtraction cancels it exactly.

    y_ref[...] = acc.astype(y_ref.dtype).reshape(1, tH, Wp, Cout)

    acc3 = acc.reshape(tH, Wp, Cout)
    if need_mask:  # static: only when H or W were padded for tiling / layout
        row = jax.lax.broadcasted_iota(jnp.int32, (tH, Wp, 1), 0) + pl.program_id(1) * tH
        col = jax.lax.broadcasted_iota(jnp.int32, (tH, Wp, 1), 1)
        acc3 = jnp.where((row < H) & (col < W), acc3, 0.0)
    s = jnp.sum(acc3, axis=(0, 1), keepdims=True)             # (1, 1, Cout)
    sq = jnp.sum(acc3 * acc3, axis=(0, 1), keepdims=True)
    stats_ref[...] = jnp.concatenate([s, sq], axis=1).reshape(1, 1, 2, Cout)


def _bn_lrelu_kernel(y_ref, ss_ref, o_ref):
    # y_ref: (tR, W_p, Cout_p) bf16 ; ss_ref: (2, Cout_p) f32 [scale, shift] ; o_ref: f32
    y = y_ref[...].astype(jnp.float32)
    out = y * ss_ref[0:1, :] + ss_ref[1:2, :]
    o_ref[...] = jnp.where(out > 0, out, NEG_SLOPE * out)


@functools.partial(jax.jit, static_argnames=("nchw_out",))
def conv_block(x_nchw, w_oihw, bias, gamma, beta, nchw_out=True):
    """ConvBlock_ forward (training-mode BN). x: (N, Cin, H, W) -> (N, Cout, H, W)."""
    del bias  # mathematically a no-op under training-mode BatchNorm (batch mean cancels it)

    N, Cin, H, W = x_nchw.shape
    Cout = w_oihw.shape[0]
    Cout_p = _round_up(Cout, LANES)        # lane-dense outputs/stores
    W_p = _round_up(W, 16)                 # keep bf16 (16,128) reshapes layout-preserving

    tH = _pass1_tile_h(H, W_p, Cin)
    H_p = _round_up(H, tH)
    nH = H_p // tH
    H_tot = _round_up(H_p + 2, tH)         # rows of the padded input array

    # --- layout glue: NHWC, spatial pad, bf16 (single pass; NO channel padding in HBM) ---
    x = jnp.transpose(x_nchw, (0, 2, 3, 1))
    xp = jnp.pad(x, ((0, 0), (1, H_tot - H - 1), (1, W_p - W + 1), (0, 0))
                 ).astype(jnp.bfloat16)                       # (N, H_tot, W_p+2, Cin)
    # 2 halo rows per H-tile (rows (i+1)*tH and (i+1)*tH+1 of xp): ~2/tH extra input bytes.
    hrows = (np.arange(1, nH + 1)[:, None] * tH + np.arange(2)[None, :]).reshape(-1)
    halo = xp[:, hrows]                                       # (N, 2*nH, W_p+2, Cin)

    w = jnp.transpose(w_oihw, (2, 3, 1, 0))                   # HWIO
    w = jnp.pad(w, ((0, 0), (0, 0), (0, 0), (0, Cout_p - Cout))).astype(jnp.bfloat16)

    need_mask = (H_p != H) or (W_p != W)

    # --- pass 1: conv (bf16 out) + per-tile per-channel sum / sum-of-squares (f32) ---
    flops = 2 * 9 * N * H_p * W_p * Cin * Cout_p
    bytes_accessed = (xp.size * 2 + halo.size * 2 + w.size * 2
                      + N * H_p * W_p * Cout_p * 2 + N * nH * 2 * Cout_p * 4)
    y, stats = pl.pallas_call(
        functools.partial(_conv_stats_kernel, H=H, W=W, need_mask=need_mask),
        out_shape=(jax.ShapeDtypeStruct((N, H_p, W_p, Cout_p), jnp.bfloat16),
                   jax.ShapeDtypeStruct((N, nH, 2, Cout_p), jnp.float32)),
        grid=(N, nH),
        in_specs=[pl.BlockSpec((1, tH, W_p + 2, Cin), lambda n, i: (n, i, 0, 0)),
                  pl.BlockSpec((1, 2, W_p + 2, Cin), lambda n, i: (n, i, 0, 0)),
                  pl.BlockSpec((3, 3, Cin, Cout_p), lambda n, i: (0, 0, 0, 0))],
        out_specs=(pl.BlockSpec((1, tH, W_p, Cout_p), lambda n, i: (n, i, 0, 0)),
                   pl.BlockSpec((1, 1, 2, Cout_p), lambda n, i: (n, i, 0, 0))),
        compiler_params=pltpu.CompilerParams(
            dimension_semantics=("parallel", "parallel"),
            vmem_limit_bytes=_VMEM_LIMIT),
        cost_estimate=pl.CostEstimate(flops=flops, transcendentals=0,
                                      bytes_accessed=bytes_accessed),
    )(xp, halo, w)

    # --- tiny per-channel finalize (128 floats): fold BN into one scale + one shift ---
    cnt = jnp.float32(N * H * W)
    ssum = jnp.sum(stats[:, :, 0, :], axis=(0, 1))
    ssq = jnp.sum(stats[:, :, 1, :], axis=(0, 1))
    mean = ssum / cnt
    var = jnp.maximum(ssq / cnt - mean * mean, 0.0)           # biased batch variance
    gamma_p = jnp.pad(gamma.astype(jnp.float32), (0, Cout_p - Cout))
    beta_p = jnp.pad(beta.astype(jnp.float32), (0, Cout_p - Cout))
    scale = gamma_p * jax.lax.rsqrt(var + EPS)
    shift = beta_p - mean * scale
    ss = jnp.stack([scale, shift], axis=0)                    # (2, Cout_p)

    # --- pass 2: fused scale/shift + LeakyReLU on large lane-dense blocks (N, H folded) ---
    rows_tot = N * H_p
    tR = _pass2_tile_rows(rows_tot, W_p, Cout_p)
    y2 = y.reshape(rows_tot, W_p, Cout_p)
    out = pl.pallas_call(
        _bn_lrelu_kernel,
        out_shape=jax.ShapeDtypeStruct((rows_tot, W_p, Cout_p), jnp.float32),
        grid=(rows_tot // tR,),
        in_specs=[pl.BlockSpec((tR, W_p, Cout_p), lambda r: (r, 0, 0)),
                  pl.BlockSpec((2, Cout_p), lambda r: (0, 0))],
        out_specs=pl.BlockSpec((tR, W_p, Cout_p), lambda r: (r, 0, 0)),
        compiler_params=pltpu.CompilerParams(
            dimension_semantics=("parallel",),
            vmem_limit_bytes=_VMEM_LIMIT),
    )(y2, ss)
    # TODO(synk): emit bf16 here and alias onto y (input_output_aliases) if the consumer
    # tolerates bf16 activations; kept f32 to match the nn module's output precision.

    out = out.reshape(N, H_p, W_p, Cout_p)[:, :H, :W, :Cout]
    if nchw_out:
        out = jnp.transpose(out, (0, 3, 1, 2))                # optional NCHW round-trip
    return out


def _reference(x_nchw, w_oihw, bias, gamma, beta):
    """Pure-JAX reference: conv(+bias) + training-mode BN + LeakyReLU."""
    y = jax.lax.conv_general_dilated(
        x_nchw.astype(jnp.float32), w_oihw.astype(jnp.float32),
        window_strides=(1, 1), padding=((1, 1), (1, 1)),
        dimension_numbers=("NCHW", "OIHW", "NCHW"))
    y = y + bias.reshape(1, -1, 1, 1)
    mean = jnp.mean(y, axis=(0, 2, 3), keepdims=True)
    var = jnp.mean((y - mean) ** 2, axis=(0, 2, 3), keepdims=True)
    y = (y - mean) * jax.lax.rsqrt(var + EPS)
    y = y * gamma.reshape(1, -1, 1, 1) + beta.reshape(1, -1, 1, 1)
    return jnp.where(y > 0, y, NEG_SLOPE * y)


if __name__ == "__main__":
    key = jax.random.PRNGKey(0)
    N, Cin, Cout, H, W = 2, 4, 8, 16, 16

    kx, kw_, kb, kg, kbt = jax.random.split(key, 5)
    x = jax.random.normal(kx, (N, Cin, H, W), jnp.float32)
    w = jax.random.normal(kw_, (Cout, Cin, 3, 3), jnp.float32) * 0.1
    b = jax.random.normal(kb, (Cout,), jnp.float32) * 0.1
    gamma = 1.0 + 0.1 * jax.random.normal(kg, (Cout,), jnp.float32)
    beta = 0.1 * jax.random.normal(kbt, (Cout,), jnp.float32)

    out = jax.block_until_ready(conv_block(x, w, b, gamma, beta))
    assert out.shape == (N, Cout, H, W), out.shape

    # Tight-ish check: reference fed the same bf16-rounded conv inputs the kernel uses
    # (both accumulate the conv in f32); remaining gap is the bf16 intermediate storage.
    x_r = x.astype(jnp.bfloat16).astype(jnp.float32)
    w_r = w.astype(jnp.bfloat16).astype(jnp.float32)
    ref_bf16_in = jax.block_until_ready(_reference(x_r, w_r, b, gamma, beta))
    err = float(jnp.max(jnp.abs(out - ref_bf16_in)))
    assert err < 2.5e-2, f"max abs err vs bf16-input reference: {err}"

    # Loose sanity check against the pure-f32 module semantics.
    ref_f32 = jax.block_until_ready(_reference(x, w, b, gamma, beta))
    err32 = float(jnp.max(jnp.abs(out - ref_f32)))
    assert err32 < 1e-1, f"max abs err vs f32 reference: {err32}"

    print("KERNEL_OK")
</pallas_src>

<mosaic_0001>
module attributes {stable_mosaic.version = 11 : i64} {
  func.func @_conv_stats_kernel(%arg0: i32, %arg1: i32, %arg2: memref<1x16x18x4xbf16, #tpu.memory_space<vmem>>, %arg3: memref<1x2x18x4xbf16, #tpu.memory_space<vmem>>, %arg4: memref<3x3x4x128xbf16, #tpu.memory_space<vmem>>, %arg5: memref<1x16x16x128xbf16, #tpu.memory_space<vmem>>, %arg6: memref<1x1x2x128xf32, #tpu.memory_space<vmem>>) attributes {dimension_semantics = [#tpu.dimension_semantics<parallel>, #tpu.dimension_semantics<parallel>], iteration_bounds = array<i64: 2, 1>, scalar_prefetch = 0 : i64, scratch_operands = 0 : i64, tpu.core_type = #tpu.core_type<tc>, window_params = [{transform_indices = @transform_0, window_bounds = array<i64: 1, 16, 18, 4>}, {transform_indices = @transform_1, window_bounds = array<i64: 1, 2, 18, 4>}, {pipeline_mode = #tpu.pipeline_mode<synchronous>, transform_indices = @transform_2, window_bounds = array<i64: 3, 3, 4, 128>}, {transform_indices = @transform_3, window_bounds = array<i64: 1, 16, 16, 128>}, {transform_indices = @transform_4, window_bounds = array<i64: 1, 1, 2, 128>}]} {
    %c0 = arith.constant 0 : index
    %c0_0 = arith.constant 0 : index
    %c0_1 = arith.constant 0 : index
    %c0_2 = arith.constant 0 : index
    %0 = vector.load %arg2[%c0, %c0_0, %c0_1, %c0_2] : memref<1x16x18x4xbf16, #tpu.memory_space<vmem>>, vector<1x16x18x4xbf16>
    %1 = vector.shape_cast %0 : vector<1x16x18x4xbf16> to vector<16x18x4xbf16>
    %c0_3 = arith.constant 0 : index
    %c0_4 = arith.constant 0 : index
    %c0_5 = arith.constant 0 : index
    %c0_6 = arith.constant 0 : index
    %2 = vector.load %arg3[%c0_3, %c0_4, %c0_5, %c0_6] : memref<1x2x18x4xbf16, #tpu.memory_space<vmem>>, vector<1x2x18x4xbf16>
    %3 = vector.shape_cast %2 : vector<1x2x18x4xbf16> to vector<2x18x4xbf16>
    %4 = tpu.concatenate %1, %3 in 0 : vector<16x18x4xbf16>, vector<2x18x4xbf16> -> vector<18x18x4xbf16>
    %cst = arith.constant 0.000000e+00 : f32
    %5 = vector.broadcast %cst : f32 to vector<256x128xf32>
    %6 = vector.extract_strided_slice %4 {offsets = [0, 0, 0], sizes = [18, 16, 4], strides = [1, 1, 1]} : vector<18x18x4xbf16> to vector<18x16x4xbf16>
    %7 = vector.extract_strided_slice %6 {offsets = [0, 0, 0], sizes = [16, 16, 4], strides = [1, 1, 1]} : vector<18x16x4xbf16> to vector<16x16x4xbf16>
    %8 = vector.shape_cast %7 : vector<16x16x4xbf16> to vector<256x4xbf16>
    %c0_7 = arith.constant 0 : index
    %c0_8 = arith.constant 0 : index
    %c0_9 = arith.constant 0 : index
    %c0_10 = arith.constant 0 : index
    %9 = vector.load %arg4[%c0_7, %c0_8, %c0_9, %c0_10] : memref<3x3x4x128xbf16, #tpu.memory_space<vmem>>, vector<1x1x4x128xbf16>
    %10 = vector.shape_cast %9 : vector<1x1x4x128xbf16> to vector<4x128xbf16>
    %cst_11 = arith.constant dense<0.000000e+00> : vector<256x128xf32>
    %11 = tpu.matmul %8, %10, %cst_11 {dimension_numbers = #tpu.dot_dimension_numbers<[1], [0], [0], [1], [0, 0, 1, 1], [], []>} : vector<256x4xbf16>, vector<4x128xbf16>, vector<256x128xf32> -> vector<256x128xf32>
    %12 = arith.addf %5, %11 : vector<256x128xf32>
    %13 = vector.extract_strided_slice %6 {offsets = [1, 0, 0], sizes = [16, 16, 4], strides = [1, 1, 1]} : vector<18x16x4xbf16> to vector<16x16x4xbf16>
    %14 = vector.shape_cast %13 : vector<16x16x4xbf16> to vector<256x4xbf16>
    %c1 = arith.constant 1 : index
    %c0_12 = arith.constant 0 : index
    %c0_13 = arith.constant 0 : index
    %c0_14 = arith.constant 0 : index
    %15 = vector.load %arg4[%c1, %c0_12, %c0_13, %c0_14] : memref<3x3x4x128xbf16, #tpu.memory_space<vmem>>, vector<1x1x4x128xbf16>
    %16 = vector.shape_cast %15 : vector<1x1x4x128xbf16> to vector<4x128xbf16>
    %cst_15 = arith.constant dense<0.000000e+00> : vector<256x128xf32>
    %17 = tpu.matmul %14, %16, %cst_15 {dimension_numbers = #tpu.dot_dimension_numbers<[1], [0], [0], [1], [0, 0, 1, 1], [], []>} : vector<256x4xbf16>, vector<4x128xbf16>, vector<256x128xf32> -> vector<256x128xf32>
    %18 = arith.addf %12, %17 : vector<256x128xf32>
    %19 = vector.extract_strided_slice %6 {offsets = [2, 0, 0], sizes = [16, 16, 4], strides = [1, 1, 1]} : vector<18x16x4xbf16> to vector<16x16x4xbf16>
    %20 = vector.shape_cast %19 : vector<16x16x4xbf16> to vector<256x4xbf16>
    %c2 = arith.constant 2 : index
    %c0_16 = arith.constant 0 : index
    %c0_17 = arith.constant 0 : index
    %c0_18 = arith.constant 0 : index
    %21 = vector.load %arg4[%c2, %c0_16, %c0_17, %c0_18] : memref<3x3x4x128xbf16, #tpu.memory_space<vmem>>, vector<1x1x4x128xbf16>
    %22 = vector.shape_cast %21 : vector<1x1x4x128xbf16> to vector<4x128xbf16>
    %cst_19 = arith.constant dense<0.000000e+00> : vector<256x128xf32>
    %23 = tpu.matmul %20, %22, %cst_19 {dimension_numbers = #tpu.dot_dimension_numbers<[1], [0], [0], [1], [0, 0, 1, 1], [], []>} : vector<256x4xbf16>, vector<4x128xbf16>, vector<256x128xf32> -> vector<256x128xf32>
    %24 = arith.addf %18, %23 : vector<256x128xf32>
    %25 = vector.extract_strided_slice %4 {offsets = [0, 1, 0], sizes = [18, 16, 4], strides = [1, 1, 1]} : vector<18x18x4xbf16> to vector<18x16x4xbf16>
    %26 = vector.extract_strided_slice %25 {offsets = [0, 0, 0], sizes = [16, 16, 4], strides = [1, 1, 1]} : vector<18x16x4xbf16> to vector<16x16x4xbf16>
    %27 = vector.shape_cast %26 : vector<16x16x4xbf16> to vector<256x4xbf16>
    %c0_20 = arith.constant 0 : index
    %c1_21 = arith.constant 1 : index
    %c0_22 = arith.constant 0 : index
    %c0_23 = arith.constant 0 : index
    %28 = vector.load %arg4[%c0_20, %c1_21, %c0_22, %c0_23] : memref<3x3x4x128xbf16, #tpu.memory_space<vmem>>, vector<1x1x4x128xbf16>
    %29 = vector.shape_cast %28 : vector<1x1x4x128xbf16> to vector<4x128xbf16>
    %cst_24 = arith.constant dense<0.000000e+00> : vector<256x128xf32>
    %30 = tpu.matmul %27, %29, %cst_24 {dimension_numbers = #tpu.dot_dimension_numbers<[1], [0], [0], [1], [0, 0, 1, 1], [], []>} : vector<256x4xbf16>, vector<4x128xbf16>, vector<256x128xf32> -> vector<256x128xf32>
    %31 = arith.addf %24, %30 : vector<256x128xf32>
    %32 = vector.extract_strided_slice %25 {offsets = [1, 0, 0], sizes = [16, 16, 4], strides = [1, 1, 1]} : vector<18x16x4xbf16> to vector<16x16x4xbf16>
    %33 = vector.shape_cast %32 : vector<16x16x4xbf16> to vector<256x4xbf16>
    %c1_25 = arith.constant 1 : index
    %c1_26 = arith.constant 1 : index
    %c0_27 = arith.constant 0 : index
    %c0_28 = arith.constant 0 : index
    %34 = vector.load %arg4[%c1_25, %c1_26, %c0_27, %c0_28] : memref<3x3x4x128xbf16, #tpu.memory_space<vmem>>, vector<1x1x4x128xbf16>
    %35 = vector.shape_cast %34 : vector<1x1x4x128xbf16> to vector<4x128xbf16>
    %cst_29 = arith.constant dense<0.000000e+00> : vector<256x128xf32>
    %36 = tpu.matmul %33, %35, %cst_29 {dimension_numbers = #tpu.dot_dimension_numbers<[1], [0], [0], [1], [0, 0, 1, 1], [], []>} : vector<256x4xbf16>, vector<4x128xbf16>, vector<256x128xf32> -> vector<256x128xf32>
    %37 = arith.addf %31, %36 : vector<256x128xf32>
    %38 = vector.extract_strided_slice %25 {offsets = [2, 0, 0], sizes = [16, 16, 4], strides = [1, 1, 1]} : vector<18x16x4xbf16> to vector<16x16x4xbf16>
    %39 = vector.shape_cast %38 : vector<16x16x4xbf16> to vector<256x4xbf16>
    %c2_30 = arith.constant 2 : index
    %c1_31 = arith.constant 1 : index
    %c0_32 = arith.constant 0 : index
    %c0_33 = arith.constant 0 : index
    %40 = vector.load %arg4[%c2_30, %c1_31, %c0_32, %c0_33] : memref<3x3x4x128xbf16, #tpu.memory_space<vmem>>, vector<1x1x4x128xbf16>
    %41 = vector.shape_cast %40 : vector<1x1x4x128xbf16> to vector<4x128xbf16>
    %cst_34 = arith.constant dense<0.000000e+00> : vector<256x128xf32>
    %42 = tpu.matmul %39, %41, %cst_34 {dimension_numbers = #tpu.dot_dimension_numbers<[1], [0], [0], [1], [0, 0, 1, 1], [], []>} : vector<256x4xbf16>, vector<4x128xbf16>, vector<256x128xf32> -> vector<256x128xf32>
    %43 = arith.addf %37, %42 : vector<256x128xf32>
    %44 = vector.extract_strided_slice %4 {offsets = [0, 2, 0], sizes = [18, 16, 4], strides = [1, 1, 1]} : vector<18x18x4xbf16> to vector<18x16x4xbf16>
    %45 = vector.extract_strided_slice %44 {offsets = [0, 0, 0], sizes = [16, 16, 4], strides = [1, 1, 1]} : vector<18x16x4xbf16> to vector<16x16x4xbf16>
    %46 = vector.shape_cast %45 : vector<16x16x4xbf16> to vector<256x4xbf16>
    %c0_35 = arith.constant 0 : index
    %c2_36 = arith.constant 2 : index
    %c0_37 = arith.constant 0 : index
    %c0_38 = arith.constant 0 : index
    %47 = vector.load %arg4[%c0_35, %c2_36, %c0_37, %c0_38] : memref<3x3x4x128xbf16, #tpu.memory_space<vmem>>, vector<1x1x4x128xbf16>
    %48 = vector.shape_cast %47 : vector<1x1x4x128xbf16> to vector<4x128xbf16>
    %cst_39 = arith.constant dense<0.000000e+00> : vector<256x128xf32>
    %49 = tpu.matmul %46, %48, %cst_39 {dimension_numbers = #tpu.dot_dimension_numbers<[1], [0], [0], [1], [0, 0, 1, 1], [], []>} : vector<256x4xbf16>, vector<4x128xbf16>, vector<256x128xf32> -> vector<256x128xf32>
    %50 = arith.addf %43, %49 : vector<256x128xf32>
    %51 = vector.extract_strided_slice %44 {offsets = [1, 0, 0], sizes = [16, 16, 4], strides = [1, 1, 1]} : vector<18x16x4xbf16> to vector<16x16x4xbf16>
    %52 = vector.shape_cast %51 : vector<16x16x4xbf16> to vector<256x4xbf16>
    %c1_40 = arith.constant 1 : index
    %c2_41 = arith.constant 2 : index
    %c0_42 = arith.constant 0 : index
    %c0_43 = arith.constant 0 : index
    %53 = vector.load %arg4[%c1_40, %c2_41, %c0_42, %c0_43] : memref<3x3x4x128xbf16, #tpu.memory_space<vmem>>, vector<1x1x4x128xbf16>
    %54 = vector.shape_cast %53 : vector<1x1x4x128xbf16> to vector<4x128xbf16>
    %cst_44 = arith.constant dense<0.000000e+00> : vector<256x128xf32>
    %55 = tpu.matmul %52, %54, %cst_44 {dimension_numbers = #tpu.dot_dimension_numbers<[1], [0], [0], [1], [0, 0, 1, 1], [], []>} : vector<256x4xbf16>, vector<4x128xbf16>, vector<256x128xf32> -> vector<256x128xf32>
    %56 = arith.addf %50, %55 : vector<256x128xf32>
    %57 = vector.extract_strided_slice %44 {offsets = [2, 0, 0], sizes = [16, 16, 4], strides = [1, 1, 1]} : vector<18x16x4xbf16> to vector<16x16x4xbf16>
    %58 = vector.shape_cast %57 : vector<16x16x4xbf16> to vector<256x4xbf16>
    %c2_45 = arith.constant 2 : index
    %c2_46 = arith.constant 2 : index
    %c0_47 = arith.constant 0 : index
    %c0_48 = arith.constant 0 : index
    %59 = vector.load %arg4[%c2_45, %c2_46, %c0_47, %c0_48] : memref<3x3x4x128xbf16, #tpu.memory_space<vmem>>, vector<1x1x4x128xbf16>
    %60 = vector.shape_cast %59 : vector<1x1x4x128xbf16> to vector<4x128xbf16>
    %cst_49 = arith.constant dense<0.000000e+00> : vector<256x128xf32>
    %61 = tpu.matmul %58, %60, %cst_49 {dimension_numbers = #tpu.dot_dimension_numbers<[1], [0], [0], [1], [0, 0, 1, 1], [], []>} : vector<256x4xbf16>, vector<4x128xbf16>, vector<256x128xf32> -> vector<256x128xf32>
    %62 = arith.addf %56, %61 : vector<256x128xf32>
    %63 = arith.truncf %62 : vector<256x128xf32> to vector<256x128xbf16>
    %64 = vector.shape_cast %63 : vector<256x128xbf16> to vector<1x16x16x128xbf16>
    %c0_50 = arith.constant 0 : index
    %c0_51 = arith.constant 0 : index
    %c0_52 = arith.constant 0 : index
    %c0_53 = arith.constant 0 : index
    %65 = vector.load %arg5[%c0_50, %c0_51, %c0_52, %c0_53] : memref<1x16x16x128xbf16, #tpu.memory_space<vmem>>, vector<1x16x16x128xbf16>
    tpu.vector_store %arg5[%c0_50, %c0_51, %c0_52, %c0_53], %64 {strides = array<i32>} : memref<1x16x16x128xbf16, #tpu.memory_space<vmem>>, vector<1x16x16x128xbf16>,
    %66 = vector.shape_cast %62 : vector<256x128xf32> to vector<16x16x128xf32>
    %cst_54 = arith.constant dense<0.000000e+00> : vector<128xf32>
    %67 = vector.multi_reduction <add>, %66, %cst_54 [0, 1] : vector<16x16x128xf32> to vector<128xf32>
    %68 = vector.shape_cast %67 : vector<128xf32> to vector<1x1x128xf32>
    %69 = arith.mulf %66, %66 : vector<16x16x128xf32>
    %cst_55 = arith.constant dense<0.000000e+00> : vector<128xf32>
    %70 = vector.multi_reduction <add>, %69, %cst_55 [0, 1] : vector<16x16x128xf32> to vector<128xf32>
    %71 = vector.shape_cast %70 : vector<128xf32> to vector<1x1x128xf32>
    %72 = tpu.concatenate %68, %71 in 1 : vector<1x1x128xf32>, vector<1x1x128xf32> -> vector<1x2x128xf32>
    %73 = vector.shape_cast %72 : vector<1x2x128xf32> to vector<1x1x2x128xf32>
    %c0_56 = arith.constant 0 : index
    %c0_57 = arith.constant 0 : index
    %c0_58 = arith.constant 0 : index
    %c0_59 = arith.constant 0 : index
    %74 = vector.load %arg6[%c0_56, %c0_57, %c0_58, %c0_59] : memref<1x1x2x128xf32, #tpu.memory_space<vmem>>, vector<1x1x2x128xf32>
    tpu.vector_store %arg6[%c0_56, %c0_57, %c0_58, %c0_59], %73 {strides = array<i32>} : memref<1x1x2x128xf32, #tpu.memory_space<vmem>>, vector<1x1x2x128xf32>,
    return
  }
  func.func @transform_0(%arg0: i32, %arg1: i32) -> (i32, i32, i32, i32) {
    %c0_i32 = arith.constant 0 : i32
    %c0_i32_0 = arith.constant 0 : i32
    %c0_i32_1 = arith.constant 0 : i32
    return %arg0, %arg1, %c0_i32, %c0_i32_0 : i32, i32, i32, i32
  }
  func.func @transform_1(%arg0: i32, %arg1: i32) -> (i32, i32, i32, i32) {
    %c0_i32 = arith.constant 0 : i32
    %c0_i32_0 = arith.constant 0 : i32
    %c0_i32_1 = arith.constant 0 : i32
    return %arg0, %arg1, %c0_i32, %c0_i32_0 : i32, i32, i32, i32
  }
  func.func @transform_2(%arg0: i32, %arg1: i32) -> (i32, i32, i32, i32) {
    %c0_i32 = arith.constant 0 : i32
    %c0_i32_0 = arith.constant 0 : i32
    %c0_i32_1 = arith.constant 0 : i32
    %c0_i32_2 = arith.constant 0 : i32
    %c0_i32_3 = arith.constant 0 : i32
    return %c0_i32, %c0_i32_0, %c0_i32_1, %c0_i32_2 : i32, i32, i32, i32
  }
  func.func @transform_3(%arg0: i32, %arg1: i32) -> (i32, i32, i32, i32) {
    %c0_i32 = arith.constant 0 : i32
    %c0_i32_0 = arith.constant 0 : i32
    %c0_i32_1 = arith.constant 0 : i32
    return %arg0, %arg1, %c0_i32, %c0_i32_0 : i32, i32, i32, i32
  }
  func.func @transform_4(%arg0: i32, %arg1: i32) -> (i32, i32, i32, i32) {
    %c0_i32 = arith.constant 0 : i32
    %c0_i32_0 = arith.constant 0 : i32
    %c0_i32_1 = arith.constant 0 : i32
    return %arg0, %arg1, %c0_i32, %c0_i32_0 : i32, i32, i32, i32
  }
}

module attributes {stable_mosaic.version = 11 : i64} {
  func.func @_bn_lrelu_kernel(%arg0: i32, %arg1: memref<32x16x128xbf16, #tpu.memory_space<vmem>>, %arg2: memref<2x128xf32, #tpu.memory_space<vmem>>, %arg3: memref<32x16x128xf32, #tpu.memory_space<vmem>>) attributes {dimension_semantics = [#tpu.dimension_semantics<parallel>], iteration_bounds = array<i64: 1>, scalar_prefetch = 0 : i64, scratch_operands = 0 : i64, tpu.core_type = #tpu.core_type<tc>, window_params = [{transform_indices = @transform_0, window_bounds = array<i64: 32, 16, 128>}, {pipeline_mode = #tpu.pipeline_mode<synchronous>, transform_indices = @transform_1, window_bounds = array<i64: 2, 128>}, {transform_indices = @transform_2, window_bounds = array<i64: 32, 16, 128>}]} {
    %c0 = arith.constant 0 : index
    %c0_0 = arith.constant 0 : index
    %c0_1 = arith.constant 0 : index
    %0 = vector.load %arg1[%c0, %c0_0, %c0_1] : memref<32x16x128xbf16, #tpu.memory_space<vmem>>, vector<32x16x128xbf16>
    %1 = arith.extf %0 : vector<32x16x128xbf16> to vector<32x16x128xf32>
    %c0_2 = arith.constant 0 : index
    %c0_3 = arith.constant 0 : index
    %2 = vector.load %arg2[%c0_2, %c0_3] : memref<2x128xf32, #tpu.memory_space<vmem>>, vector<1x128xf32>
    %3 = vector.shape_cast %2 : vector<1x128xf32> to vector<1x1x128xf32>
    %4 = vector.broadcast %3 : vector<1x1x128xf32> to vector<32x16x128xf32>
    %5 = arith.mulf %1, %4 : vector<32x16x128xf32>
    %c1 = arith.constant 1 : index
    %c0_4 = arith.constant 0 : index
    %6 = vector.load %arg2[%c1, %c0_4] : memref<2x128xf32, #tpu.memory_space<vmem>>, vector<1x128xf32>
    %7 = vector.shape_cast %6 : vector<1x128xf32> to vector<1x1x128xf32>
    %8 = vector.broadcast %7 : vector<1x1x128xf32> to vector<32x16x128xf32>
    %9 = arith.addf %5, %8 : vector<32x16x128xf32>
    %cst = arith.constant 0.000000e+00 : f32
    %10 = vector.broadcast %cst : f32 to vector<32x16x128xf32>
    %11 = arith.cmpf ogt, %9, %10 : vector<32x16x128xf32>
    %cst_5 = arith.constant 0.00999999977 : f32
    %12 = vector.broadcast %cst_5 : f32 to vector<32x16x128xf32>
    %13 = arith.mulf %12, %9 : vector<32x16x128xf32>
    %14 = arith.select %11, %9, %13 : vector<32x16x128xi1>, vector<32x16x128xf32>
    %c0_6 = arith.constant 0 : index
    %c0_7 = arith.constant 0 : index
    %c0_8 = arith.constant 0 : index
    %15 = vector.load %arg3[%c0_6, %c0_7, %c0_8] : memref<32x16x128xf32, #tpu.memory_space<vmem>>, vector<32x16x128xf32>
    tpu.vector_store %arg3[%c0_6, %c0_7, %c0_8], %14 {strides = array<i32>} : memref<32x16x128xf32, #tpu.memory_space<vmem>>, vector<32x16x128xf32>,
    return
  }
  func.func @transform_0(%arg0: i32) -> (i32, i32, i32) {
    %c0_i32 = arith.constant 0 : i32
    %c0_i32_0 = arith.constant 0 : i32
    %c0_i32_1 = arith.constant 0 : i32
    return %arg0, %c0_i32, %c0_i32_0 : i32, i32, i32
  }
  func.func @transform_1(%arg0: i32) -> (i32, i32) {
    %c0_i32 = arith.constant 0 : i32
    %c0_i32_0 = arith.constant 0 : i32
    %c0_i32_1 = arith.constant 0 : i32
    return %c0_i32, %c0_i32_0 : i32, i32
  }
  func.func @transform_2(%arg0: i32) -> (i32, i32, i32) {
    %c0_i32 = arith.constant 0 : i32
    %c0_i32_0 = arith.constant 0 : i32
    %c0_i32_1 = arith.constant 0 : i32
    return %arg0, %c0_i32, %c0_i32_0 : i32, i32, i32
  }
}

</mosaic_0001>

<llo_original>
// kernel: conv_block.3
$region0: #{conv_block.3}
  #allocation0 [shape = 'u32[]', space=smem, size = 0x4, offset = 0x4, fixed_abs, tag = 'smem constant byte address 0x4 - core index']
  #allocation1 [shape = 'u32[144,128]{1,0:T(1,128)}', space=vmem, size = 0x12000, scoped, tag = 'internal scratch']
  %s0 = inlined_call_operand.hbm [shape: bf16[32,16,128], index: 0, kind: input, shape index: {}]
  %s1 = inlined_call_operand.hbm [shape: f32[2,128], index: 1, kind: input, shape index: {}]
  %s2 = inlined_call_operand.hbm [shape: f32[32,16,128], index: 2, kind: output, shape index: {}]
  %s3 = sld [smem:[#allocation0]]
  $region26: #{conv_block.3} parent=0
    _
  %s5 = ssub.s32 1, %s3
  %s6 = scalar_select 0, %s5, %s3
  $region1: #{conv_block.3} parent=0
    #allocation2 [shape = 'u8[131072]{0}', space=vmem, size = 0x20000, scoped, tag = 'input window, operand 0, single buffered']
    #allocation3 [shape = 's32[1]{0}', space=sflag, size = 0x4, scoped, tag = 'scoped memory for conv_block.3']
    #allocation4 [shape = 's32[1]{0}', space=sflag, size = 0x4, scoped, tag = 'scoped memory for conv_block.3']
    #allocation5 [shape = 'u8[1024]{0}', space=vmem, size = 0x400, scoped, tag = 'input window, operand 1, single buffered']
    #allocation6 [shape = 's32[1]{0}', space=sflag, size = 0x4, scoped, tag = 'scoped memory for conv_block.3']
    #allocation7 [shape = 'u8[262144]{0}', space=vmem, size = 0x40000, scoped, tag = 'output window, operand 0, single buffered']
    %7 = vsyncpa [#allocation3], 0
    %8 = vsyncpa [#allocation6], 0
    %9 = vsyncpa [#allocation4], 0
    // Predicated region
    $region2: #{conv_block.3} parent=1 // pred_check
      _
    $region3: #{conv_block.3} parent=1 // pred_check_branch
      %11 = sbr.rel (0) target = $region5
    $region4: #{conv_block.3} parent=1 // pred_region
      %s13 = ssub.s32 4096, 4096
      %14 = vsyncadd [#allocation3], %s13
      %s15 = sshll.u32 [#allocation2], 4
      %s16 = int_to_ptr.vmem [resolvable:$true] %s15
      %21 = dma.hbm_to_vmem [thread:$0]  %s0, 4096, %s16, [#allocation3], 64, 64, 4
    $region5: #{conv_block.3} parent=1 // pred_fallthru
      _
    // Predicated region
    $region6: #{conv_block.3} parent=1 // pred_check
      _
    $region7: #{conv_block.3} parent=1 // pred_check_branch
      %23 = sbr.rel (0) target = $region9
    $region8: #{conv_block.3} parent=1 // pred_region
      %s25 = ssub.s32 32, 32
      %26 = vsyncadd [#allocation6], %s25
      %s28 = sshll.u32 [#allocation5], 4
      %s29 = int_to_ptr.vmem [resolvable:$true] %s28
      %31 = dma.hbm_to_vmem [thread:$0]  %s1, 32, %s29, [#allocation6]
    $region9: #{conv_block.3} parent=1 // pred_fallthru
      _
    // Predicated region
    $region10: #{conv_block.3} parent=1 // pred_check
      _
    $region11: #{conv_block.3} parent=1 // pred_check_branch
      %33 = sbr.rel (0) target = $region13
    $region12: #{conv_block.3} parent=1 // pred_region
      %34 = dma.done [#allocation3], 4096
    $region13: #{conv_block.3} parent=1 // pred_fallthru
      _
    // Predicated region
    $region14: #{conv_block.3} parent=1 // pred_check
      _
    $region15: #{conv_block.3} parent=1 // pred_check_branch
      %36 = sbr.rel (0) target = $region17
    $region16: #{conv_block.3} parent=1 // pred_region
      %37 = dma.done [#allocation6], 32
    $region17: #{conv_block.3} parent=1 // pred_fallthru
      _
    %v38 = vld [vmem:[#allocation2] sm:$0xf]
    %v39 = vld [vmem:[#allocation2 + $0x4] sm:$0xf]
    %v40 = vld [vmem:[#allocation2 + $0x8] sm:$0xf]
    %v41 = vld [vmem:[#allocation2 + $0xc] sm:$0xf]
    %v42 = vld [vmem:[#allocation2 + $0x10] sm:$0xf]
    %v43 = vld [vmem:[#allocation2 + $0x14] sm:$0xf]
    %v44 = vld [vmem:[#allocation2 + $0x18] sm:$0xf]
    %v45 = vld [vmem:[#allocation2 + $0x1c] sm:$0xf]
    %v46 = vld [vmem:[#allocation2 + $0x20] sm:$0xf]
    %v47 = vld [vmem:[#allocation2 + $0x24] sm:$0xf]
    %v48 = vld [vmem:[#allocation2 + $0x28] sm:$0xf]
    %v49 = vld [vmem:[#allocation2 + $0x2c] sm:$0xf]
    %v50 = vld [vmem:[#allocation2 + $0x30] sm:$0xf]
    %v51 = vld [vmem:[#allocation2 + $0x34] sm:$0xf]
    %v52 = vld [vmem:[#allocation2 + $0x38] sm:$0xf]
    %v53 = vld [vmem:[#allocation2 + $0x3c] sm:$0xf]
    %v54 = vld [vmem:[#allocation2 + $0x40] sm:$0xf]
    %v55 = vld [vmem:[#allocation2 + $0x44] sm:$0xf]
    %v56 = vld [vmem:[#allocation2 + $0x48] sm:$0xf]
    %v57 = vld [vmem:[#allocation2 + $0x4c] sm:$0xf]
    %v58 = vld [vmem:[#allocation2 + $0x50] sm:$0xf]
    %v59 = vld [vmem:[#allocation2 + $0x54] sm:$0xf]
    %v60 = vld [vmem:[#allocation2 + $0x58] sm:$0xf]
    %v61 = vld [vmem:[#allocation2 + $0x5c] sm:$0xf]
    %v62 = vld [vmem:[#allocation2 + $0x60] sm:$0xf]
    %v63 = vld [vmem:[#allocation2 + $0x64] sm:$0xf]
    %v64 = vld [vmem:[#allocation2 + $0x68] sm:$0xf]
    %v65 = vld [vmem:[#allocation2 + $0x6c] sm:$0xf]
    %v66 = vld [vmem:[#allocation2 + $0x70] sm:$0xf]
    %v67 = vld [vmem:[#allocation2 + $0x74] sm:$0xf]
    %v68 = vld [vmem:[#allocation2 + $0x78] sm:$0xf]
    %v69 = vld [vmem:[#allocation2 + $0x7c] sm:$0xf]
    %v70 = vld [vmem:[#allocation2 + $0x80] sm:$0xf]
    %v71 = vld [vmem:[#allocation2 + $0x84] sm:$0xf]
    %v72 = vld [vmem:[#allocation2 + $0x88] sm:$0xf]
    %v73 = vld [vmem:[#allocation2 + $0x8c] sm:$0xf]
    %v74 = vld [vmem:[#allocation2 + $0x90] sm:$0xf]
    %v75 = vld [vmem:[#allocation2 + $0x94] sm:$0xf]
    %v76 = vld [vmem:[#allocation2 + $0x98] sm:$0xf]
    %v77 = vld [vmem:[#allocation2 + $0x9c] sm:$0xf]
    %v78 = vld [vmem:[#allocation2 + $0xa0] sm:$0xf]
    %v79 = vld [vmem:[#allocation2 + $0xa4] sm:$0xf]
    %v80 = vld [vmem:[#allocation2 + $0xa8] sm:$0xf]
    %v81 = vld [vmem:[#allocation2 + $0xac] sm:$0xf]
    %v82 = vld [vmem:[#allocation2 + $0xb0] sm:$0xf]
    %v83 = vld [vmem:[#allocation2 + $0xb4] sm:$0xf]
    %v84 = vld [vmem:[#allocation2 + $0xb8] sm:$0xf]
    %v85 = vld [vmem:[#allocation2 + $0xbc] sm:$0xf]
    %v86 = vld [vmem:[#allocation2 + $0xc0] sm:$0xf]
    %v87 = vld [vmem:[#allocation2 + $0xc4] sm:$0xf]
    %v88 = vld [vmem:[#allocation2 + $0xc8] sm:$0xf]
    %v89 = vld [vmem:[#allocation2 + $0xcc] sm:$0xf]
    %v90 = vld [vmem:[#allocation2 + $0xd0] sm:$0xf]
    %v91 = vld [vmem:[#allocation2 + $0xd4] sm:$0xf]
    %v92 = vld [vmem:[#allocation2 + $0xd8] sm:$0xf]
    %v93 = vld [vmem:[#allocation2 + $0xdc] sm:$0xf]
    %v94 = vld [vmem:[#allocation2 + $0xe0] sm:$0xf]
    %v95 = vld [vmem:[#allocation2 + $0xe4] sm:$0xf]
    %v96 = vld [vmem:[#allocation2 + $0xe8] sm:$0xf]
    %v97 = vld [vmem:[#allocation2 + $0xec] sm:$0xf]
    %v98 = vld [vmem:[#allocation2 + $0xf0] sm:$0xf]
    %v99 = vld [vmem:[#allocation2 + $0xf4] sm:$0xf]
    %v100 = vld [vmem:[#allocation2 + $0xf8] sm:$0xf]
    %v101 = vld [vmem:[#allocation2 + $0xfc] sm:$0xf]
    %v102 = vunpack.c.l.bf16 %v38
    %v103 = vunpack.c.l.bf16 %v39
    %v104 = vunpack.c.l.bf16 %v40
    %v105 = vunpack.c.l.bf16 %v41
    %v106 = vunpack.c.l.bf16 %v42
    %v107 = vunpack.c.l.bf16 %v43
    %v108 = vunpack.c.l.bf16 %v44
    %v109 = vunpack.c.l.bf16 %v45
    %v110 = vunpack.c.l.bf16 %v46
    %v111 = vunpack.c.l.bf16 %v47
    %v112 = vunpack.c.l.bf16 %v48
    %v113 = vunpack.c.l.bf16 %v49
    %v114 = vunpack.c.l.bf16 %v50
    %v115 = vunpack.c.l.bf16 %v51
    %v116 = vunpack.c.l.bf16 %v52
    %v117 = vunpack.c.l.bf16 %v53
    %v118 = vunpack.c.l.bf16 %v54
    %v119 = vunpack.c.l.bf16 %v55
    %v120 = vunpack.c.l.bf16 %v56
    %v121 = vunpack.c.l.bf16 %v57
    %v122 = vunpack.c.l.bf16 %v58
    %v123 = vunpack.c.l.bf16 %v59
    %v124 = vunpack.c.l.bf16 %v60
    %v125 = vunpack.c.l.bf16 %v61
    %v126 = vunpack.c.l.bf16 %v62
    %v127 = vunpack.c.l.bf16 %v63
    %v128 = vunpack.c.l.bf16 %v64
    %v129 = vunpack.c.l.bf16 %v65
    %v130 = vunpack.c.l.bf16 %v66
    %v131 = vunpack.c.l.bf16 %v67
    %v132 = vunpack.c.l.bf16 %v68
    %v133 = vunpack.c.l.bf16 %v69
    %v134 = vunpack.c.l.bf16 %v70
    %v135 = vunpack.c.l.bf16 %v71
    %v136 = vunpack.c.l.bf16 %v72
    %v137 = vunpack.c.l.bf16 %v73
    %v138 = vunpack.c.l.bf16 %v74
    %v139 = vunpack.c.l.bf16 %v75
    %v140 = vunpack.c.l.bf16 %v76
    %v141 = vunpack.c.l.bf16 %v77
    %v142 = vunpack.c.l.bf16 %v78
    %v143 = vunpack.c.l.bf16 %v79
    %v144 = vunpack.c.l.bf16 %v80
    %v145 = vunpack.c.l.bf16 %v81
    %v146 = vunpack.c.l.bf16 %v82
    %v147 = vunpack.c.l.bf16 %v83
    %v148 = vunpack.c.l.bf16 %v84
    %v149 = vunpack.c.l.bf16 %v85
    %v150 = vunpack.c.l.bf16 %v86
    %v151 = vunpack.c.l.bf16 %v87
    %v152 = vunpack.c.l.bf16 %v88
    %v153 = vunpack.c.l.bf16 %v89
    %v154 = vunpack.c.l.bf16 %v90
    %v155 = vunpack.c.l.bf16 %v91
    %v156 = vunpack.c.l.bf16 %v92
    %v157 = vunpack.c.l.bf16 %v93
    %v158 = vunpack.c.l.bf16 %v94
    %v159 = vunpack.c.l.bf16 %v95
    %v160 = vunpack.c.l.bf16 %v96
    %v161 = vunpack.c.l.bf16 %v97
    %v162 = vunpack.c.l.bf16 %v98
    %v163 = vunpack.c.l.bf16 %v99
    %v164 = vunpack.c.l.bf16 %v100
    %v165 = vunpack.c.l.bf16 %v101
    %v166 = vld [vmem:[#allocation5] sm:$0x1]
    %v167 = vlaneseq
    %v168 = vshrl.u32 %v167, 7
    %v169 = vsub.s32 0, %v168
    %v170 = vrot.slane %v166, %v169
    %v171 = vmul.f32 %v102, %v170
    %v172 = vmul.f32 %v103, %v170
    %v173 = vmul.f32 %v104, %v170
    %v174 = vmul.f32 %v105, %v170
    %v175 = vmul.f32 %v106, %v170
    %v176 = vmul.f32 %v107, %v170
    %v177 = vmul.f32 %v108, %v170
    %v178 = vmul.f32 %v109, %v170
    %v179 = vmul.f32 %v110, %v170
    %v180 = vmul.f32 %v111, %v170
    %v181 = vmul.f32 %v112, %v170
    %v182 = vmul.f32 %v113, %v170
    %v183 = vmul.f32 %v114, %v170
    %v184 = vmul.f32 %v115, %v170
    %v185 = vmul.f32 %v116, %v170
    %v186 = vmul.f32 %v117, %v170
    %v187 = vmul.f32 %v118, %v170
    %v188 = vmul.f32 %v119, %v170
    %v189 = vmul.f32 %v120, %v170
    %v190 = vmul.f32 %v121, %v170
    %v191 = vmul.f32 %v122, %v170
    %v192 = vmul.f32 %v123, %v170
    %v193 = vmul.f32 %v124, %v170
    %v194 = vmul.f32 %v125, %v170
    %v195 = vmul.f32 %v126, %v170
    %v196 = vmul.f32 %v127, %v170
    %v197 = vmul.f32 %v128, %v170
    %v198 = vmul.f32 %v129, %v170
    %v199 = vmul.f32 %v130, %v170
    %v200 = vmul.f32 %v131, %v170
    %v201 = vmul.f32 %v132, %v170
    %v202 = vmul.f32 %v133, %v170
    %v203 = vmul.f32 %v134, %v170
    %v204 = vmul.f32 %v135, %v170
    %v205 = vmul.f32 %v136, %v170
    %v206 = vmul.f32 %v137, %v170
    %v207 = vmul.f32 %v138, %v170
    %v208 = vmul.f32 %v139, %v170
    %v209 = vmul.f32 %v140, %v170
    %v210 = vmul.f32 %v141, %v170
    %v211 = vmul.f32 %v142, %v170
    %v212 = vmul.f32 %v143, %v170
    %v213 = vmul.f32 %v144, %v170
    %v214 = vmul.f32 %v145, %v170
    %v215 = vmul.f32 %v146, %v170
    %v216 = vmul.f32 %v147, %v170
    %v217 = vmul.f32 %v148, %v170
    %v218 = vmul.f32 %v149, %v170
    %v219 = vmul.f32 %v150, %v170
    %v220 = vmul.f32 %v151, %v170
    %v221 = vmul.f32 %v152, %v170
    %v222 = vmul.f32 %v153, %v170
    %v223 = vmul.f32 %v154, %v170
    %v224 = vmul.f32 %v155, %v170
    %v225 = vmul.f32 %v156, %v170
    %v226 = vmul.f32 %v157, %v170
    %v227 = vmul.f32 %v158, %v170
    %v228 = vmul.f32 %v159, %v170
    %v229 = vmul.f32 %v160, %v170
    %v230 = vmul.f32 %v161, %v170
    %v231 = vmul.f32 %v162, %v170
    %v232 = vmul.f32 %v163, %v170
    %v233 = vmul.f32 %v164, %v170
    %v234 = vmul.f32 %v165, %v170
    %v235 = vld [vmem:[#allocation5 + $0x1] sm:$0x1]
    %v236 = vlaneseq
    %v237 = vshrl.u32 %v236, 7
    %v238 = vsub.s32 0, %v237
    %v239 = vrot.slane %v235, %v238
    %v240 = vadd.f32 %v171, %v239
    %v241 = vadd.f32 %v172, %v239
    %v242 = vadd.f32 %v173, %v239
    %v243 = vadd.f32 %v174, %v239
    %v244 = vadd.f32 %v175, %v239
    %v245 = vadd.f32 %v176, %v239
    %v246 = vadd.f32 %v177, %v239
    %v247 = vadd.f32 %v178, %v239
    %v248 = vadd.f32 %v179, %v239
    %v249 = vadd.f32 %v180, %v239
    %v250 = vadd.f32 %v181, %v239
    %v251 = vadd.f32 %v182, %v239
    %v252 = vadd.f32 %v183, %v239
    %v253 = vadd.f32 %v184, %v239
    %v254 = vadd.f32 %v185, %v239
    %v255 = vadd.f32 %v186, %v239
    %v256 = vadd.f32 %v187, %v239
    %v257 = vadd.f32 %v188, %v239
    %v258 = vadd.f32 %v189, %v239
    %v259 = vadd.f32 %v190, %v239
    %v260 = vadd.f32 %v191, %v239
    %v261 = vadd.f32 %v192, %v239
    %v262 = vadd.f32 %v193, %v239
    %v263 = vadd.f32 %v194, %v239
    %v264 = vadd.f32 %v195, %v239
    %v265 = vadd.f32 %v196, %v239
    %v266 = vadd.f32 %v197, %v239
    %v267 = vadd.f32 %v198, %v239
    %v268 = vadd.f32 %v199, %v239
    %v269 = vadd.f32 %v200, %v239
    %v270 = vadd.f32 %v201, %v239
    %v271 = vadd.f32 %v202, %v239
    %v272 = vadd.f32 %v203, %v239
    %v273 = vadd.f32 %v204, %v239
    %v274 = vadd.f32 %v205, %v239
    %v275 = vadd.f32 %v206, %v239
    %v276 = vadd.f32 %v207, %v239
    %v277 = vadd.f32 %v208, %v239
    %v278 = vadd.f32 %v209, %v239
    %v279 = vadd.f32 %v210, %v239
    %v280 = vadd.f32 %v211, %v239
    %v281 = vadd.f32 %v212, %v239
    %v282 = vadd.f32 %v213, %v239
    %v283 = vadd.f32 %v214, %v239
    %v284 = vadd.f32 %v215, %v239
    %v285 = vadd.f32 %v216, %v239
    %v286 = vadd.f32 %v217, %v239
    %v287 = vadd.f32 %v218, %v239
    %v288 = vadd.f32 %v219, %v239
    %v289 = vadd.f32 %v220, %v239
    %v290 = vadd.f32 %v221, %v239
    %v291 = vadd.f32 %v222, %v239
    %v292 = vadd.f32 %v223, %v239
    %v293 = vadd.f32 %v224, %v239
    %v294 = vadd.f32 %v225, %v239
    %v295 = vadd.f32 %v226, %v239
    %v296 = vadd.f32 %v227, %v239
    %v297 = vadd.f32 %v228, %v239
    %v298 = vadd.f32 %v229, %v239
    %v299 = vadd.f32 %v230, %v239
    %v300 = vadd.f32 %v231, %v239
    %v301 = vadd.f32 %v232, %v239
    %v302 = vadd.f32 %v233, %v239
    %v303 = vadd.f32 %v234, %v239
    %vm304 = vcmp.gt.f32.partialorder %v240, 0.0
    %vm305 = vcmp.gt.f32.partialorder %v241, 0.0
    %vm306 = vcmp.gt.f32.partialorder %v242, 0.0
    %vm307 = vcmp.gt.f32.partialorder %v243, 0.0
    %vm308 = vcmp.gt.f32.partialorder %v244, 0.0
    %vm309 = vcmp.gt.f32.partialorder %v245, 0.0
    %vm310 = vcmp.gt.f32.partialorder %v246, 0.0
    %vm311 = vcmp.gt.f32.partialorder %v247, 0.0
    %vm312 = vcmp.gt.f32.partialorder %v248, 0.0
    %vm313 = vcmp.gt.f32.partialorder %v249, 0.0
    %vm314 = vcmp.gt.f32.partialorder %v250, 0.0
    %vm315 = vcmp.gt.f32.partialorder %v251, 0.0
    %vm316 = vcmp.gt.f32.partialorder %v252, 0.0
    %vm317 = vcmp.gt.f32.partialorder %v253, 0.0
    %vm318 = vcmp.gt.f32.partialorder %v254, 0.0
    %vm319 = vcmp.gt.f32.partialorder %v255, 0.0
    %vm320 = vcmp.gt.f32.partialorder %v256, 0.0
    %vm321 = vcmp.gt.f32.partialorder %v257, 0.0
    %vm322 = vcmp.gt.f32.partialorder %v258, 0.0
    %vm323 = vcmp.gt.f32.partialorder %v259, 0.0
    %vm324 = vcmp.gt.f32.partialorder %v260, 0.0
    %vm325 = vcmp.gt.f32.partialorder %v261, 0.0
    %vm326 = vcmp.gt.f32.partialorder %v262, 0.0
    %vm327 = vcmp.gt.f32.partialorder %v263, 0.0
    %vm328 = vcmp.gt.f32.partialorder %v264, 0.0
    %vm329 = vcmp.gt.f32.partialorder %v265, 0.0
    %vm330 = vcmp.gt.f32.partialorder %v266, 0.0
    %vm331 = vcmp.gt.f32.partialorder %v267, 0.0
    %vm332 = vcmp.gt.f32.partialorder %v268, 0.0
    %vm333 = vcmp.gt.f32.partialorder %v269, 0.0
    %vm334 = vcmp.gt.f32.partialorder %v270, 0.0
    %vm335 = vcmp.gt.f32.partialorder %v271, 0.0
    %vm336 = vcmp.gt.f32.partialorder %v272, 0.0
    %vm337 = vcmp.gt.f32.partialorder %v273, 0.0
    %vm338 = vcmp.gt.f32.partialorder %v274, 0.0
    %vm339 = vcmp.gt.f32.partialorder %v275, 0.0
    %vm340 = vcmp.gt.f32.partialorder %v276, 0.0
    %vm341 = vcmp.gt.f32.partialorder %v277, 0.0
    %vm342 = vcmp.gt.f32.partialorder %v278, 0.0
    %vm343 = vcmp.gt.f32.partialorder %v279, 0.0
    %vm344 = vcmp.gt.f32.partialorder %v280, 0.0
    %vm345 = vcmp.gt.f32.partialorder %v281, 0.0
    %vm346 = vcmp.gt.f32.partialorder %v282, 0.0
    %vm347 = vcmp.gt.f32.partialorder %v283, 0.0
    %vm348 = vcmp.gt.f32.partialorder %v284, 0.0
    %vm349 = vcmp.gt.f32.partialorder %v285, 0.0
    %vm350 = vcmp.gt.f32.partialorder %v286, 0.0
    %vm351 = vcmp.gt.f32.partialorder %v287, 0.0
    %vm352 = vcmp.gt.f32.partialorder %v288, 0.0
    %vm353 = vcmp.gt.f32.partialorder %v289, 0.0
    %vm354 = vcmp.gt.f32.partialorder %v290, 0.0
    %vm355 = vcmp.gt.f32.partialorder %v291, 0.0
    %vm356 = vcmp.gt.f32.partialorder %v292, 0.0
    %vm357 = vcmp.gt.f32.partialorder %v293, 0.0
    %vm358 = vcmp.gt.f32.partialorder %v294, 0.0
    %vm359 = vcmp.gt.f32.partialorder %v295, 0.0
    %vm360 = vcmp.gt.f32.partialorder %v296, 0.0
    %vm361 = vcmp.gt.f32.partialorder %v297, 0.0
    %vm362 = vcmp.gt.f32.partialorder %v298, 0.0
    %vm363 = vcmp.gt.f32.partialorder %v299, 0.0
    %vm364 = vcmp.gt.f32.partialorder %v300, 0.0
    %vm365 = vcmp.gt.f32.partialorder %v301, 0.0
    %vm366 = vcmp.gt.f32.partialorder %v302, 0.0
    %vm367 = vcmp.gt.f32.partialorder %v303, 0.0
    %v368 = vmul.f32 %v240, 0.01
    %v369 = vmul.f32 %v241, 0.01
    %v370 = vmul.f32 %v242, 0.01
    %v371 = vmul.f32 %v243, 0.01
    %v372 = vmul.f32 %v244, 0.01
    %v373 = vmul.f32 %v245, 0.01
    %v374 = vmul.f32 %v246, 0.01
    %v375 = vmul.f32 %v247, 0.01
    %v376 = vmul.f32 %v248, 0.01
    %v377 = vmul.f32 %v249, 0.01
    %v378 = vmul.f32 %v250, 0.01
    %v379 = vmul.f32 %v251, 0.01
    %v380 = vmul.f32 %v252, 0.01
    %v381 = vmul.f32 %v253, 0.01
    %v382 = vmul.f32 %v254, 0.01
    %v383 = vmul.f32 %v255, 0.01
    %v384 = vmul.f32 %v256, 0.01
    %v385 = vmul.f32 %v257, 0.01
    %v386 = vmul.f32 %v258, 0.01
    %v387 = vmul.f32 %v259, 0.01
    %v388 = vmul.f32 %v260, 0.01
    %v389 = vmul.f32 %v261, 0.01
    %v390 = vmul.f32 %v262, 0.01
    %v391 = vmul.f32 %v263, 0.01
    %v392 = vmul.f32 %v264, 0.01
    %v393 = vmul.f32 %v265, 0.01
    %v394 = vmul.f32 %v266, 0.01
    %v395 = vmul.f32 %v267, 0.01
    %v396 = vmul.f32 %v268, 0.01
    %v397 = vmul.f32 %v269, 0.01
    %v398 = vmul.f32 %v270, 0.01
    %v399 = vmul.f32 %v271, 0.01
    %v400 = vmul.f32 %v272, 0.01
    %v401 = vmul.f32 %v273, 0.01
    %v402 = vmul.f32 %v274, 0.01
    %v403 = vmul.f32 %v275, 0.01
    %v404 = vmul.f32 %v276, 0.01
    %v405 = vmul.f32 %v277, 0.01
    %v406 = vmul.f32 %v278, 0.01
    %v407 = vmul.f32 %v279, 0.01
    %v408 = vmul.f32 %v280, 0.01
    %v409 = vmul.f32 %v281, 0.01
    %v410 = vmul.f32 %v282, 0.01
    %v411 = vmul.f32 %v283, 0.01
    %v412 = vmul.f32 %v284, 0.01
    %v413 = vmul.f32 %v285, 0.01
    %v414 = vmul.f32 %v286, 0.01
    %v415 = vmul.f32 %v287, 0.01
    %v416 = vmul.f32 %v288, 0.01
    %v417 = vmul.f32 %v289, 0.01
    %v418 = vmul.f32 %v290, 0.01
    %v419 = vmul.f32 %v291, 0.01
    %v420 = vmul.f32 %v292, 0.01
    %v421 = vmul.f32 %v293, 0.01
    %v422 = vmul.f32 %v294, 0.01
    %v423 = vmul.f32 %v295, 0.01
    %v424 = vmul.f32 %v296, 0.01
    %v425 = vmul.f32 %v297, 0.01
    %v426 = vmul.f32 %v298, 0.01
    %v427 = vmul.f32 %v299, 0.01
    %v428 = vmul.f32 %v300, 0.01
    %v429 = vmul.f32 %v301, 0.01
    %v430 = vmul.f32 %v302, 0.01
    %v431 = vmul.f32 %v303, 0.01
    %v432 = vsel %vm304, %v240, %v368
    %v433 = vsel %vm305, %v241, %v369
    %v434 = vsel %vm306, %v242, %v370
    %v435 = vsel %vm307, %v243, %v371
    %v436 = vsel %vm308, %v244, %v372
    %v437 = vsel %vm309, %v245, %v373
    %v438 = vsel %vm310, %v246, %v374
    %v439 = vsel %vm311, %v247, %v375
    %v440 = vsel %vm312, %v248, %v376
    %v441 = vsel %vm313, %v249, %v377
    %v442 = vsel %vm314, %v250, %v378
    %v443 = vsel %vm315, %v251, %v379
    %v444 = vsel %vm316, %v252, %v380
    %v445 = vsel %vm317, %v253, %v381
    %v446 = vsel %vm318, %v254, %v382
    %v447 = vsel %vm319, %v255, %v383
    %v448 = vsel %vm320, %v256, %v384
    %v449 = vsel %vm321, %v257, %v385
    %v450 = vsel %vm322, %v258, %v386
    %v451 = vsel %vm323, %v259, %v387
    %v452 = vsel %vm324, %v260, %v388
    %v453 = vsel %vm325, %v261, %v389
    %v454 = vsel %vm326, %v262, %v390
    %v455 = vsel %vm327, %v263, %v391
    %v456 = vsel %vm328, %v264, %v392
    %v457 = vsel %vm329, %v265, %v393
    %v458 = vsel %vm330, %v266, %v394
    %v459 = vsel %vm331, %v267, %v395
    %v460 = vsel %vm332, %v268, %v396
    %v461 = vsel %vm333, %v269, %v397
    %v462 = vsel %vm334, %v270, %v398
    %v463 = vsel %vm335, %v271, %v399
    %v464 = vsel %vm336, %v272, %v400
    %v465 = vsel %vm337, %v273, %v401
    %v466 = vsel %vm338, %v274, %v402
    %v467 = vsel %vm339, %v275, %v403
    %v468 = vsel %vm340, %v276, %v404
    %v469 = vsel %vm341, %v277, %v405
    %v470 = vsel %vm342, %v278, %v406
    %v471 = vsel %vm343, %v279, %v407
    %v472 = vsel %vm344, %v280, %v408
    %v473 = vsel %vm345, %v281, %v409
    %v474 = vsel %vm346, %v282, %v410
    %v475 = vsel %vm347, %v283, %v411
    %v476 = vsel %vm348, %v284, %v412
    %v477 = vsel %vm349, %v285, %v413
    %v478 = vsel %vm350, %v286, %v414
    %v479 = vsel %vm351, %v287, %v415
    %v480 = vsel %vm352, %v288, %v416
    %v481 = vsel %vm353, %v289, %v417
    %v482 = vsel %vm354, %v290, %v418
    %v483 = vsel %vm355, %v291, %v419
    %v484 = vsel %vm356, %v292, %v420
    %v485 = vsel %vm357, %v293, %v421
    %v486 = vsel %vm358, %v294, %v422
    %v487 = vsel %vm359, %v295, %v423
    %v488 = vsel %vm360, %v296, %v424
    %v489 = vsel %vm361, %v297, %v425
    %v490 = vsel %vm362, %v298, %v426
    %v491 = vsel %vm363, %v299, %v427
    %v492 = vsel %vm364, %v300, %v428
    %v493 = vsel %vm365, %v301, %v429
    %v494 = vsel %vm366, %v302, %v430
    %v495 = vsel %vm367, %v303, %v431
    %496 = vst [vmem:[#allocation7] sm:$0xff] %v432
    %497 = vst [vmem:[#allocation7 + $0x8] sm:$0xff] %v433
    %498 = vst [vmem:[#allocation7 + $0x10] sm:$0xff] %v434
    %499 = vst [vmem:[#allocation7 + $0x18] sm:$0xff] %v435
    %500 = vst [vmem:[#allocation7 + $0x20] sm:$0xff] %v436
    %501 = vst [vmem:[#allocation7 + $0x28] sm:$0xff] %v437
    %502 = vst [vmem:[#allocation7 + $0x30] sm:$0xff] %v438
    %503 = vst [vmem:[#allocation7 + $0x38] sm:$0xff] %v439
    %504 = vst [vmem:[#allocation7 + $0x40] sm:$0xff] %v440
    %505 = vst [vmem:[#allocation7 + $0x48] sm:$0xff] %v441
    %506 = vst [vmem:[#allocation7 + $0x50] sm:$0xff] %v442
    %507 = vst [vmem:[#allocation7 + $0x58] sm:$0xff] %v443
    %508 = vst [vmem:[#allocation7 + $0x60] sm:$0xff] %v444
    %509 = vst [vmem:[#allocation7 + $0x68] sm:$0xff] %v445
    %510 = vst [vmem:[#allocation7 + $0x70] sm:$0xff] %v446
    %511 = vst [vmem:[#allocation7 + $0x78] sm:$0xff] %v447
    %512 = vst [vmem:[#allocation7 + $0x80] sm:$0xff] %v448
    %513 = vst [vmem:[#allocation7 + $0x88] sm:$0xff] %v449
    %514 = vst [vmem:[#allocation7 + $0x90] sm:$0xff] %v450
    %515 = vst [vmem:[#allocation7 + $0x98] sm:$0xff] %v451
    %516 = vst [vmem:[#allocation7 + $0xa0] sm:$0xff] %v452
    %517 = vst [vmem:[#allocation7 + $0xa8] sm:$0xff] %v453
    %518 = vst [vmem:[#allocation7 + $0xb0] sm:$0xff] %v454
    %519 = vst [vmem:[#allocation7 + $0xb8] sm:$0xff] %v455
    %520 = vst [vmem:[#allocation7 + $0xc0] sm:$0xff] %v456
    %521 = vst [vmem:[#allocation7 + $0xc8] sm:$0xff] %v457
    %522 = vst [vmem:[#allocation7 + $0xd0] sm:$0xff] %v458
    %523 = vst [vmem:[#allocation7 + $0xd8] sm:$0xff] %v459
    %524 = vst [vmem:[#allocation7 + $0xe0] sm:$0xff] %v460
    %525 = vst [vmem:[#allocation7 + $0xe8] sm:$0xff] %v461
    %526 = vst [vmem:[#allocation7 + $0xf0] sm:$0xff] %v462
    %527 = vst [vmem:[#allocation7 + $0xf8] sm:$0xff] %v463
    %528 = vst [vmem:[#allocation7 + $0x100] sm:$0xff] %v464
    %529 = vst [vmem:[#allocation7 + $0x108] sm:$0xff] %v465
    %530 = vst [vmem:[#allocation7 + $0x110] sm:$0xff] %v466
    %531 = vst [vmem:[#allocation7 + $0x118] sm:$0xff] %v467
    %532 = vst [vmem:[#allocation7 + $0x120] sm:$0xff] %v468
    %533 = vst [vmem:[#allocation7 + $0x128] sm:$0xff] %v469
    %534 = vst [vmem:[#allocation7 + $0x130] sm:$0xff] %v470
    %535 = vst [vmem:[#allocation7 + $0x138] sm:$0xff] %v471
    %536 = vst [vmem:[#allocation7 + $0x140] sm:$0xff] %v472
    %537 = vst [vmem:[#allocation7 + $0x148] sm:$0xff] %v473
    %538 = vst [vmem:[#allocation7 + $0x150] sm:$0xff] %v474
    %539 = vst [vmem:[#allocation7 + $0x158] sm:$0xff] %v475
    %540 = vst [vmem:[#allocation7 + $0x160] sm:$0xff] %v476
    %541 = vst [vmem:[#allocation7 + $0x168] sm:$0xff] %v477
    %542 = vst [vmem:[#allocation7 + $0x170] sm:$0xff] %v478
    %543 = vst [vmem:[#allocation7 + $0x178] sm:$0xff] %v479
    %544 = vst [vmem:[#allocation7 + $0x180] sm:$0xff] %v480
    %545 = vst [vmem:[#allocation7 + $0x188] sm:$0xff] %v481
    %546 = vst [vmem:[#allocation7 + $0x190] sm:$0xff] %v482
    %547 = vst [vmem:[#allocation7 + $0x198] sm:$0xff] %v483
    %548 = vst [vmem:[#allocation7 + $0x1a0] sm:$0xff] %v484
    %549 = vst [vmem:[#allocation7 + $0x1a8] sm:$0xff] %v485
    %550 = vst [vmem:[#allocation7 + $0x1b0] sm:$0xff] %v486
    %551 = vst [vmem:[#allocation7 + $0x1b8] sm:$0xff] %v487
    %552 = vst [vmem:[#allocation7 + $0x1c0] sm:$0xff] %v488
    %553 = vst [vmem:[#allocation7 + $0x1c8] sm:$0xff] %v489
    %554 = vst [vmem:[#allocation7 + $0x1d0] sm:$0xff] %v490
    %555 = vst [vmem:[#allocation7 + $0x1d8] sm:$0xff] %v491
    %556 = vst [vmem:[#allocation7 + $0x1e0] sm:$0xff] %v492
    %557 = vst [vmem:[#allocation7 + $0x1e8] sm:$0xff] %v493
    %558 = vst [vmem:[#allocation7 + $0x1f0] sm:$0xff] %v494
    %559 = vst [vmem:[#allocation7 + $0x1f8] sm:$0xff] %v495
    // Predicated region
    $region18: #{conv_block.3} parent=1 // pred_check
      _
    $region19: #{conv_block.3} parent=1 // pred_check_branch
      %561 = sbr.rel (0) target = $region21
    $region20: #{conv_block.3} parent=1 // pred_region
      %s563 = ssub.s32 8192, 8192
      %564 = vsyncadd [#allocation4], %s563
      %s565 = sshll.u32 [#allocation7], 4
      %s566 = int_to_ptr.vmem [resolvable:$true] %s565
      %571 = dma.vmem_to_hbm [thread:$0]  %s566, 8192, %s2, [#allocation4], 128, 128, 8
    $region21: #{conv_block.3} parent=1 // pred_fallthru
      _
    // Predicated region
    $region22: #{conv_block.3} parent=1 // pred_check
      _
    $region23: #{conv_block.3} parent=1 // pred_check_branch
      %573 = sbr.rel (0) target = $region25
    $region24: #{conv_block.3} parent=1 // pred_region
      %574 = dma.done [#allocation4], 8192
    $region25: #{conv_block.3} parent=1 // pred_fallthru
      _
    %575 = vsyncpa [#allocation3], 1
    %576 = vsyncpa [#allocation6], 1
    %577 = vsyncpa [#allocation4], 1

// kernel: conv_block.2
$region0: #{conv_block.2}
  #allocation0 [shape = 'u32[]', space=smem, size = 0x4, offset = 0x4, fixed_abs, tag = 'smem constant byte address 0x4 - core index']
  #allocation1 [shape = 'u32[144,128]{1,0:T(1,128)}', space=vmem, size = 0x12000, scoped, tag = 'internal scratch']
  %s0 = inlined_call_operand.hbm [shape: bf16[2,32,18,4], index: 0, kind: input, shape index: {}]
  %s1 = inlined_call_operand.hbm [shape: bf16[2,2,18,4], index: 1, kind: input, shape index: {}]
  %s2 = inlined_call_operand.hbm [shape: bf16[3,3,4,128], index: 2, kind: input, shape index: {}]
  %s3 = inlined_call_operand.hbm [shape: bf16[2,16,16,128], index: 3, kind: output, shape index: {0}]
  %s4 = inlined_call_operand.hbm [shape: f32[2,1,2,128], index: 4, kind: output, shape index: {1}]
  %5 = xla_tuple %s3, %s4
  %s6 = sld [smem:[#allocation0]]
  $region65: #{conv_block.2} parent=0
    _
  %s8 = ssub.s32 1, %s6
  %s9 = scalar_select 0, %s8, %s6
  $region1: #{conv_block.2} parent=0
    #allocation2 [shape = 'u8[196608]{0}', space=vmem, size = 0x30000, scoped, tag = 'input window, operand 0']
    #allocation3 [shape = 's32[2]{0}', space=sflag, size = 0x8, scoped, tag = 'scoped memory for conv_block.2']
    #allocation4 [shape = 's32[2]{0}', space=sflag, size = 0x8, scoped, tag = 'scoped memory for conv_block.2']
    #allocation5 [shape = 'u8[24576]{0}', space=vmem, size = 0x6000, scoped, tag = 'input window, operand 1']
    #allocation6 [shape = 's32[2]{0}', space=sflag, size = 0x8, scoped, tag = 'scoped memory for conv_block.2']
    #allocation7 [shape = 'u8[9216]{0}', space=vmem, size = 0x2400, scoped, tag = 'input window, operand 2, single buffered']
    #allocation8 [shape = 'u8[131072]{0}', space=vmem, size = 0x20000, scoped, tag = 'output window, operand 0']
    #allocation9 [shape = 'u8[2048]{0}', space=vmem, size = 0x800, scoped, tag = 'output window, operand 1']
    #allocation10 [shape = 's32[2]{0}', space=sflag, size = 0x8, scoped, tag = 'scoped memory for conv_block.2']
    %10 = vsyncpa [#allocation3], 0
    %s11 = scalar_lea.sflag [#allocation3], 1
    %12 = vsyncpa %s11, 0
    %13 = vsyncpa [#allocation6], 0
    %s14 = scalar_lea.sflag [#allocation6], 1
    %15 = vsyncpa %s14, 0
    %16 = vsyncpa [#allocation4], 0
    %s17 = scalar_lea.sflag [#allocation4], 1
    %18 = vsyncpa %s17, 0
    %19 = vsyncpa [#allocation10], 0
    %s20 = scalar_lea.sflag [#allocation10], 1
    %21 = vsyncpa %s20, 0
    loop: start=0, step=1, limit=4
    $region2: #{conv_block.2} parent=1 // loop_pre_header
      _
    $region3: #{conv_block.2} parent=1 // loop_header
      %s23 = sphi 0, %s27
      %p24 = scmp.ge.s32.totalorder %s23, 4
      %s30 = sphi 0, %s42
      %s31 = sphi 0, %s38
      %s32 = sphi 0, %s30
      %s33 = sphi 0, %s31
      %s34 = sphi 0, %s32
      %s35 = sphi 0, %s33
      %s47 = sphi 0, %s49
      %s50 = sphi 0, %s47
      %s51 = sphi 0, %s50
      %s67 = sphi 0, %s51
      %s75 = sphi 0, %s77
      %s78 = sphi 0, %s75
      %s79 = sphi 0, %s78
      %s95 = sphi 0, %s79
      %s99 = sphi 0, %s99
      %s101 = sphi 0, %s99
      %s102 = sphi 0, %s101
      %s116 = sphi 0, %s102
      %s124 = sphi 0, %s126
      %s127 = sphi 0, %s124
      %s128 = sphi 0, %s127
      %s144 = sphi 0, %s128
      %s152 = sphi 0, %s154
      %s155 = sphi 0, %s152
      %s156 = sphi 0, %s155
      %s172 = sphi 0, %s156
    $region4: #{conv_block.2} parent=1 // loop_header_branch
      %26 = sbr.rel (%p24) target = $region8
    $region5: #{conv_block.2} parent=1 // loop_body
      %s28 = ssub.s32 %s23, 1
      %s29 = ssub.s32 %s23, 2
      %s36 = sadd.s32 1, %s31
      %p37 = scmp.ge.s32.totalorder %s36, 1
      %s38 = scalar_select %p37, 0, %s36
      %s39 = sadd.s32 1, %s30
      %s40 = scalar_select %p37, %s39, %s30
      %p41 = scmp.ge.s32.totalorder %s40, 2
      %s42 = scalar_select %p41, 0, %s40
      %s43 = ssub.s32 %s30, %s42
      %s44 = ssub.s32 %s31, %s38
      %s45 = sor.u32 %s43, %s44
      %p46 = scmp.eq.s32.totalorder %s45, 0
      %s48 = sadd.s32 %s47, 1
      %s49 = scalar_select %p46, %s47, %s48
      %p52 = pneg %p46
      %p53 = scmp.eq.s32.totalorder %s23, 1
      %p54 = por %p52, %p53
      %p55 = scmp.ne.s32.totalorder %s47, %s50
      %p56 = scmp.eq.s32.totalorder %s23, 0
      %p57 = por %p55, %p56
      %p58 = scmp.ne.s32.totalorder %s47, %s50
      %p59 = scmp.eq.s32.totalorder %s28, 1
      %p60 = por %p58, %p59
      %p61 = scmp.ne.s32.totalorder %s50, %s51
      %p62 = scmp.eq.s32.totalorder %s28, 0
      %p63 = por %p61, %p62
      %p64 = scmp.ne.s32.totalorder %s50, %s51
      %p65 = scmp.eq.s32.totalorder %s29, 1
      %p66 = por %p64, %p65
      %p68 = scmp.ne.s32.totalorder %s51, %s67
      %p69 = scmp.eq.s32.totalorder %s29, 0
      %p70 = por %p68, %p69
      %s71 = ssub.s32 %s30, %s42
      %s72 = ssub.s32 %s31, %s38
      %s73 = sor.u32 %s71, %s72
      %p74 = scmp.eq.s32.totalorder %s73, 0
      %s76 = sadd.s32 %s75, 1
      %s77 = scalar_select %p74, %s75, %s76
      %p80 = pneg %p74
      %p81 = scmp.eq.s32.totalorder %s23, 1
      %p82 = por %p80, %p81
      %p83 = scmp.ne.s32.totalorder %s75, %s78
      %p84 = scmp.eq.s32.totalorder %s23, 0
      %p85 = por %p83, %p84
      %p86 = scmp.ne.s32.totalorder %s75, %s78
      %p87 = scmp.eq.s32.totalorder %s28, 1
      %p88 = por %p86, %p87
      %p89 = scmp.ne.s32.totalorder %s78, %s79
      %p90 = scmp.eq.s32.totalorder %s28, 0
      %p91 = por %p89, %p90
      %p92 = scmp.ne.s32.totalorder %s78, %s79
      %p93 = scmp.eq.s32.totalorder %s29, 1
      %p94 = por %p92, %p93
      %p96 = scmp.ne.s32.totalorder %s79, %s95
      %p97 = scmp.eq.s32.totalorder %s29, 0
      %p98 = por %p96, %p97
      %s100 = sadd.s32 %s99, 1
      %p103 = scmp.eq.s32.totalorder %s23, 1
      %p104 = scmp.ne.s32.totalorder %s99, %s101
      %p105 = scmp.eq.s32.totalorder %s23, 0
      %p106 = por %p104, %p105
      %p107 = scmp.ne.s32.totalorder %s99, %s101
      %p108 = scmp.eq.s32.totalorder %s28, 1
      %p109 = por %p107, %p108
      %p110 = scmp.ne.s32.totalorder %s101, %s102
      %p111 = scmp.eq.s32.totalorder %s28, 0
      %p112 = por %p110, %p111
      %p113 = scmp.ne.s32.totalorder %s101, %s102
      %p114 = scmp.eq.s32.totalorder %s29, 1
      %p115 = por %p113, %p114
      %p117 = scmp.ne.s32.totalorder %s102, %s116
      %p118 = scmp.eq.s32.totalorder %s29, 0
      %p119 = por %p117, %p118
      %s120 = ssub.s32 %s30, %s42
      %s121 = ssub.s32 %s31, %s38
      %s122 = sor.u32 %s120, %s121
      %p123 = scmp.eq.s32.totalorder %s122, 0
      %s125 = sadd.s32 %s124, 1
      %s126 = scalar_select %p123, %s124, %s125
      %p129 = pneg %p123
      %p130 = scmp.eq.s32.totalorder %s23, 1
      %p131 = por %p129, %p130
      %p132 = scmp.ne.s32.totalorder %s124, %s127
      %p133 = scmp.eq.s32.totalorder %s23, 0
      %p134 = por %p132, %p133
      %p135 = scmp.ne.s32.totalorder %s124, %s127
      %p136 = scmp.eq.s32.totalorder %s28, 1
      %p137 = por %p135, %p136
      %p138 = scmp.ne.s32.totalorder %s127, %s128
      %p139 = scmp.eq.s32.totalorder %s28, 0
      %p140 = por %p138, %p139
      %p141 = scmp.ne.s32.totalorder %s127, %s128
      %p142 = scmp.eq.s32.totalorder %s29, 1
      %p143 = por %p141, %p142
      %p145 = scmp.ne.s32.totalorder %s128, %s144
      %p146 = scmp.eq.s32.totalorder %s29, 0
      %p147 = por %p145, %p146
      %s148 = ssub.s32 %s30, %s42
      %s149 = ssub.s32 %s31, %s38
      %s150 = sor.u32 %s148, %s149
      %p151 = scmp.eq.s32.totalorder %s150, 0
      %s153 = sadd.s32 %s152, 1
      %s154 = scalar_select %p151, %s152, %s153
      %p157 = pneg %p151
      %p158 = scmp.eq.s32.totalorder %s23, 1
      %p159 = por %p157, %p158
      %p160 = scmp.ne.s32.totalorder %s152, %s155
      %p161 = scmp.eq.s32.totalorder %s23, 0
      %p162 = por %p160, %p161
      %p163 = scmp.ne.s32.totalorder %s152, %s155
      %p164 = scmp.eq.s32.totalorder %s28, 1
      %p165 = por %p163, %p164
      %p166 = scmp.ne.s32.totalorder %s155, %s156
      %p167 = scmp.eq.s32.totalorder %s28, 0
      %p168 = por %p166, %p167
      %p169 = scmp.ne.s32.totalorder %s155, %s156
      %p170 = scmp.eq.s32.totalorder %s29, 1
      %p171 = por %p169, %p170
      %p173 = scmp.ne.s32.totalorder %s156, %s172
      %p174 = scmp.eq.s32.totalorder %s29, 0
      %p175 = por %p173, %p174
      %p176 = scmp.le.s32.totalorder 1, %s23
      %p177 = scmp.lt.s32.totalorder %s23, 3
      %p178 = pnand %p176, %p177
      %p179 = pneg %p178
      // Predicated region
      $region9: #{conv_block.2} parent=5 // pred_check
        _
      $region10: #{conv_block.2} parent=5 // pred_check_branch
        %181 = sbr.rel (%p178) target = $region12
      $region11: #{conv_block.2} parent=5 // pred_region
        %s182 = ssub.s32 %s23, 1
        // Predicated region
        $region13: #{conv_block.2} parent=11 // pred_check
          %p183 = pneg %p112
        $region14: #{conv_block.2} parent=11 // pred_check_branch
          %185 = sbr.rel (%p183) target = $region16
        $region15: #{conv_block.2} parent=11 // pred_region
          %s187 = ssub.s32 288, 288
          %188 = vsyncadd [#allocation6], %s187
          %s189 = sshll.u32 [#allocation7], 4
          %s190 = int_to_ptr.vmem [resolvable:$true] %s189
          %195 = dma.hbm_to_vmem [thread:$0]  %s2, 288, %s190, [#allocation6], 32, 32, 2
        $region16: #{conv_block.2} parent=11 // pred_fallthru
          _
      $region12: #{conv_block.2} parent=5 // pred_fallthru
        _
      %p196 = scmp.lt.s32.totalorder %s23, 2
      // Predicated region
      $region17: #{conv_block.2} parent=5 // pred_check
        %p197 = pneg %p196
      $region18: #{conv_block.2} parent=5 // pred_check_branch
        %199 = sbr.rel (%p197) target = $region20
      $region19: #{conv_block.2} parent=5 // pred_region
        // Predicated region
        $region21: #{conv_block.2} parent=19 // pred_check
          %p200 = pneg %p57
        $region22: #{conv_block.2} parent=19 // pred_check_branch
          %202 = sbr.rel (%p200) target = $region24
        $region23: #{conv_block.2} parent=19 // pred_region
          %s203 = sand.u32 %s47, 1
          %s204 = scalar_lea.sflag [#allocation3], %s203
          %s205 = sand.u32 %s47, 1
          %s206 = smul.addr %s205, 192
          %s207 = scalar_lea.vmem [#allocation2], %s206
          %s208 = smul.u32 16, %s31
          %s210 = ssub.s32 3072, 3072
          %211 = vsyncadd %s204, %s210
          %s212 = smul.addr %s208, 3
          %s213 = smul.addr %s30, 96
          %s214 = sadd.s32 %s212, %s213
          %s215 = smul.addr %s214, 64
          %s216 = scalar_lea.hbm %s0, %s215
          %s217 = sshll.u32 %s207, 4
          %s218 = int_to_ptr.vmem [resolvable:$true] %s217
          %223 = dma.hbm_to_vmem [thread:$0]  %s216, 3072, %s218, %s204, 64, 64, 4
        $region24: #{conv_block.2} parent=19 // pred_fallthru
          _
        // Predicated region
        $region25: #{conv_block.2} parent=19 // pred_check
          %p224 = pneg %p85
        $region26: #{conv_block.2} parent=19 // pred_check_branch
          %226 = sbr.rel (%p224) target = $region28
        $region27: #{conv_block.2} parent=19 // pred_region
          %s227 = sand.u32 %s23, 1
          %s228 = scalar_lea.sflag [#allocation6], %s227
          %s229 = sand.u32 %s75, 1
          %s230 = smul.addr %s229, 24
          %s231 = scalar_lea.vmem [#allocation5], %s230
          %s232 = smul.u32 2, %s31
          %s234 = ssub.s32 384, 384
          %235 = vsyncadd %s228, %s234
          %s236 = smul.addr %s232, 3
          %s237 = smul.addr %s30, 6
          %s238 = sadd.s32 %s236, %s237
          %s239 = smul.addr %s238, 64
          %s240 = scalar_lea.hbm %s1, %s239
          %s241 = sshll.u32 %s231, 4
          %s242 = int_to_ptr.vmem [resolvable:$true] %s241
          %247 = dma.hbm_to_vmem [thread:$0]  %s240, 384, %s242, %s228, 64, 64, 4
        $region28: #{conv_block.2} parent=19 // pred_fallthru
          _
      $region20: #{conv_block.2} parent=5 // pred_fallthru
        _
      %p248 = scmp.le.s32.totalorder 1, %s23
      %p249 = scmp.lt.s32.totalorder %s23, 3
      %p250 = pnand %p248, %p249
      %p251 = pneg %p250
      // Predicated region
      $region29: #{conv_block.2} parent=5 // pred_check
        _
      $region30: #{conv_block.2} parent=5 // pred_check_branch
        %253 = sbr.rel (%p250) target = $region32
      $region31: #{conv_block.2} parent=5 // pred_region
        %s254 = ssub.s32 %s23, 1
        %s255 = sand.u32 %s50, 1
        %s256 = scalar_lea.sflag [#allocation3], %s255
        %s257 = sand.u32 %s50, 1
        %s258 = smul.addr %s257, 192
        %s259 = scalar_lea.vmem [#allocation2], %s258
        // Predicated region
        $region33: #{conv_block.2} parent=31 // pred_check
          %p260 = pneg %p63
        $region34: #{conv_block.2} parent=31 // pred_check_branch
          %262 = sbr.rel (%p260) target = $region36
        $region35: #{conv_block.2} parent=31 // pred_region
          %263 = dma.done %s256, 3072
        $region36: #{conv_block.2} parent=31 // pred_fallthru
          _
        %s264 = sand.u32 %s28, 1
        %s265 = scalar_lea.sflag [#allocation6], %s264
        %s266 = sand.u32 %s78, 1
        %s267 = smul.addr %s266, 24
        %s268 = scalar_lea.vmem [#allocation5], %s267
        // Predicated region
        $region37: #{conv_block.2} parent=31 // pred_check
          %p269 = pneg %p91
        $region38: #{conv_block.2} parent=31 // pred_check_branch
          %271 = sbr.rel (%p269) target = $region40
        $region39: #{conv_block.2} parent=31 // pred_region
          %272 = dma.done %s265, 384
        $region40: #{conv_block.2} parent=31 // pred_fallthru
          _
        // Predicated region
        $region41: #{conv_block.2} parent=31 // pred_check
          %p273 = pneg %p112
        $region42: #{conv_block.2} parent=31 // pred_check_branch
          %275 = sbr.rel (%p273) target = $region44
        $region43: #{conv_block.2} parent=31 // pred_region
          %276 = dma.done [#allocation6], 288
        $region44: #{conv_block.2} parent=31 // pred_fallthru
          _
        %s277 = sand.u32 %s50, 1
        %s278 = scalar_lea.sflag [#allocation3], %s277
        %s279 = sand.u32 %s50, 1
        %s280 = smul.addr %s279, 192
        %s281 = scalar_lea.vmem [#allocation2], %s280
        %p282 = pneg %p63
        %p283 = pneg %p60
        %s284 = sand.u32 %s28, 1
        %s285 = scalar_lea.sflag [#allocation6], %s284
        %s286 = sand.u32 %s78, 1
        %s287 = smul.addr %s286, 24
        %s288 = scalar_lea.vmem [#allocation5], %s287
        %p289 = pneg %p91
        %p290 = pneg %p88
        %p291 = pneg %p112
        %p292 = pneg %p109
        %p293 = pneg %p140
        %p294 = pneg %p137
        %s295 = sand.u32 %s127, 1
        %s296 = scalar_lea.sflag [#allocation4], %s295
        %s297 = sand.u32 %s127, 1
        %s298 = smul.addr %s297, 128
        %s299 = scalar_lea.vmem [#allocation8], %s298
        %p300 = pneg %p168
        %p301 = pneg %p165
        %s302 = sand.u32 %s155, 1
        %s303 = scalar_lea.sflag [#allocation10], %s302
        %s304 = sand.u32 %s155, 1
        %s305 = smul.addr %s304, 2
        %s306 = scalar_lea.vmem [#allocation9], %s305
        %s307 = smul.u32 16, %s33
        %s308 = smul.u32 2, %s33
        %s309 = smul.u32 16, %s33
        %v311 = vld [vmem:[%s259] sm:$0xf]
        %v312 = vld [vmem:[%s259 + $0x4] sm:$0xf]
        %v313 = vld [vmem:[%s259 + $0x8] sm:$0x1]
        %v314 = vld [vmem:[%s259 + $0xc] sm:$0xf]
        %v315 = vld [vmem:[%s259 + $0x10] sm:$0xf]
        %v316 = vld [vmem:[%s259 + $0x14] sm:$0x1]
        %v317 = vld [vmem:[%s259 + $0x18] sm:$0xf]
        %v318 = vld [vmem:[%s259 + $0x1c] sm:$0xf]
        %v319 = vld [vmem:[%s259 + $0x20] sm:$0x1]
        %v320 = vld [vmem:[%s259 + $0x24] sm:$0xf]
        %v321 = vld [vmem:[%s259 + $0x28] sm:$0xf]
        %v322 = vld [vmem:[%s259 + $0x2c] sm:$0x1]
        %v323 = vld [vmem:[%s259 + $0x30] sm:$0xf]
        %v324 = vld [vmem:[%s259 + $0x34] sm:$0xf]
        %v325 = vld [vmem:[%s259 + $0x38] sm:$0x1]
        %v326 = vld [vmem:[%s259 + $0x3c] sm:$0xf]
        %v327 = vld [vmem:[%s259 + $0x40] sm:$0xf]
        %v328 = vld [vmem:[%s259 + $0x44] sm:$0x1]
        %v329 = vld [vmem:[%s259 + $0x48] sm:$0xf]
        %v330 = vld [vmem:[%s259 + $0x4c] sm:$0xf]
        %v331 = vld [vmem:[%s259 + $0x50] sm:$0x1]
        %v332 = vld [vmem:[%s259 + $0x54] sm:$0xf]
        %v333 = vld [vmem:[%s259 + $0x58] sm:$0xf]
        %v334 = vld [vmem:[%s259 + $0x5c] sm:$0x1]
        %v335 = vld [vmem:[%s259 + $0x60] sm:$0xf]
        %v336 = vld [vmem:[%s259 + $0x64] sm:$0xf]
        %v337 = vld [vmem:[%s259 + $0x68] sm:$0x1]
        %v338 = vld [vmem:[%s259 + $0x6c] sm:$0xf]
        %v339 = vld [vmem:[%s259 + $0x70] sm:$0xf]
        %v340 = vld [vmem:[%s259 + $0x74] sm:$0x1]
        %v341 = vld [vmem:[%s259 + $0x78] sm:$0xf]
        %v342 = vld [vmem:[%s259 + $0x7c] sm:$0xf]
        %v343 = vld [vmem:[%s259 + $0x80] sm:$0x1]
        %v344 = vld [vmem:[%s259 + $0x84] sm:$0xf]
        %v345 = vld [vmem:[%s259 + $0x88] sm:$0xf]
        %v346 = vld [vmem:[%s259 + $0x8c] sm:$0x1]
        %v347 = vld [vmem:[%s259 + $0x90] sm:$0xf]
        %v348 = vld [vmem:[%s259 + $0x94] sm:$0xf]
        %v349 = vld [vmem:[%s259 + $0x98] sm:$0x1]
        %v350 = vld [vmem:[%s259 + $0x9c] sm:$0xf]
        %v351 = vld [vmem:[%s259 + $0xa0] sm:$0xf]
        %v352 = vld [vmem:[%s259 + $0xa4] sm:$0x1]
        %v353 = vld [vmem:[%s259 + $0xa8] sm:$0xf]
        %v354 = vld [vmem:[%s259 + $0xac] sm:$0xf]
        %v355 = vld [vmem:[%s259 + $0xb0] sm:$0x1]
        %v356 = vld [vmem:[%s259 + $0xb4] sm:$0xf]
        %v357 = vld [vmem:[%s259 + $0xb8] sm:$0xf]
        %v358 = vld [vmem:[%s259 + $0xbc] sm:$0x1]
        %v359 = vld [vmem:[%s268] sm:$0xf]
        %v360 = vld [vmem:[%s268 + $0x4] sm:$0xf]
        %v361 = vld [vmem:[%s268 + $0x8] sm:$0x1]
        %v362 = vld [vmem:[%s268 + $0xc] sm:$0xf]
        %v363 = vld [vmem:[%s268 + $0x10] sm:$0xf]
        %v364 = vld [vmem:[%s268 + $0x14] sm:$0x1]
        %v365 = vld [vmem:[#allocation7] sm:$0x3]
        %s366 = scalar_lea.vmem [#allocation7], 6
        %v367 = vld [vmem:[%s366] sm:$0x3]
        %v400 = vunpack.c.l.b16 %v314
        %v401 = vunpack.c.l.b16 %v315
        %v402 = vunpack.c.l.b16 %v317
        %v403 = vunpack.c.l.b16 %v318
        %v404 = vunpack.c.l.b16 %v320
        %v405 = vunpack.c.l.b16 %v321
        %v406 = vunpack.c.l.b16 %v323
        %v407 = vunpack.c.l.b16 %v324
        %v408 = vunpack.c.l.b16 %v326
        %v409 = vunpack.c.l.b16 %v327
        %v410 = vunpack.c.l.b16 %v329
        %v411 = vunpack.c.l.b16 %v330
        %v412 = vunpack.c.l.b16 %v332
        %v413 = vunpack.c.l.b16 %v333
        %v414 = vunpack.c.l.b16 %v335
        %v415 = vunpack.c.l.b16 %v336
        %v416 = vunpack.c.l.b16 %v338
        %v417 = vunpack.c.l.b16 %v339
        %v418 = vunpack.c.l.b16 %v341
        %v419 = vunpack.c.l.b16 %v342
        %v420 = vunpack.c.l.b16 %v344
        %v421 = vunpack.c.l.b16 %v345
        %v422 = vunpack.c.l.b16 %v347
        %v423 = vunpack.c.l.b16 %v348
        %v424 = vunpack.c.l.b16 %v350
        %v425 = vunpack.c.l.b16 %v351
        %v426 = vunpack.c.l.b16 %v353
        %v427 = vunpack.c.l.b16 %v354
        %v428 = vunpack.c.l.b16 %v356
        %v429 = vunpack.c.l.b16 %v357
        %v430 = vunpack.c.l.b16 %v359
        %v431 = vunpack.c.l.b16 %v360
        %v432 = vpack.c.b16 %v401, %v400
        %v433 = vpack.c.b16 %v403, %v402
        %v434 = vpack.c.b16 %v405, %v404
        %v435 = vpack.c.b16 %v407, %v406
        %v436 = vpack.c.b16 %v409, %v408
        %v437 = vpack.c.b16 %v411, %v410
        %v438 = vpack.c.b16 %v413, %v412
        %v439 = vpack.c.b16 %v415, %v414
        %v440 = vpack.c.b16 %v417, %v416
        %v441 = vpack.c.b16 %v419, %v418
        %v442 = vpack.c.b16 %v421, %v420
        %v443 = vpack.c.b16 %v423, %v422
        %v444 = vpack.c.b16 %v425, %v424
        %v445 = vpack.c.b16 %v427, %v426
        %v446 = vpack.c.b16 %v429, %v428
        %v447 = vpack.c.b16 %v431, %v430
        %vm448 = vcmask 31744
        %v450 = vsel %vm448, %v432, 0
        %v453 = vsel %vm448, %v433, 0
        %v456 = vsel %vm448, %v434, 0
        %v459 = vsel %vm448, %v435, 0
        %v462 = vsel %vm448, %v436, 0
        %v465 = vsel %vm448, %v437, 0
        %v468 = vsel %vm448, %v438, 0
        %v471 = vsel %vm448, %v439, 0
        %v474 = vsel %vm448, %v440, 0
        %v477 = vsel %vm448, %v441, 0
        %v480 = vsel %vm448, %v442, 0
        %v483 = vsel %vm448, %v443, 0
        %v486 = vsel %vm448, %v444, 0
        %v489 = vsel %vm448, %v445, 0
        %v492 = vsel %vm448, %v446, 0
        %v495 = vsel %vm448, %v447, 0
        %vm497 = vcmask 1041408
        %v499 = vsel %vm497, %v367, 0
        %501 = vmatprep.subr.bf16.mxu0 0
        %502 = vmatpush1.bf16.msra.mxu0 %v499
        %503 = vmatprep.subr.bf16.mxu0 0
        %504 = vmatpush1.bf16.msra.mxu0 0
        %505 = vmatprep.subr.bf16.mxu0 0
        %506 = vmatpush1.bf16.msra.mxu0 0
        %507 = vmatprep.subr.bf16.mxu0 0
        %508 = vmatpush1.bf16.msra.mxu0 0
        %509 = vmatprep.subr.bf16.mxu0 0
        %510 = vmatpush1.bf16.msra.mxu0 0
        %511 = vmatprep.subr.bf16.mxu0 0
        %512 = vmatpush1.bf16.msra.mxu0 0
        %513 = vmatprep.subr.bf16.mxu0 0
        %514 = vmatpush1.bf16.msra.mxu0 0
        %515 = vmatprep.subr.bf16.mxu0 0
        %516 = vmatpush1.bf16.msra.mxu0 0
        %517 = vmatprep.subr.bf16.mxu0 0
        %518 = vmatpush1.bf16.msra.mxu0 0
        %519 = vmatprep.subr.bf16.mxu0 0
        %520 = vmatpush1.bf16.msra.mxu0 0
        %521 = vmatprep.subr.bf16.mxu0 0
        %522 = vmatpush1.bf16.msra.mxu0 0
        %523 = vmatprep.subr.bf16.mxu0 0
        %524 = vmatpush1.bf16.msra.mxu0 0
        %525 = vmatprep.subr.bf16.mxu0 0
        %526 = vmatpush1.bf16.msra.mxu0 0
        %527 = vmatprep.subr.bf16.mxu0 0
        %528 = vmatpush1.bf16.msra.mxu0 0
        %529 = vmatprep.subr.bf16.mxu0 0
        %530 = vmatpush1.bf16.msra.mxu0 0
        %531 = vmatprep.subr.bf16.mxu0 0
        %532 = vmatpush1.bf16.msra.mxu0 0
        %533 = vmatprep.mubr.bf16.mxu0 0
        %534 = vmatmul.mubr.bf16.gmra.mrb[0].mxu0 %v450
        %v535 = vpop.f32.mrb[0].mxu0
        %v536 = vadd.f32 0.0, %v535
        %v537 = vpop.f32.mrb[0].mxu0
        %v538 = vpop.f32.mrb[0].mxu0
        %v539 = vadd.f32 0.0, %v538
        %v540 = vpop.f32.mrb[0].mxu0
        %541 = vmatprep.mubr.bf16.mxu0 0
        %542 = vmatmul.mubr.bf16.gmra.mrb[0].mxu0 %v453
        %v543 = vpop.f32.mrb[0].mxu0
        %v544 = vadd.f32 0.0, %v543
        %v545 = vpop.f32.mrb[0].mxu0
        %v546 = vpop.f32.mrb[0].mxu0
        %v547 = vadd.f32 0.0, %v546
        %v548 = vpop.f32.mrb[0].mxu0
        %549 = vmatprep.mubr.bf16.mxu0 0
        %550 = vmatmul.mubr.bf16.gmra.mrb[0].mxu0 %v456
        %v551 = vpop.f32.mrb[0].mxu0
        %v552 = vadd.f32 0.0, %v551
        %v553 = vpop.f32.mrb[0].mxu0
        %v554 = vpop.f32.mrb[0].mxu0
        %v555 = vadd.f32 0.0, %v554
        %v556 = vpop.f32.mrb[0].mxu0
        %557 = vmatprep.mubr.bf16.mxu0 0
        %558 = vmatmul.mubr.bf16.gmra.mrb[0].mxu0 %v459
        %v559 = vpop.f32.mrb[0].mxu0
        %v560 = vadd.f32 0.0, %v559
        %v561 = vpop.f32.mrb[0].mxu0
        %v562 = vpop.f32.mrb[0].mxu0
        %v563 = vadd.f32 0.0, %v562
        %v564 = vpop.f32.mrb[0].mxu0
        %565 = vmatprep.mubr.bf16.mxu0 0
        %566 = vmatmul.mubr.bf16.gmra.mrb[0].mxu0 %v462
        %v567 = vpop.f32.mrb[0].mxu0
        %v568 = vadd.f32 0.0, %v567
        %v569 = vpop.f32.mrb[0].mxu0
        %v570 = vpop.f32.mrb[0].mxu0
        %v571 = vadd.f32 0.0, %v570
        %v572 = vpop.f32.mrb[0].mxu0
        %573 = vmatprep.mubr.bf16.mxu0 0
        %574 = vmatmul.mubr.bf16.gmra.mrb[0].mxu0 %v465
        %v575 = vpop.f32.mrb[0].mxu0
        %v576 = vadd.f32 0.0, %v575
        %v577 = vpop.f32.mrb[0].mxu0
        %v578 = vpop.f32.mrb[0].mxu0
        %v579 = vadd.f32 0.0, %v578
        %v580 = vpop.f32.mrb[0].mxu0
        %581 = vmatprep.mubr.bf16.mxu0 0
        %582 = vmatmul.mubr.bf16.gmra.mrb[0].mxu0 %v468
        %v583 = vpop.f32.mrb[0].mxu0
        %v584 = vadd.f32 0.0, %v583
        %v585 = vpop.f32.mrb[0].mxu0
        %v586 = vpop.f32.mrb[0].mxu0
        %v587 = vadd.f32 0.0, %v586
        %v588 = vpop.f32.mrb[0].mxu0
        %589 = vmatprep.mubr.bf16.mxu0 0
        %590 = vmatmul.mubr.bf16.gmra.mrb[0].mxu0 %v471
        %v591 = vpop.f32.mrb[0].mxu0
        %v592 = vadd.f32 0.0, %v591
        %v593 = vpop.f32.mrb[0].mxu0
        %v594 = vpop.f32.mrb[0].mxu0
        %v595 = vadd.f32 0.0, %v594
        %v596 = vpop.f32.mrb[0].mxu0
        %597 = vmatprep.mubr.bf16.mxu0 0
        %598 = vmatmul.mubr.bf16.gmra.mrb[0].mxu0 %v474
        %v599 = vpop.f32.mrb[0].mxu0
        %v600 = vadd.f32 0.0, %v599
        %v601 = vpop.f32.mrb[0].mxu0
        %v602 = vpop.f32.mrb[0].mxu0
        %v603 = vadd.f32 0.0, %v602
        %v604 = vpop.f32.mrb[0].mxu0
        %605 = vmatprep.mubr.bf16.mxu0 0
        %606 = vmatmul.mubr.bf16.gmra.mrb[0].mxu0 %v477
        %v607 = vpop.f32.mrb[0].mxu0
        %v608 = vadd.f32 0.0, %v607
        %v609 = vpop.f32.mrb[0].mxu0
        %v610 = vpop.f32.mrb[0].mxu0
        %v611 = vadd.f32 0.0, %v610
        %v612 = vpop.f32.mrb[0].mxu0
        %613 = vmatprep.mubr.bf16.mxu0 0
        %614 = vmatmul.mubr.bf16.gmra.mrb[0].mxu0 %v480
        %v615 = vpop.f32.mrb[0].mxu0
        %v616 = vadd.f32 0.0, %v615
        %v617 = vpop.f32.mrb[0].mxu0
        %v618 = vpop.f32.mrb[0].mxu0
        %v619 = vadd.f32 0.0, %v618
        %v620 = vpop.f32.mrb[0].mxu0
        %621 = vmatprep.mubr.bf16.mxu0 0
        %622 = vmatmul.mubr.bf16.gmra.mrb[0].mxu0 %v483
        %v623 = vpop.f32.mrb[0].mxu0
        %v624 = vadd.f32 0.0, %v623
        %v625 = vpop.f32.mrb[0].mxu0
        %v626 = vpop.f32.mrb[0].mxu0
        %v627 = vadd.f32 0.0, %v626
        %v628 = vpop.f32.mrb[0].mxu0
        %629 = vmatprep.mubr.bf16.mxu0 0
        %630 = vmatmul.mubr.bf16.gmra.mrb[0].mxu0 %v486
        %v631 = vpop.f32.mrb[0].mxu0
        %v632 = vadd.f32 0.0, %v631
        %v633 = vpop.f32.mrb[0].mxu0
        %v634 = vpop.f32.mrb[0].mxu0
        %v635 = vadd.f32 0.0, %v634
        %v636 = vpop.f32.mrb[0].mxu0
        %637 = vmatprep.mubr.bf16.mxu0 0
        %638 = vmatmul.mubr.bf16.gmra.mrb[0].mxu0 %v489
        %v639 = vpop.f32.mrb[0].mxu0
        %v640 = vadd.f32 0.0, %v639
        %v641 = vpop.f32.mrb[0].mxu0
        %v642 = vpop.f32.mrb[0].mxu0
        %v643 = vadd.f32 0.0, %v642
        %v644 = vpop.f32.mrb[0].mxu0
        %645 = vmatprep.mubr.bf16.mxu0 0
        %646 = vmatmul.mubr.bf16.gmra.mrb[0].mxu0 %v492
        %v647 = vpop.f32.mrb[0].mxu0
        %v648 = vadd.f32 0.0, %v647
        %v649 = vpop.f32.mrb[0].mxu0
        %v650 = vpop.f32.mrb[0].mxu0
        %v651 = vadd.f32 0.0, %v650
        %v652 = vpop.f32.mrb[0].mxu0
        %653 = vmatprep.mubr.bf16.mxu0 0
        %654 = vmatmul.mubr.bf16.gmra.mrb[0].mxu0 %v495
        %v655 = vpop.f32.mrb[0].mxu0
        %v656 = vadd.f32 0.0, %v655
        %v657 = vpop.f32.mrb[0].mxu0
        %v658 = vpop.f32.mrb[0].mxu0
        %v659 = vadd.f32 0.0, %v658
        %v660 = vpop.f32.mrb[0].mxu0
        %661 = vdwg.mxu0
        %v664 = vunpack.c.l.b16 %v311
        %v665 = vunpack.c.l.b16 %v312
        %v666 = vpack.c.b16 %v665, %v664
        %v668 = vsel %vm448, %v666, 0
        %v671 = vsel %vm497, %v365, 0
        %673 = vmatprep.subr.bf16.mxu0 0
        %674 = vmatpush1.bf16.msra.mxu0 %v671
        %675 = vmatprep.subr.bf16.mxu0 0
        %676 = vmatpush1.bf16.msra.mxu0 0
        %677 = vmatprep.subr.bf16.mxu0 0
        %678 = vmatpush1.bf16.msra.mxu0 0
        %679 = vmatprep.subr.bf16.mxu0 0
        %680 = vmatpush1.bf16.msra.mxu0 0
        %681 = vmatprep.subr.bf16.mxu0 0
        %682 = vmatpush1.bf16.msra.mxu0 0
        %683 = vmatprep.subr.bf16.mxu0 0
        %684 = vmatpush1.bf16.msra.mxu0 0
        %685 = vmatprep.subr.bf16.mxu0 0
        %686 = vmatpush1.bf16.msra.mxu0 0
        %687 = vmatprep.subr.bf16.mxu0 0
        %688 = vmatpush1.bf16.msra.mxu0 0
        %689 = vmatprep.subr.bf16.mxu0 0
        %690 = vmatpush1.bf16.msra.mxu0 0
        %691 = vmatprep.subr.bf16.mxu0 0
        %692 = vmatpush1.bf16.msra.mxu0 0
        %693 = vmatprep.subr.bf16.mxu0 0
        %694 = vmatpush1.bf16.msra.mxu0 0
        %695 = vmatprep.subr.bf16.mxu0 0
        %696 = vmatpush1.bf16.msra.mxu0 0
        %697 = vmatprep.subr.bf16.mxu0 0
        %698 = vmatpush1.bf16.msra.mxu0 0
        %699 = vmatprep.subr.bf16.mxu0 0
        %700 = vmatpush1.bf16.msra.mxu0 0
        %701 = vmatprep.subr.bf16.mxu0 0
        %702 = vmatpush1.bf16.msra.mxu0 0
        %703 = vmatprep.subr.bf16.mxu0 0
        %704 = vmatpush1.bf16.msra.mxu0 0
        %705 = vmatprep.mubr.bf16.mxu0 0
        %706 = vmatmul.mubr.bf16.gmra.mrb[0].mxu0 %v668
        %v707 = vpop.f32.mrb[0].mxu0
        %v708 = vadd.f32 %v536, %v707
        %v709 = vpop.f32.mrb[0].mxu0
        %v710 = vpop.f32.mrb[0].mxu0
        %v711 = vadd.f32 %v539, %v710
        %v712 = vpop.f32.mrb[0].mxu0
        %713 = vmatprep.mubr.bf16.mxu0 0
        %714 = vmatmul.mubr.bf16.gmra.mrb[0].mxu0 %v450
        %v715 = vpop.f32.mrb[0].mxu0
        %v716 = vadd.f32 %v544, %v715
        %v717 = vpop.f32.mrb[0].mxu0
        %v718 = vpop.f32.mrb[0].mxu0
        %v719 = vadd.f32 %v547, %v718
        %v720 = vpop.f32.mrb[0].mxu0
        %721 = vmatprep.mubr.bf16.mxu0 0
        %722 = vmatmul.mubr.bf16.gmra.mrb[0].mxu0 %v453
        %v723 = vpop.f32.mrb[0].mxu0
        %v724 = vadd.f32 %v552, %v723
        %v725 = vpop.f32.mrb[0].mxu0
        %v726 = vpop.f32.mrb[0].mxu0
        %v727 = vadd.f32 %v555, %v726
        %v728 = vpop.f32.mrb[0].mxu0
        %729 = vmatprep.mubr.bf16.mxu0 0
        %730 = vmatmul.mubr.bf16.gmra.mrb[0].mxu0 %v456
        %v731 = vpop.f32.mrb[0].mxu0
        %v732 = vadd.f32 %v560, %v731
        %v733 = vpop.f32.mrb[0].mxu0
        %v734 = vpop.f32.mrb[0].mxu0
        %v735 = vadd.f32 %v563, %v734
        %v736 = vpop.f32.mrb[0].mxu0
        %737 = vmatprep.mubr.bf16.mxu0 0
        %738 = vmatmul.mubr.bf16.gmra.mrb[0].mxu0 %v459
        %v739 = vpop.f32.mrb[0].mxu0
        %v740 = vadd.f32 %v568, %v739
        %v741 = vpop.f32.mrb[0].mxu0
        %v742 = vpop.f32.mrb[0].mxu0
        %v743 = vadd.f32 %v571, %v742
        %v744 = vpop.f32.mrb[0].mxu0
        %745 = vmatprep.mubr.bf16.mxu0 0
        %746 = vmatmul.mubr.bf16.gmra.mrb[0].mxu0 %v462
        %v747 = vpop.f32.mrb[0].mxu0
        %v748 = vadd.f32 %v576, %v747
        %v749 = vpop.f32.mrb[0].mxu0
        %v750 = vpop.f32.mrb[0].mxu0
        %v751 = vadd.f32 %v579, %v750
        %v752 = vpop.f32.mrb[0].mxu0
        %753 = vmatprep.mubr.bf16.mxu0 0
        %754 = vmatmul.mubr.bf16.gmra.mrb[0].mxu0 %v465
        %v755 = vpop.f32.mrb[0].mxu0
        %v756 = vadd.f32 %v584, %v755
        %v757 = vpop.f32.mrb[0].mxu0
        %v758 = vpop.f32.mrb[0].mxu0
        %v759 = vadd.f32 %v587, %v758
        %v760 = vpop.f32.mrb[0].mxu0
        %761 = vmatprep.mubr.bf16.mxu0 0
        %762 = vmatmul.mubr.bf16.gmra.mrb[0].mxu0 %v468
        %v763 = vpop.f32.mrb[0].mxu0
        %v764 = vadd.f32 %v592, %v763
        %v765 = vpop.f32.mrb[0].mxu0
        %v766 = vpop.f32.mrb[0].mxu0
        %v767 = vadd.f32 %v595, %v766
        %v768 = vpop.f32.mrb[0].mxu0
        %769 = vmatprep.mubr.bf16.mxu0 0
        %770 = vmatmul.mubr.bf16.gmra.mrb[0].mxu0 %v471
        %v771 = vpop.f32.mrb[0].mxu0
        %v772 = vadd.f32 %v600, %v771
        %v773 = vpop.f32.mrb[0].mxu0
        %v774 = vpop.f32.mrb[0].mxu0
        %v775 = vadd.f32 %v603, %v774
        %v776 = vpop.f32.mrb[0].mxu0
        %777 = vmatprep.mubr.bf16.mxu0 0
        %778 = vmatmul.mubr.bf16.gmra.mrb[0].mxu0 %v474
        %v779 = vpop.f32.mrb[0].mxu0
        %v780 = vadd.f32 %v608, %v779
        %v781 = vpop.f32.mrb[0].mxu0
        %v782 = vpop.f32.mrb[0].mxu0
        %v783 = vadd.f32 %v611, %v782
        %v784 = vpop.f32.mrb[0].mxu0
        %785 = vmatprep.mubr.bf16.mxu0 0
        %786 = vmatmul.mubr.bf16.gmra.mrb[0].mxu0 %v477
        %v787 = vpop.f32.mrb[0].mxu0
        %v788 = vadd.f32 %v616, %v787
        %v789 = vpop.f32.mrb[0].mxu0
        %v790 = vpop.f32.mrb[0].mxu0
        %v791 = vadd.f32 %v619, %v790
        %v792 = vpop.f32.mrb[0].mxu0
        %793 = vmatprep.mubr.bf16.mxu0 0
        %794 = vmatmul.mubr.bf16.gmra.mrb[0].mxu0 %v480
        %v795 = vpop.f32.mrb[0].mxu0
        %v796 = vadd.f32 %v624, %v795
        %v797 = vpop.f32.mrb[0].mxu0
        %v798 = vpop.f32.mrb[0].mxu0
        %v799 = vadd.f32 %v627, %v798
        %v800 = vpop.f32.mrb[0].mxu0
        %801 = vmatprep.mubr.bf16.mxu0 0
        %802 = vmatmul.mubr.bf16.gmra.mrb[0].mxu0 %v483
        %v803 = vpop.f32.mrb[0].mxu0
        %v804 = vadd.f32 %v632, %v803
        %v805 = vpop.f32.mrb[0].mxu0
        %v806 = vpop.f32.mrb[0].mxu0
        %v807 = vadd.f32 %v635, %v806
        %v808 = vpop.f32.mrb[0].mxu0
        %809 = vmatprep.mubr.bf16.mxu0 0
        %810 = vmatmul.mubr.bf16.gmra.mrb[0].mxu0 %v486
        %v811 = vpop.f32.mrb[0].mxu0
        %v812 = vadd.f32 %v640, %v811
        %v813 = vpop.f32.mrb[0].mxu0
        %v814 = vpop.f32.mrb[0].mxu0
        %v815 = vadd.f32 %v643, %v814
        %v816 = vpop.f32.mrb[0].mxu0
        %817 = vmatprep.mubr.bf16.mxu0 0
        %818 = vmatmul.mubr.bf16.gmra.mrb[0].mxu0 %v489
        %v819 = vpop.f32.mrb[0].mxu0
        %v820 = vadd.f32 %v648, %v819
        %v821 = vpop.f32.mrb[0].mxu0
        %v822 = vpop.f32.mrb[0].mxu0
        %v823 = vadd.f32 %v651, %v822
        %v824 = vpop.f32.mrb[0].mxu0
        %825 = vmatprep.mubr.bf16.mxu0 0
        %826 = vmatmul.mubr.bf16.gmra.mrb[0].mxu0 %v492
        %v827 = vpop.f32.mrb[0].mxu0
        %v828 = vadd.f32 %v656, %v827
        %v829 = vpop.f32.mrb[0].mxu0
        %v830 = vpop.f32.mrb[0].mxu0
        %v831 = vadd.f32 %v659, %v830
        %v832 = vpop.f32.mrb[0].mxu0
        %833 = vdwg.mxu0
        %s834 = scalar_lea.vmem [#allocation7], 12
        %v835 = vld [vmem:[%s834] sm:$0x3]
        %v838 = vunpack.c.l.b16 %v362
        %v839 = vunpack.c.l.b16 %v363
        %v840 = vpack.c.b16 %v839, %v838
        %v842 = vsel %vm448, %v840, 0
        %v845 = vsel %vm497, %v835, 0
        %847 = vmatprep.subr.bf16.mxu0 0
        %848 = vmatpush1.bf16.msra.mxu0 %v845
        %849 = vmatprep.subr.bf16.mxu0 0
        %850 = vmatpush1.bf16.msra.mxu0 0
        %851 = vmatprep.subr.bf16.mxu0 0
        %852 = vmatpush1.bf16.msra.mxu0 0
        %853 = vmatprep.subr.bf16.mxu0 0
        %854 = vmatpush1.bf16.msra.mxu0 0
        %855 = vmatprep.subr.bf16.mxu0 0
        %856 = vmatpush1.bf16.msra.mxu0 0
        %857 = vmatprep.subr.bf16.mxu0 0
        %858 = vmatpush1.bf16.msra.mxu0 0
        %859 = vmatprep.subr.bf16.mxu0 0
        %860 = vmatpush1.bf16.msra.mxu0 0
        %861 = vmatprep.subr.bf16.mxu0 0
        %862 = vmatpush1.bf16.msra.mxu0 0
        %863 = vmatprep.subr.bf16.mxu0 0
        %864 = vmatpush1.bf16.msra.mxu0 0
        %865 = vmatprep.subr.bf16.mxu0 0
        %866 = vmatpush1.bf16.msra.mxu0 0
        %867 = vmatprep.subr.bf16.mxu0 0
        %868 = vmatpush1.bf16.msra.mxu0 0
        %869 = vmatprep.subr.bf16.mxu0 0
        %870 = vmatpush1.bf16.msra.mxu0 0
        %871 = vmatprep.subr.bf16.mxu0 0
        %872 = vmatpush1.bf16.msra.mxu0 0
        %873 = vmatprep.subr.bf16.mxu0 0
        %874 = vmatpush1.bf16.msra.mxu0 0
        %875 = vmatprep.subr.bf16.mxu0 0
        %876 = vmatpush1.bf16.msra.mxu0 0
        %877 = vmatprep.subr.bf16.mxu0 0
        %878 = vmatpush1.bf16.msra.mxu0 0
        %879 = vmatprep.mubr.bf16.mxu0 0
        %880 = vmatmul.mubr.bf16.gmra.mrb[0].mxu0 %v453
        %v881 = vpop.f32.mrb[0].mxu0
        %v882 = vadd.f32 0.0, %v881
        %v883 = vpop.f32.mrb[0].mxu0
        %v884 = vpop.f32.mrb[0].mxu0
        %v885 = vadd.f32 0.0, %v884
        %v886 = vpop.f32.mrb[0].mxu0
        %887 = vmatprep.mubr.bf16.mxu0 0
        %888 = vmatmul.mubr.bf16.gmra.mrb[0].mxu0 %v456
        %v889 = vpop.f32.mrb[0].mxu0
        %v890 = vadd.f32 0.0, %v889
        %v891 = vpop.f32.mrb[0].mxu0
        %v892 = vpop.f32.mrb[0].mxu0
        %v893 = vadd.f32 0.0, %v892
        %v894 = vpop.f32.mrb[0].mxu0
        %895 = vmatprep.mubr.bf16.mxu0 0
        %896 = vmatmul.mubr.bf16.gmra.mrb[0].mxu0 %v459
        %v897 = vpop.f32.mrb[0].mxu0
        %v898 = vadd.f32 0.0, %v897
        %v899 = vpop.f32.mrb[0].mxu0
        %v900 = vpop.f32.mrb[0].mxu0
        %v901 = vadd.f32 0.0, %v900
        %v902 = vpop.f32.mrb[0].mxu0
        %903 = vmatprep.mubr.bf16.mxu0 0
        %904 = vmatmul.mubr.bf16.gmra.mrb[0].mxu0 %v462
        %v905 = vpop.f32.mrb[0].mxu0
        %v906 = vadd.f32 0.0, %v905
        %v907 = vpop.f32.mrb[0].mxu0
        %v908 = vpop.f32.mrb[0].mxu0
        %v909 = vadd.f32 0.0, %v908
        %v910 = vpop.f32.mrb[0].mxu0
        %911 = vmatprep.mubr.bf16.mxu0 0
        %912 = vmatmul.mubr.bf16.gmra.mrb[0].mxu0 %v465
        %v913 = vpop.f32.mrb[0].mxu0
        %v914 = vadd.f32 0.0, %v913
        %v915 = vpop.f32.mrb[0].mxu0
        %v916 = vpop.f32.mrb[0].mxu0
        %v917 = vadd.f32 0.0, %v916
        %v918 = vpop.f32.mrb[0].mxu0
        %919 = vmatprep.mubr.bf16.mxu0 0
        %920 = vmatmul.mubr.bf16.gmra.mrb[0].mxu0 %v468
        %v921 = vpop.f32.mrb[0].mxu0
        %v922 = vadd.f32 0.0, %v921
        %v923 = vpop.f32.mrb[0].mxu0
        %v924 = vpop.f32.mrb[0].mxu0
        %v925 = vadd.f32 0.0, %v924
        %v926 = vpop.f32.mrb[0].mxu0
        %927 = vmatprep.mubr.bf16.mxu0 0
        %928 = vmatmul.mubr.bf16.gmra.mrb[0].mxu0 %v471
        %v929 = vpop.f32.mrb[0].mxu0
        %v930 = vadd.f32 0.0, %v929
        %v931 = vpop.f32.mrb[0].mxu0
        %v932 = vpop.f32.mrb[0].mxu0
        %v933 = vadd.f32 0.0, %v932
        %v934 = vpop.f32.mrb[0].mxu0
        %935 = vmatprep.mubr.bf16.mxu0 0
        %936 = vmatmul.mubr.bf16.gmra.mrb[0].mxu0 %v474
        %v937 = vpop.f32.mrb[0].mxu0
        %v938 = vadd.f32 0.0, %v937
        %v939 = vpop.f32.mrb[0].mxu0
        %v940 = vpop.f32.mrb[0].mxu0
        %v941 = vadd.f32 0.0, %v940
        %v942 = vpop.f32.mrb[0].mxu0
        %943 = vmatprep.mubr.bf16.mxu0 0
        %944 = vmatmul.mubr.bf16.gmra.mrb[0].mxu0 %v477
        %v945 = vpop.f32.mrb[0].mxu0
        %v946 = vadd.f32 0.0, %v945
        %v947 = vpop.f32.mrb[0].mxu0
        %v948 = vpop.f32.mrb[0].mxu0
        %v949 = vadd.f32 0.0, %v948
        %v950 = vpop.f32.mrb[0].mxu0
        %951 = vmatprep.mubr.bf16.mxu0 0
        %952 = vmatmul.mubr.bf16.gmra.mrb[0].mxu0 %v480
        %v953 = vpop.f32.mrb[0].mxu0
        %v954 = vadd.f32 0.0, %v953
        %v955 = vpop.f32.mrb[0].mxu0
        %v956 = vpop.f32.mrb[0].mxu0
        %v957 = vadd.f32 0.0, %v956
        %v958 = vpop.f32.mrb[0].mxu0
        %959 = vmatprep.mubr.bf16.mxu0 0
        %960 = vmatmul.mubr.bf16.gmra.mrb[0].mxu0 %v483
        %v961 = vpop.f32.mrb[0].mxu0
        %v962 = vadd.f32 0.0, %v961
        %v963 = vpop.f32.mrb[0].mxu0
        %v964 = vpop.f32.mrb[0].mxu0
        %v965 = vadd.f32 0.0, %v964
        %v966 = vpop.f32.mrb[0].mxu0
        %967 = vmatprep.mubr.bf16.mxu0 0
        %968 = vmatmul.mubr.bf16.gmra.mrb[0].mxu0 %v486
        %v969 = vpop.f32.mrb[0].mxu0
        %v970 = vadd.f32 0.0, %v969
        %v971 = vpop.f32.mrb[0].mxu0
        %v972 = vpop.f32.mrb[0].mxu0
        %v973 = vadd.f32 0.0, %v972
        %v974 = vpop.f32.mrb[0].mxu0
        %975 = vmatprep.mubr.bf16.mxu0 0
        %976 = vmatmul.mubr.bf16.gmra.mrb[0].mxu0 %v489
        %v977 = vpop.f32.mrb[0].mxu0
        %v978 = vadd.f32 0.0, %v977
        %v979 = vpop.f32.mrb[0].mxu0
        %v980 = vpop.f32.mrb[0].mxu0
        %v981 = vadd.f32 0.0, %v980
        %v982 = vpop.f32.mrb[0].mxu0
        %983 = vmatprep.mubr.bf16.mxu0 0
        %984 = vmatmul.mubr.bf16.gmra.mrb[0].mxu0 %v492
        %v985 = vpop.f32.mrb[0].mxu0
        %v986 = vadd.f32 0.0, %v985
        %v987 = vpop.f32.mrb[0].mxu0
        %v988 = vpop.f32.mrb[0].mxu0
        %v989 = vadd.f32 0.0, %v988
        %v990 = vpop.f32.mrb[0].mxu0
        %991 = vmatprep.mubr.bf16.mxu0 0
        %992 = vmatmul.mubr.bf16.gmra.mrb[0].mxu0 %v495
        %v993 = vpop.f32.mrb[0].mxu0
        %v994 = vadd.f32 0.0, %v993
        %v995 = vpop.f32.mrb[0].mxu0
        %v996 = vpop.f32.mrb[0].mxu0
        %v997 = vadd.f32 0.0, %v996
        %v998 = vpop.f32.mrb[0].mxu0
        %999 = vmatprep.mubr.bf16.mxu0 0
        %1000 = vmatmul.mubr.bf16.gmra.mrb[0].mxu0 %v842
        %v1001 = vpop.f32.mrb[0].mxu0
        %v1002 = vadd.f32 0.0, %v1001
        %v1003 = vpop.f32.mrb[0].mxu0
        %v1004 = vpop.f32.mrb[0].mxu0
        %v1005 = vadd.f32 0.0, %v1004
        %v1006 = vpop.f32.mrb[0].mxu0
        %1007 = vdwg.mxu0
        %v1008 = vadd.f32 %v708, %v882
        %v1009 = vadd.f32 %v711, %v885
        %v1010 = vadd.f32 %v716, %v890
        %v1011 = vadd.f32 %v719, %v893
        %v1012 = vadd.f32 %v724, %v898
        %v1013 = vadd.f32 %v727, %v901
        %v1014 = vadd.f32 %v732, %v906
        %v1015 = vadd.f32 %v735, %v909
        %v1016 = vadd.f32 %v740, %v914
        %v1017 = vadd.f32 %v743, %v917
        %v1018 = vadd.f32 %v748, %v922
        %v1019 = vadd.f32 %v751, %v925
        %v1020 = vadd.f32 %v756, %v930
        %v1021 = vadd.f32 %v759, %v933
        %v1022 = vadd.f32 %v764, %v938
        %v1023 = vadd.f32 %v767, %v941
        %v1024 = vadd.f32 %v772, %v946
        %v1025 = vadd.f32 %v775, %v949
        %v1026 = vadd.f32 %v780, %v954
        %v1027 = vadd.f32 %v783, %v957
        %v1028 = vadd.f32 %v788, %v962
        %v1029 = vadd.f32 %v791, %v965
        %v1030 = vadd.f32 %v796, %v970
        %v1031 = vadd.f32 %v799, %v973
        %v1032 = vadd.f32 %v804, %v978
        %v1033 = vadd.f32 %v807, %v981
        %v1034 = vadd.f32 %v812, %v986
        %v1035 = vadd.f32 %v815, %v989
        %v1036 = vadd.f32 %v820, %v994
        %v1037 = vadd.f32 %v823, %v997
        %v1038 = vadd.f32 %v828, %v1002
        %v1039 = vadd.f32 %v831, %v1005
        %vm1040 = vsmask.f32 3328
        %vm1041 = vsmask.f32 7440
        %vm1042 = vmor %vm1040, %vm1041
        %v1044 = vshrl.u32 %v311, 16
        %v1046 = vrot.slane %v1044, 4
        %v1047 = vshll.u32 %v311, 16
        %v1049 = vrot.slane %v1047, 5
        %v1050 = vor.u32 %v1046, %v1049
        %v1051 = vrot.slane %v1050, 4
        %v1053 = vshll.u32 %v312, 16
        %v1055 = vrot.slane %v1053, 5
        %v1056 = vsel %vm1042, %v1051, %v1055
        %v1057 = vshrl.u32 %v312, 16
        %v1059 = vrot.slane %v1057, 4
        %v1060 = vor.u32 %v1059, %v1055
        %v1061 = vrot.slane %v1060, 4
        %v1063 = vshll.u32 %v313, 16
        %v1065 = vrot.slane %v1063, 5
        %v1066 = vsel %vm1042, %v1061, %v1065
        %v1068 = vshrl.u32 %v314, 16
        %v1070 = vrot.slane %v1068, 4
        %v1071 = vshll.u32 %v314, 16
        %v1073 = vrot.slane %v1071, 5
        %v1074 = vor.u32 %v1070, %v1073
        %v1075 = vrot.slane %v1074, 4
        %v1077 = vshll.u32 %v315, 16
        %v1079 = vrot.slane %v1077, 5
        %v1080 = vsel %vm1042, %v1075, %v1079
        %v1081 = vshrl.u32 %v315, 16
        %v1083 = vrot.slane %v1081, 4
        %v1084 = vor.u32 %v1083, %v1079
        %v1085 = vrot.slane %v1084, 4
        %v1087 = vshll.u32 %v316, 16
        %v1089 = vrot.slane %v1087, 5
        %v1090 = vsel %vm1042, %v1085, %v1089
        %v1092 = vshrl.u32 %v317, 16
        %v1094 = vrot.slane %v1092, 4
        %v1095 = vshll.u32 %v317, 16
        %v1097 = vrot.slane %v1095, 5
        %v1098 = vor.u32 %v1094, %v1097
        %v1099 = vrot.slane %v1098, 4
        %v1101 = vshll.u32 %v318, 16
        %v1103 = vrot.slane %v1101, 5
        %v1104 = vsel %vm1042, %v1099, %v1103
        %v1105 = vshrl.u32 %v318, 16
        %v1107 = vrot.slane %v1105, 4
        %v1108 = vor.u32 %v1107, %v1103
        %v1109 = vrot.slane %v1108, 4
        %v1111 = vshll.u32 %v319, 16
        %v1113 = vrot.slane %v1111, 5
        %v1114 = vsel %vm1042, %v1109, %v1113
        %v1116 = vshrl.u32 %v320, 16
        %v1118 = vrot.slane %v1116, 4
        %v1119 = vshll.u32 %v320, 16
        %v1121 = vrot.slane %v1119, 5
        %v1122 = vor.u32 %v1118, %v1121
        %v1123 = vrot.slane %v1122, 4
        %v1125 = vshll.u32 %v321, 16
        %v1127 = vrot.slane %v1125, 5
        %v1128 = vsel %vm1042, %v1123, %v1127
        %v1129 = vshrl.u32 %v321, 16
        %v1131 = vrot.slane %v1129, 4
        %v1132 = vor.u32 %v1131, %v1127
        %v1133 = vrot.slane %v1132, 4
        %v1135 = vshll.u32 %v322, 16
        %v1137 = vrot.slane %v1135, 5
        %v1138 = vsel %vm1042, %v1133, %v1137
        %v1140 = vshrl.u32 %v323, 16
        %v1142 = vrot.slane %v1140, 4
        %v1143 = vshll.u32 %v323, 16
        %v1145 = vrot.slane %v1143, 5
        %v1146 = vor.u32 %v1142, %v1145
        %v1147 = vrot.slane %v1146, 4
        %v1149 = vshll.u32 %v324, 16
        %v1151 = vrot.slane %v1149, 5
        %v1152 = vsel %vm1042, %v1147, %v1151
        %v1153 = vshrl.u32 %v324, 16
        %v1155 = vrot.slane %v1153, 4
        %v1156 = vor.u32 %v1155, %v1151
        %v1157 = vrot.slane %v1156, 4
        %v1159 = vshll.u32 %v325, 16
        %v1161 = vrot.slane %v1159, 5
        %v1162 = vsel %vm1042, %v1157, %v1161
        %v1164 = vshrl.u32 %v326, 16
        %v1166 = vrot.slane %v1164, 4
        %v1167 = vshll.u32 %v326, 16
        %v1169 = vrot.slane %v1167, 5
        %v1170 = vor.u32 %v1166, %v1169
        %v1171 = vrot.slane %v1170, 4
        %v1173 = vshll.u32 %v327, 16
        %v1175 = vrot.slane %v1173, 5
        %v1176 = vsel %vm1042, %v1171, %v1175
        %v1177 = vshrl.u32 %v327, 16
        %v1179 = vrot.slane %v1177, 4
        %v1180 = vor.u32 %v1179, %v1175
        %v1181 = vrot.slane %v1180, 4
        %v1183 = vshll.u32 %v328, 16
        %v1185 = vrot.slane %v1183, 5
        %v1186 = vsel %vm1042, %v1181, %v1185
        %v1188 = vshrl.u32 %v329, 16
        %v1190 = vrot.slane %v1188, 4
        %v1191 = vshll.u32 %v329, 16
        %v1193 = vrot.slane %v1191, 5
        %v1194 = vor.u32 %v1190, %v1193
        %v1195 = vrot.slane %v1194, 4
        %v1197 = vshll.u32 %v330, 16
        %v1199 = vrot.slane %v1197, 5
        %v1200 = vsel %vm1042, %v1195, %v1199
        %v1201 = vshrl.u32 %v330, 16
        %v1203 = vrot.slane %v1201, 4
        %v1204 = vor.u32 %v1203, %v1199
        %v1205 = vrot.slane %v1204, 4
        %v1207 = vshll.u32 %v331, 16
        %v1209 = vrot.slane %v1207, 5
        %v1210 = vsel %vm1042, %v1205, %v1209
        %v1212 = vshrl.u32 %v332, 16
        %v1214 = vrot.slane %v1212, 4
        %v1215 = vshll.u32 %v332, 16
        %v1217 = vrot.slane %v1215, 5
        %v1218 = vor.u32 %v1214, %v1217
        %v1219 = vrot.slane %v1218, 4
        %v1221 = vshll.u32 %v333, 16
        %v1223 = vrot.slane %v1221, 5
        %v1224 = vsel %vm1042, %v1219, %v1223
        %v1225 = vshrl.u32 %v333, 16
        %v1227 = vrot.slane %v1225, 4
        %v1228 = vor.u32 %v1227, %v1223
        %v1229 = vrot.slane %v1228, 4
        %v1231 = vshll.u32 %v334, 16
        %v1233 = vrot.slane %v1231, 5
        %v1234 = vsel %vm1042, %v1229, %v1233
        %v1236 = vshrl.u32 %v335, 16
        %v1238 = vrot.slane %v1236, 4
        %v1239 = vshll.u32 %v335, 16
        %v1241 = vrot.slane %v1239, 5
        %v1242 = vor.u32 %v1238, %v1241
        %v1243 = vrot.slane %v1242, 4
        %v1245 = vshll.u32 %v336, 16
        %v1247 = vrot.slane %v1245, 5
        %v1248 = vsel %vm1042, %v1243, %v1247
        %v1249 = vshrl.u32 %v336, 16
        %v1251 = vrot.slane %v1249, 4
        %v1252 = vor.u32 %v1251, %v1247
        %v1253 = vrot.slane %v1252, 4
        %v1255 = vshll.u32 %v337, 16
        %v1257 = vrot.slane %v1255, 5
        %v1258 = vsel %vm1042, %v1253, %v1257
        %v1260 = vshrl.u32 %v338, 16
        %v1262 = vrot.slane %v1260, 4
        %v1263 = vshll.u32 %v338, 16
        %v1265 = vrot.slane %v1263, 5
        %v1266 = vor.u32 %v1262, %v1265
        %v1267 = vrot.slane %v1266, 4
        %v1269 = vshll.u32 %v339, 16
        %v1271 = vrot.slane %v1269, 5
        %v1272 = vsel %vm1042, %v1267, %v1271
        %v1273 = vshrl.u32 %v339, 16
        %v1275 = vrot.slane %v1273, 4
        %v1276 = vor.u32 %v1275, %v1271
        %v1277 = vrot.slane %v1276, 4
        %v1279 = vshll.u32 %v340, 16
        %v1281 = vrot.slane %v1279, 5
        %v1282 = vsel %vm1042, %v1277, %v1281
        %v1284 = vshrl.u32 %v341, 16
        %v1286 = vrot.slane %v1284, 4
        %v1287 = vshll.u32 %v341, 16
        %v1289 = vrot.slane %v1287, 5
        %v1290 = vor.u32 %v1286, %v1289
        %v1291 = vrot.slane %v1290, 4
        %v1293 = vshll.u32 %v342, 16
        %v1295 = vrot.slane %v1293, 5
        %v1296 = vsel %vm1042, %v1291, %v1295
        %v1297 = vshrl.u32 %v342, 16
        %v1299 = vrot.slane %v1297, 4
        %v1300 = vor.u32 %v1299, %v1295
        %v1301 = vrot.slane %v1300, 4
        %v1303 = vshll.u32 %v343, 16
        %v1305 = vrot.slane %v1303, 5
        %v1306 = vsel %vm1042, %v1301, %v1305
        %v1308 = vshrl.u32 %v344, 16
        %v1310 = vrot.slane %v1308, 4
        %v1311 = vshll.u32 %v344, 16
        %v1313 = vrot.slane %v1311, 5
        %v1314 = vor.u32 %v1310, %v1313
        %v1315 = vrot.slane %v1314, 4
        %v1317 = vshll.u32 %v345, 16
        %v1319 = vrot.slane %v1317, 5
        %v1320 = vsel %vm1042, %v1315, %v1319
        %v1321 = vshrl.u32 %v345, 16
        %v1323 = vrot.slane %v1321, 4
        %v1324 = vor.u32 %v1323, %v1319
        %v1325 = vrot.slane %v1324, 4
        %v1327 = vshll.u32 %v346, 16
        %v1329 = vrot.slane %v1327, 5
        %v1330 = vsel %vm1042, %v1325, %v1329
        %v1332 = vshrl.u32 %v347, 16
        %v1334 = vrot.slane %v1332, 4
        %v1335 = vshll.u32 %v347, 16
        %v1337 = vrot.slane %v1335, 5
        %v1338 = vor.u32 %v1334, %v1337
        %v1339 = vrot.slane %v1338, 4
        %v1341 = vshll.u32 %v348, 16
        %v1343 = vrot.slane %v1341, 5
        %v1344 = vsel %vm1042, %v1339, %v1343
        %v1345 = vshrl.u32 %v348, 16
        %v1347 = vrot.slane %v1345, 4
        %v1348 = vor.u32 %v1347, %v1343
        %v1349 = vrot.slane %v1348, 4
        %v1351 = vshll.u32 %v349, 16
        %v1353 = vrot.slane %v1351, 5
        %v1354 = vsel %vm1042, %v1349, %v1353
        %v1356 = vshrl.u32 %v350, 16
        %v1358 = vrot.slane %v1356, 4
        %v1359 = vshll.u32 %v350, 16
        %v1361 = vrot.slane %v1359, 5
        %v1362 = vor.u32 %v1358, %v1361
        %v1363 = vrot.slane %v1362, 4
        %v1365 = vshll.u32 %v351, 16
        %v1367 = vrot.slane %v1365, 5
        %v1368 = vsel %vm1042, %v1363, %v1367
        %v1369 = vshrl.u32 %v351, 16
        %v1371 = vrot.slane %v1369, 4
        %v1372 = vor.u32 %v1371, %v1367
        %v1373 = vrot.slane %v1372, 4
        %v1375 = vshll.u32 %v352, 16
        %v1377 = vrot.slane %v1375, 5
        %v1378 = vsel %vm1042, %v1373, %v1377
        %v1380 = vshrl.u32 %v353, 16
        %v1382 = vrot.slane %v1380, 4
        %v1383 = vshll.u32 %v353, 16
        %v1385 = vrot.slane %v1383, 5
        %v1386 = vor.u32 %v1382, %v1385
        %v1387 = vrot.slane %v1386, 4
        %v1389 = vshll.u32 %v354, 16
        %v1391 = vrot.slane %v1389, 5
        %v1392 = vsel %vm1042, %v1387, %v1391
        %v1393 = vshrl.u32 %v354, 16
        %v1395 = vrot.slane %v1393, 4
        %v1396 = vor.u32 %v1395, %v1391
        %v1397 = vrot.slane %v1396, 4
        %v1399 = vshll.u32 %v355, 16
        %v1401 = vrot.slane %v1399, 5
        %v1402 = vsel %vm1042, %v1397, %v1401
        %v1404 = vshrl.u32 %v356, 16
        %v1406 = vrot.slane %v1404, 4
        %v1407 = vshll.u32 %v356, 16
        %v1409 = vrot.slane %v1407, 5
        %v1410 = vor.u32 %v1406, %v1409
        %v1411 = vrot.slane %v1410, 4
        %v1413 = vshll.u32 %v357, 16
        %v1415 = vrot.slane %v1413, 5
        %v1416 = vsel %vm1042, %v1411, %v1415
        %v1417 = vshrl.u32 %v357, 16
        %v1419 = vrot.slane %v1417, 4
        %v1420 = vor.u32 %v1419, %v1415
        %v1421 = vrot.slane %v1420, 4
        %v1423 = vshll.u32 %v358, 16
        %v1425 = vrot.slane %v1423, 5
        %v1426 = vsel %vm1042, %v1421, %v1425
        %s1427 = scalar_lea.vmem [#allocation7], 2
        %v1428 = vld [vmem:[%s1427] sm:$0x3]
        %v1429 = vunpack.c.l.b16 %v1056
        %v1430 = vunpack.c.l.b16 %v1066
        %v1431 = vunpack.c.l.b16 %v1080
        %v1432 = vunpack.c.l.b16 %v1090
        %v1433 = vunpack.c.l.b16 %v1104
        %v1434 = vunpack.c.l.b16 %v1114
        %v1435 = vunpack.c.l.b16 %v1128
        %v1436 = vunpack.c.l.b16 %v1138
        %v1437 = vunpack.c.l.b16 %v1152
        %v1438 = vunpack.c.l.b16 %v1162
        %v1439 = vunpack.c.l.b16 %v1176
        %v1440 = vunpack.c.l.b16 %v1186
        %v1441 = vunpack.c.l.b16 %v1200
        %v1442 = vunpack.c.l.b16 %v1210
        %v1443 = vunpack.c.l.b16 %v1224
        %v1444 = vunpack.c.l.b16 %v1234
        %v1445 = vunpack.c.l.b16 %v1248
        %v1446 = vunpack.c.l.b16 %v1258
        %v1447 = vunpack.c.l.b16 %v1272
        %v1448 = vunpack.c.l.b16 %v1282
        %v1449 = vunpack.c.l.b16 %v1296
        %v1450 = vunpack.c.l.b16 %v1306
        %v1451 = vunpack.c.l.b16 %v1320
        %v1452 = vunpack.c.l.b16 %v1330
        %v1453 = vunpack.c.l.b16 %v1344
        %v1454 = vunpack.c.l.b16 %v1354
        %v1455 = vunpack.c.l.b16 %v1368
        %v1456 = vunpack.c.l.b16 %v1378
        %v1457 = vunpack.c.l.b16 %v1392
        %v1458 = vunpack.c.l.b16 %v1402
        %v1459 = vunpack.c.l.b16 %v1416
        %v1460 = vunpack.c.l.b16 %v1426
        %v1461 = vpack.c.b16 %v1430, %v1429
        %v1462 = vpack.c.b16 %v1432, %v1431
        %v1463 = vpack.c.b16 %v1434, %v1433
        %v1464 = vpack.c.b16 %v1436, %v1435
        %v1465 = vpack.c.b16 %v1438, %v1437
        %v1466 = vpack.c.b16 %v1440, %v1439
        %v1467 = vpack.c.b16 %v1442, %v1441
        %v1468 = vpack.c.b16 %v1444, %v1443
        %v1469 = vpack.c.b16 %v1446, %v1445
        %v1470 = vpack.c.b16 %v1448, %v1447
        %v1471 = vpack.c.b16 %v1450, %v1449
        %v1472 = vpack.c.b16 %v1452, %v1451
        %v1473 = vpack.c.b16 %v1454, %v1453
        %v1474 = vpack.c.b16 %v1456, %v1455
        %v1475 = vpack.c.b16 %v1458, %v1457
        %v1476 = vpack.c.b16 %v1460, %v1459
        %v1478 = vsel %vm448, %v1461, 0
        %v1481 = vsel %vm448, %v1462, 0
        %v1484 = vsel %vm448, %v1463, 0
        %v1487 = vsel %vm448, %v1464, 0
        %v1490 = vsel %vm448, %v1465, 0
        %v1493 = vsel %vm448, %v1466, 0
        %v1496 = vsel %vm448, %v1467, 0
        %v1499 = vsel %vm448, %v1468, 0
        %v1502 = vsel %vm448, %v1469, 0
        %v1505 = vsel %vm448, %v1470, 0
        %v1508 = vsel %vm448, %v1471, 0
        %v1511 = vsel %vm448, %v1472, 0
        %v1514 = vsel %vm448, %v1473, 0
        %v1517 = vsel %vm448, %v1474, 0
        %v1520 = vsel %vm448, %v1475, 0
        %v1523 = vsel %vm448, %v1476, 0
        %v1526 = vsel %vm497, %v1428, 0
        %1528 = vmatprep.subr.bf16.mxu0 0
        %1529 = vmatpush1.bf16.msra.mxu0 %v1526
        %1530 = vmatprep.subr.bf16.mxu0 0
        %1531 = vmatpush1.bf16.msra.mxu0 0
        %1532 = vmatprep.subr.bf16.mxu0 0
        %1533 = vmatpush1.bf16.msra.mxu0 0
        %1534 = vmatprep.subr.bf16.mxu0 0
        %1535 = vmatpush1.bf16.msra.mxu0 0
        %1536 = vmatprep.subr.bf16.mxu0 0
        %1537 = vmatpush1.bf16.msra.mxu0 0
        %1538 = vmatprep.subr.bf16.mxu0 0
        %1539 = vmatpush1.bf16.msra.mxu0 0
        %1540 = vmatprep.subr.bf16.mxu0 0
        %1541 = vmatpush1.bf16.msra.mxu0 0
        %1542 = vmatprep.subr.bf16.mxu0 0
        %1543 = vmatpush1.bf16.msra.mxu0 0
        %1544 = vmatprep.subr.bf16.mxu0 0
        %1545 = vmatpush1.bf16.msra.mxu0 0
        %1546 = vmatprep.subr.bf16.mxu0 0
        %1547 = vmatpush1.bf16.msra.mxu0 0
        %1548 = vmatprep.subr.bf16.mxu0 0
        %1549 = vmatpush1.bf16.msra.mxu0 0
        %1550 = vmatprep.subr.bf16.mxu0 0
        %1551 = vmatpush1.bf16.msra.mxu0 0
        %1552 = vmatprep.subr.bf16.mxu0 0
        %1553 = vmatpush1.bf16.msra.mxu0 0
        %1554 = vmatprep.subr.bf16.mxu0 0
        %1555 = vmatpush1.bf16.msra.mxu0 0
        %1556 = vmatprep.subr.bf16.mxu0 0
        %1557 = vmatpush1.bf16.msra.mxu0 0
        %1558 = vmatprep.subr.bf16.mxu0 0
        %1559 = vmatpush1.bf16.msra.mxu0 0
        %1560 = vmatprep.mubr.bf16.mxu0 0
        %1561 = vmatmul.mubr.bf16.gmra.mrb[0].mxu0 %v1478
        %v1562 = vpop.f32.mrb[0].mxu0
        %v1563 = vadd.f32 0.0, %v1562
        %v1564 = vpop.f32.mrb[0].mxu0
        %v1565 = vpop.f32.mrb[0].mxu0
        %v1566 = vadd.f32 0.0, %v1565
        %v1567 = vpop.f32.mrb[0].mxu0
        %1568 = vmatprep.mubr.bf16.mxu0 0
        %1569 = vmatmul.mubr.bf16.gmra.mrb[0].mxu0 %v1481
        %v1570 = vpop.f32.mrb[0].mxu0
        %v1571 = vadd.f32 0.0, %v1570
        %v1572 = vpop.f32.mrb[0].mxu0
        %v1573 = vpop.f32.mrb[0].mxu0
        %v1574 = vadd.f32 0.0, %v1573
        %v1575 = vpop.f32.mrb[0].mxu0
        %1576 = vmatprep.mubr.bf16.mxu0 0
        %1577 = vmatmul.mubr.bf16.gmra.mrb[0].mxu0 %v1484
        %v1578 = vpop.f32.mrb[0].mxu0
        %v1579 = vadd.f32 0.0, %v1578
        %v1580 = vpop.f32.mrb[0].mxu0
        %v1581 = vpop.f32.mrb[0].mxu0
        %v1582 = vadd.f32 0.0, %v1581
        %v1583 = vpop.f32.mrb[0].mxu0
        %1584 = vmatprep.mubr.bf16.mxu0 0
        %1585 = vmatmul.mubr.bf16.gmra.mrb[0].mxu0 %v1487
        %v1586 = vpop.f32.mrb[0].mxu0
        %v1587 = vadd.f32 0.0, %v1586
        %v1588 = vpop.f32.mrb[0].mxu0
        %v1589 = vpop.f32.mrb[0].mxu0
        %v1590 = vadd.f32 0.0, %v1589
        %v1591 = vpop.f32.mrb[0].mxu0
        %1592 = vmatprep.mubr.bf16.mxu0 0
        %1593 = vmatmul.mubr.bf16.gmra.mrb[0].mxu0 %v1490
        %v1594 = vpop.f32.mrb[0].mxu0
        %v1595 = vadd.f32 0.0, %v1594
        %v1596 = vpop.f32.mrb[0].mxu0
        %v1597 = vpop.f32.mrb[0].mxu0
        %v1598 = vadd.f32 0.0, %v1597
        %v1599 = vpop.f32.mrb[0].mxu0
        %1600 = vmatprep.mubr.bf16.mxu0 0
        %1601 = vmatmul.mubr.bf16.gmra.mrb[0].mxu0 %v1493
        %v1602 = vpop.f32.mrb[0].mxu0
        %v1603 = vadd.f32 0.0, %v1602
        %v1604 = vpop.f32.mrb[0].mxu0
        %v1605 = vpop.f32.mrb[0].mxu0
        %v1606 = vadd.f32 0.0, %v1605
        %v1607 = vpop.f32.mrb[0].mxu0
        %1608 = vmatprep.mubr.bf16.mxu0 0
        %1609 = vmatmul.mubr.bf16.gmra.mrb[0].mxu0 %v1496
        %v1610 = vpop.f32.mrb[0].mxu0
        %v1611 = vadd.f32 0.0, %v1610
        %v1612 = vpop.f32.mrb[0].mxu0
        %v1613 = vpop.f32.mrb[0].mxu0
        %v1614 = vadd.f32 0.0, %v1613
        %v1615 = vpop.f32.mrb[0].mxu0
        %1616 = vmatprep.mubr.bf16.mxu0 0
        %1617 = vmatmul.mubr.bf16.gmra.mrb[0].mxu0 %v1499
        %v1618 = vpop.f32.mrb[0].mxu0
        %v1619 = vadd.f32 0.0, %v1618
        %v1620 = vpop.f32.mrb[0].mxu0
        %v1621 = vpop.f32.mrb[0].mxu0
        %v1622 = vadd.f32 0.0, %v1621
        %v1623 = vpop.f32.mrb[0].mxu0
        %1624 = vmatprep.mubr.bf16.mxu0 0
        %1625 = vmatmul.mubr.bf16.gmra.mrb[0].mxu0 %v1502
        %v1626 = vpop.f32.mrb[0].mxu0
        %v1627 = vadd.f32 0.0, %v1626
        %v1628 = vpop.f32.mrb[0].mxu0
        %v1629 = vpop.f32.mrb[0].mxu0
        %v1630 = vadd.f32 0.0, %v1629
        %v1631 = vpop.f32.mrb[0].mxu0
        %1632 = vmatprep.mubr.bf16.mxu0 0
        %1633 = vmatmul.mubr.bf16.gmra.mrb[0].mxu0 %v1505
        %v1634 = vpop.f32.mrb[0].mxu0
        %v1635 = vadd.f32 0.0, %v1634
        %v1636 = vpop.f32.mrb[0].mxu0
        %v1637 = vpop.f32.mrb[0].mxu0
        %v1638 = vadd.f32 0.0, %v1637
        %v1639 = vpop.f32.mrb[0].mxu0
        %1640 = vmatprep.mubr.bf16.mxu0 0
        %1641 = vmatmul.mubr.bf16.gmra.mrb[0].mxu0 %v1508
        %v1642 = vpop.f32.mrb[0].mxu0
        %v1643 = vadd.f32 0.0, %v1642
        %v1644 = vpop.f32.mrb[0].mxu0
        %v1645 = vpop.f32.mrb[0].mxu0
        %v1646 = vadd.f32 0.0, %v1645
        %v1647 = vpop.f32.mrb[0].mxu0
        %1648 = vmatprep.mubr.bf16.mxu0 0
        %1649 = vmatmul.mubr.bf16.gmra.mrb[0].mxu0 %v1511
        %v1650 = vpop.f32.mrb[0].mxu0
        %v1651 = vadd.f32 0.0, %v1650
        %v1652 = vpop.f32.mrb[0].mxu0
        %v1653 = vpop.f32.mrb[0].mxu0
        %v1654 = vadd.f32 0.0, %v1653
        %v1655 = vpop.f32.mrb[0].mxu0
        %1656 = vmatprep.mubr.bf16.mxu0 0
        %1657 = vmatmul.mubr.bf16.gmra.mrb[0].mxu0 %v1514
        %v1658 = vpop.f32.mrb[0].mxu0
        %v1659 = vadd.f32 0.0, %v1658
        %v1660 = vpop.f32.mrb[0].mxu0
        %v1661 = vpop.f32.mrb[0].mxu0
        %v1662 = vadd.f32 0.0, %v1661
        %v1663 = vpop.f32.mrb[0].mxu0
        %1664 = vmatprep.mubr.bf16.mxu0 0
        %1665 = vmatmul.mubr.bf16.gmra.mrb[0].mxu0 %v1517
        %v1666 = vpop.f32.mrb[0].mxu0
        %v1667 = vadd.f32 0.0, %v1666
        %v1668 = vpop.f32.mrb[0].mxu0
        %v1669 = vpop.f32.mrb[0].mxu0
        %v1670 = vadd.f32 0.0, %v1669
        %v1671 = vpop.f32.mrb[0].mxu0
        %1672 = vmatprep.mubr.bf16.mxu0 0
        %1673 = vmatmul.mubr.bf16.gmra.mrb[0].mxu0 %v1520
        %v1674 = vpop.f32.mrb[0].mxu0
        %v1675 = vadd.f32 0.0, %v1674
        %v1676 = vpop.f32.mrb[0].mxu0
        %v1677 = vpop.f32.mrb[0].mxu0
        %v1678 = vadd.f32 0.0, %v1677
        %v1679 = vpop.f32.mrb[0].mxu0
        %1680 = vmatprep.mubr.bf16.mxu0 0
        %1681 = vmatmul.mubr.bf16.gmra.mrb[0].mxu0 %v1523
        %v1682 = vpop.f32.mrb[0].mxu0
        %v1683 = vadd.f32 0.0, %v1682
        %v1684 = vpop.f32.mrb[0].mxu0
        %v1685 = vpop.f32.mrb[0].mxu0
        %v1686 = vadd.f32 0.0, %v1685
        %v1687 = vpop.f32.mrb[0].mxu0
        %1688 = vdwg.mxu0
        %v1689 = vadd.f32 %v1008, %v1563
        %v1690 = vadd.f32 %v1009, %v1566
        %v1691 = vadd.f32 %v1010, %v1571
        %v1692 = vadd.f32 %v1011, %v1574
        %v1693 = vadd.f32 %v1012, %v1579
        %v1694 = vadd.f32 %v1013, %v1582
        %v1695 = vadd.f32 %v1014, %v1587
        %v1696 = vadd.f32 %v1015, %v1590
        %v1697 = vadd.f32 %v1016, %v1595
        %v1698 = vadd.f32 %v1017, %v1598
        %v1699 = vadd.f32 %v1018, %v1603
        %v1700 = vadd.f32 %v1019, %v1606
        %v1701 = vadd.f32 %v1020, %v1611
        %v1702 = vadd.f32 %v1021, %v1614
        %v1703 = vadd.f32 %v1022, %v1619
        %v1704 = vadd.f32 %v1023, %v1622
        %v1705 = vadd.f32 %v1024, %v1627
        %v1706 = vadd.f32 %v1025, %v1630
        %v1707 = vadd.f32 %v1026, %v1635
        %v1708 = vadd.f32 %v1027, %v1638
        %v1709 = vadd.f32 %v1028, %v1643
        %v1710 = vadd.f32 %v1029, %v1646
        %v1711 = vadd.f32 %v1030, %v1651
        %v1712 = vadd.f32 %v1031, %v1654
        %v1713 = vadd.f32 %v1032, %v1659
        %v1714 = vadd.f32 %v1033, %v1662
        %v1715 = vadd.f32 %v1034, %v1667
        %v1716 = vadd.f32 %v1035, %v1670
        %v1717 = vadd.f32 %v1036, %v1675
        %v1718 = vadd.f32 %v1037, %v1678
        %v1719 = vadd.f32 %v1038, %v1683
        %v1720 = vadd.f32 %v1039, %v1686
        %v1722 = vshrl.u32 %v359, 16
        %v1724 = vrot.slane %v1722, 4
        %v1725 = vshll.u32 %v359, 16
        %v1727 = vrot.slane %v1725, 5
        %v1728 = vor.u32 %v1724, %v1727
        %v1729 = vrot.slane %v1728, 4
        %v1731 = vshll.u32 %v360, 16
        %v1733 = vrot.slane %v1731, 5
        %v1734 = vsel %vm1042, %v1729, %v1733
        %v1735 = vshrl.u32 %v360, 16
        %v1737 = vrot.slane %v1735, 4
        %v1738 = vor.u32 %v1737, %v1733
        %v1739 = vrot.slane %v1738, 4
        %v1741 = vshll.u32 %v361, 16
        %v1743 = vrot.slane %v1741, 5
        %v1744 = vsel %vm1042, %v1739, %v1743
        %s1745 = scalar_lea.vmem [#allocation7], 8
        %v1746 = vld [vmem:[%s1745] sm:$0x3]
        %v1747 = vunpack.c.l.b16 %v1734
        %v1748 = vunpack.c.l.b16 %v1744
        %v1749 = vpack.c.b16 %v1748, %v1747
        %v1751 = vsel %vm448, %v1749, 0
        %v1754 = vsel %vm497, %v1746, 0
        %1756 = vmatprep.subr.bf16.mxu0 0
        %1757 = vmatpush1.bf16.msra.mxu0 %v1754
        %1758 = vmatprep.subr.bf16.mxu0 0
        %1759 = vmatpush1.bf16.msra.mxu0 0
        %1760 = vmatprep.subr.bf16.mxu0 0
        %1761 = vmatpush1.bf16.msra.mxu0 0
        %1762 = vmatprep.subr.bf16.mxu0 0
        %1763 = vmatpush1.bf16.msra.mxu0 0
        %1764 = vmatprep.subr.bf16.mxu0 0
        %1765 = vmatpush1.bf16.msra.mxu0 0
        %1766 = vmatprep.subr.bf16.mxu0 0
        %1767 = vmatpush1.bf16.msra.mxu0 0
        %1768 = vmatprep.subr.bf16.mxu0 0
        %1769 = vmatpush1.bf16.msra.mxu0 0
        %1770 = vmatprep.subr.bf16.mxu0 0
        %1771 = vmatpush1.bf16.msra.mxu0 0
        %1772 = vmatprep.subr.bf16.mxu0 0
        %1773 = vmatpush1.bf16.msra.mxu0 0
        %1774 = vmatprep.subr.bf16.mxu0 0
        %1775 = vmatpush1.bf16.msra.mxu0 0
        %1776 = vmatprep.subr.bf16.mxu0 0
        %1777 = vmatpush1.bf16.msra.mxu0 0
        %1778 = vmatprep.subr.bf16.mxu0 0
        %1779 = vmatpush1.bf16.msra.mxu0 0
        %1780 = vmatprep.subr.bf16.mxu0 0
        %1781 = vmatpush1.bf16.msra.mxu0 0
        %1782 = vmatprep.subr.bf16.mxu0 0
        %1783 = vmatpush1.bf16.msra.mxu0 0
        %1784 = vmatprep.subr.bf16.mxu0 0
        %1785 = vmatpush1.bf16.msra.mxu0 0
        %1786 = vmatprep.subr.bf16.mxu0 0
        %1787 = vmatpush1.bf16.msra.mxu0 0
        %1788 = vmatprep.mubr.bf16.mxu0 0
        %1789 = vmatmul.mubr.bf16.gmra.mrb[0].mxu0 %v1481
        %v1790 = vpop.f32.mrb[0].mxu0
        %v1791 = vadd.f32 0.0, %v1790
        %v1792 = vpop.f32.mrb[0].mxu0
        %v1793 = vpop.f32.mrb[0].mxu0
        %v1794 = vadd.f32 0.0, %v1793
        %v1795 = vpop.f32.mrb[0].mxu0
        %1796 = vmatprep.mubr.bf16.mxu0 0
        %1797 = vmatmul.mubr.bf16.gmra.mrb[0].mxu0 %v1484
        %v1798 = vpop.f32.mrb[0].mxu0
        %v1799 = vadd.f32 0.0, %v1798
        %v1800 = vpop.f32.mrb[0].mxu0
        %v1801 = vpop.f32.mrb[0].mxu0
        %v1802 = vadd.f32 0.0, %v1801
        %v1803 = vpop.f32.mrb[0].mxu0
        %1804 = vmatprep.mubr.bf16.mxu0 0
        %1805 = vmatmul.mubr.bf16.gmra.mrb[0].mxu0 %v1487
        %v1806 = vpop.f32.mrb[0].mxu0
        %v1807 = vadd.f32 0.0, %v1806
        %v1808 = vpop.f32.mrb[0].mxu0
        %v1809 = vpop.f32.mrb[0].mxu0
        %v1810 = vadd.f32 0.0, %v1809
        %v1811 = vpop.f32.mrb[0].mxu0
        %1812 = vmatprep.mubr.bf16.mxu0 0
        %1813 = vmatmul.mubr.bf16.gmra.mrb[0].mxu0 %v1490
        %v1814 = vpop.f32.mrb[0].mxu0
        %v1815 = vadd.f32 0.0, %v1814
        %v1816 = vpop.f32.mrb[0].mxu0
        %v1817 = vpop.f32.mrb[0].mxu0
        %v1818 = vadd.f32 0.0, %v1817
        %v1819 = vpop.f32.mrb[0].mxu0
        %1820 = vmatprep.mubr.bf16.mxu0 0
        %1821 = vmatmul.mubr.bf16.gmra.mrb[0].mxu0 %v1493
        %v1822 = vpop.f32.mrb[0].mxu0
        %v1823 = vadd.f32 0.0, %v1822
        %v1824 = vpop.f32.mrb[0].mxu0
        %v1825 = vpop.f32.mrb[0].mxu0
        %v1826 = vadd.f32 0.0, %v1825
        %v1827 = vpop.f32.mrb[0].mxu0
        %1828 = vmatprep.mubr.bf16.mxu0 0
        %1829 = vmatmul.mubr.bf16.gmra.mrb[0].mxu0 %v1496
        %v1830 = vpop.f32.mrb[0].mxu0
        %v1831 = vadd.f32 0.0, %v1830
        %v1832 = vpop.f32.mrb[0].mxu0
        %v1833 = vpop.f32.mrb[0].mxu0
        %v1834 = vadd.f32 0.0, %v1833
        %v1835 = vpop.f32.mrb[0].mxu0
        %1836 = vmatprep.mubr.bf16.mxu0 0
        %1837 = vmatmul.mubr.bf16.gmra.mrb[0].mxu0 %v1499
        %v1838 = vpop.f32.mrb[0].mxu0
        %v1839 = vadd.f32 0.0, %v1838
        %v1840 = vpop.f32.mrb[0].mxu0
        %v1841 = vpop.f32.mrb[0].mxu0
        %v1842 = vadd.f32 0.0, %v1841
        %v1843 = vpop.f32.mrb[0].mxu0
        %1844 = vmatprep.mubr.bf16.mxu0 0
        %1845 = vmatmul.mubr.bf16.gmra.mrb[0].mxu0 %v1502
        %v1846 = vpop.f32.mrb[0].mxu0
        %v1847 = vadd.f32 0.0, %v1846
        %v1848 = vpop.f32.mrb[0].mxu0
        %v1849 = vpop.f32.mrb[0].mxu0
        %v1850 = vadd.f32 0.0, %v1849
        %v1851 = vpop.f32.mrb[0].mxu0
        %1852 = vmatprep.mubr.bf16.mxu0 0
        %1853 = vmatmul.mubr.bf16.gmra.mrb[0].mxu0 %v1505
        %v1854 = vpop.f32.mrb[0].mxu0
        %v1855 = vadd.f32 0.0, %v1854
        %v1856 = vpop.f32.mrb[0].mxu0
        %v1857 = vpop.f32.mrb[0].mxu0
        %v1858 = vadd.f32 0.0, %v1857
        %v1859 = vpop.f32.mrb[0].mxu0
        %1860 = vmatprep.mubr.bf16.mxu0 0
        %1861 = vmatmul.mubr.bf16.gmra.mrb[0].mxu0 %v1508
        %v1862 = vpop.f32.mrb[0].mxu0
        %v1863 = vadd.f32 0.0, %v1862
        %v1864 = vpop.f32.mrb[0].mxu0
        %v1865 = vpop.f32.mrb[0].mxu0
        %v1866 = vadd.f32 0.0, %v1865
        %v1867 = vpop.f32.mrb[0].mxu0
        %1868 = vmatprep.mubr.bf16.mxu0 0
        %1869 = vmatmul.mubr.bf16.gmra.mrb[0].mxu0 %v1511
        %v1870 = vpop.f32.mrb[0].mxu0
        %v1871 = vadd.f32 0.0, %v1870
        %v1872 = vpop.f32.mrb[0].mxu0
        %v1873 = vpop.f32.mrb[0].mxu0
        %v1874 = vadd.f32 0.0, %v1873
        %v1875 = vpop.f32.mrb[0].mxu0
        %1876 = vmatprep.mubr.bf16.mxu0 0
        %1877 = vmatmul.mubr.bf16.gmra.mrb[0].mxu0 %v1514
        %v1878 = vpop.f32.mrb[0].mxu0
        %v1879 = vadd.f32 0.0, %v1878
        %v1880 = vpop.f32.mrb[0].mxu0
        %v1881 = vpop.f32.mrb[0].mxu0
        %v1882 = vadd.f32 0.0, %v1881
        %v1883 = vpop.f32.mrb[0].mxu0
        %1884 = vmatprep.mubr.bf16.mxu0 0
        %1885 = vmatmul.mubr.bf16.gmra.mrb[0].mxu0 %v1517
        %v1886 = vpop.f32.mrb[0].mxu0
        %v1887 = vadd.f32 0.0, %v1886
        %v1888 = vpop.f32.mrb[0].mxu0
        %v1889 = vpop.f32.mrb[0].mxu0
        %v1890 = vadd.f32 0.0, %v1889
        %v1891 = vpop.f32.mrb[0].mxu0
        %1892 = vmatprep.mubr.bf16.mxu0 0
        %1893 = vmatmul.mubr.bf16.gmra.mrb[0].mxu0 %v1520
        %v1894 = vpop.f32.mrb[0].mxu0
        %v1895 = vadd.f32 0.0, %v1894
        %v1896 = vpop.f32.mrb[0].mxu0
        %v1897 = vpop.f32.mrb[0].mxu0
        %v1898 = vadd.f32 0.0, %v1897
        %v1899 = vpop.f32.mrb[0].mxu0
        %1900 = vmatprep.mubr.bf16.mxu0 0
        %1901 = vmatmul.mubr.bf16.gmra.mrb[0].mxu0 %v1523
        %v1902 = vpop.f32.mrb[0].mxu0
        %v1903 = vadd.f32 0.0, %v1902
        %v1904 = vpop.f32.mrb[0].mxu0
        %v1905 = vpop.f32.mrb[0].mxu0
        %v1906 = vadd.f32 0.0, %v1905
        %v1907 = vpop.f32.mrb[0].mxu0
        %1908 = vmatprep.mubr.bf16.mxu0 0
        %1909 = vmatmul.mubr.bf16.gmra.mrb[0].mxu0 %v1751
        %v1910 = vpop.f32.mrb[0].mxu0
        %v1911 = vadd.f32 0.0, %v1910
        %v1912 = vpop.f32.mrb[0].mxu0
        %v1913 = vpop.f32.mrb[0].mxu0
        %v1914 = vadd.f32 0.0, %v1913
        %v1915 = vpop.f32.mrb[0].mxu0
        %1916 = vdwg.mxu0
        %v1917 = vadd.f32 %v1689, %v1791
        %v1918 = vadd.f32 %v1690, %v1794
        %v1919 = vadd.f32 %v1691, %v1799
        %v1920 = vadd.f32 %v1692, %v1802
        %v1921 = vadd.f32 %v1693, %v1807
        %v1922 = vadd.f32 %v1694, %v1810
        %v1923 = vadd.f32 %v1695, %v1815
        %v1924 = vadd.f32 %v1696, %v1818
        %v1925 = vadd.f32 %v1697, %v1823
        %v1926 = vadd.f32 %v1698, %v1826
        %v1927 = vadd.f32 %v1699, %v1831
        %v1928 = vadd.f32 %v1700, %v1834
        %v1929 = vadd.f32 %v1701, %v1839
        %v1930 = vadd.f32 %v1702, %v1842
        %v1931 = vadd.f32 %v1703, %v1847
        %v1932 = vadd.f32 %v1704, %v1850
        %v1933 = vadd.f32 %v1705, %v1855
        %v1934 = vadd.f32 %v1706, %v1858
        %v1935 = vadd.f32 %v1707, %v1863
        %v1936 = vadd.f32 %v1708, %v1866
        %v1937 = vadd.f32 %v1709, %v1871
        %v1938 = vadd.f32 %v1710, %v1874
        %v1939 = vadd.f32 %v1711, %v1879
        %v1940 = vadd.f32 %v1712, %v1882
        %v1941 = vadd.f32 %v1713, %v1887
        %v1942 = vadd.f32 %v1714, %v1890
        %v1943 = vadd.f32 %v1715, %v1895
        %v1944 = vadd.f32 %v1716, %v1898
        %v1945 = vadd.f32 %v1717, %v1903
        %v1946 = vadd.f32 %v1718, %v1906
        %v1947 = vadd.f32 %v1719, %v1911
        %v1948 = vadd.f32 %v1720, %v1914
        %v1950 = vshrl.u32 %v362, 16
        %v1952 = vrot.slane %v1950, 4
        %v1953 = vshll.u32 %v362, 16
        %v1955 = vrot.slane %v1953, 5
        %v1956 = vor.u32 %v1952, %v1955
        %v1957 = vrot.slane %v1956, 4
        %v1959 = vshll.u32 %v363, 16
        %v1961 = vrot.slane %v1959, 5
        %v1962 = vsel %vm1042, %v1957, %v1961
        %v1963 = vshrl.u32 %v363, 16
        %v1965 = vrot.slane %v1963, 4
        %v1966 = vor.u32 %v1965, %v1961
        %v1967 = vrot.slane %v1966, 4
        %v1969 = vshll.u32 %v364, 16
        %v1971 = vrot.slane %v1969, 5
        %v1972 = vsel %vm1042, %v1967, %v1971
        %s1973 = scalar_lea.vmem [#allocation7], 14
        %v1974 = vld [vmem:[%s1973] sm:$0x3]
        %v1975 = vunpack.c.l.b16 %v1962
        %v1976 = vunpack.c.l.b16 %v1972
        %v1977 = vpack.c.b16 %v1976, %v1975
        %v1979 = vsel %vm448, %v1977, 0
        %v1982 = vsel %vm497, %v1974, 0
        %1984 = vmatprep.subr.bf16.mxu0 0
        %1985 = vmatpush1.bf16.msra.mxu0 %v1982
        %1986 = vmatprep.subr.bf16.mxu0 0
        %1987 = vmatpush1.bf16.msra.mxu0 0
        %1988 = vmatprep.subr.bf16.mxu0 0
        %1989 = vmatpush1.bf16.msra.mxu0 0
        %1990 = vmatprep.subr.bf16.mxu0 0
        %1991 = vmatpush1.bf16.msra.mxu0 0
        %1992 = vmatprep.subr.bf16.mxu0 0
        %1993 = vmatpush1.bf16.msra.mxu0 0
        %1994 = vmatprep.subr.bf16.mxu0 0
        %1995 = vmatpush1.bf16.msra.mxu0 0
        %1996 = vmatprep.subr.bf16.mxu0 0
        %1997 = vmatpush1.bf16.msra.mxu0 0
        %1998 = vmatprep.subr.bf16.mxu0 0
        %1999 = vmatpush1.bf16.msra.mxu0 0
        %2000 = vmatprep.subr.bf16.mxu0 0
        %2001 = vmatpush1.bf16.msra.mxu0 0
        %2002 = vmatprep.subr.bf16.mxu0 0
        %2003 = vmatpush1.bf16.msra.mxu0 0
        %2004 = vmatprep.subr.bf16.mxu0 0
        %2005 = vmatpush1.bf16.msra.mxu0 0
        %2006 = vmatprep.subr.bf16.mxu0 0
        %2007 = vmatpush1.bf16.msra.mxu0 0
        %2008 = vmatprep.subr.bf16.mxu0 0
        %2009 = vmatpush1.bf16.msra.mxu0 0
        %2010 = vmatprep.subr.bf16.mxu0 0
        %2011 = vmatpush1.bf16.msra.mxu0 0
        %2012 = vmatprep.subr.bf16.mxu0 0
        %2013 = vmatpush1.bf16.msra.mxu0 0
        %2014 = vmatprep.subr.bf16.mxu0 0
        %2015 = vmatpush1.bf16.msra.mxu0 0
        %2016 = vmatprep.mubr.bf16.mxu0 0
        %2017 = vmatmul.mubr.bf16.gmra.mrb[0].mxu0 %v1484
        %v2018 = vpop.f32.mrb[0].mxu0
        %v2019 = vadd.f32 0.0, %v2018
        %v2020 = vpop.f32.mrb[0].mxu0
        %v2021 = vpop.f32.mrb[0].mxu0
        %v2022 = vadd.f32 0.0, %v2021
        %v2023 = vpop.f32.mrb[0].mxu0
        %2024 = vmatprep.mubr.bf16.mxu0 0
        %2025 = vmatmul.mubr.bf16.gmra.mrb[0].mxu0 %v1487
        %v2026 = vpop.f32.mrb[0].mxu0
        %v2027 = vadd.f32 0.0, %v2026
        %v2028 = vpop.f32.mrb[0].mxu0
        %v2029 = vpop.f32.mrb[0].mxu0
        %v2030 = vadd.f32 0.0, %v2029
        %v2031 = vpop.f32.mrb[0].mxu0
        %2032 = vmatprep.mubr.bf16.mxu0 0
        %2033 = vmatmul.mubr.bf16.gmra.mrb[0].mxu0 %v1490
        %v2034 = vpop.f32.mrb[0].mxu0
        %v2035 = vadd.f32 0.0, %v2034
        %v2036 = vpop.f32.mrb[0].mxu0
        %v2037 = vpop.f32.mrb[0].mxu0
        %v2038 = vadd.f32 0.0, %v2037
        %v2039 = vpop.f32.mrb[0].mxu0
        %2040 = vmatprep.mubr.bf16.mxu0 0
        %2041 = vmatmul.mubr.bf16.gmra.mrb[0].mxu0 %v1493
        %v2042 = vpop.f32.mrb[0].mxu0
        %v2043 = vadd.f32 0.0, %v2042
        %v2044 = vpop.f32.mrb[0].mxu0
        %v2045 = vpop.f32.mrb[0].mxu0
        %v2046 = vadd.f32 0.0, %v2045
        %v2047 = vpop.f32.mrb[0].mxu0
        %2048 = vmatprep.mubr.bf16.mxu0 0
        %2049 = vmatmul.mubr.bf16.gmra.mrb[0].mxu0 %v1496
        %v2050 = vpop.f32.mrb[0].mxu0
        %v2051 = vadd.f32 0.0, %v2050
        %v2052 = vpop.f32.mrb[0].mxu0
        %v2053 = vpop.f32.mrb[0].mxu0
        %v2054 = vadd.f32 0.0, %v2053
        %v2055 = vpop.f32.mrb[0].mxu0
        %2056 = vmatprep.mubr.bf16.mxu0 0
        %2057 = vmatmul.mubr.bf16.gmra.mrb[0].mxu0 %v1499
        %v2058 = vpop.f32.mrb[0].mxu0
        %v2059 = vadd.f32 0.0, %v2058
        %v2060 = vpop.f32.mrb[0].mxu0
        %v2061 = vpop.f32.mrb[0].mxu0
        %v2062 = vadd.f32 0.0, %v2061
        %v2063 = vpop.f32.mrb[0].mxu0
        %2064 = vmatprep.mubr.bf16.mxu0 0
        %2065 = vmatmul.mubr.bf16.gmra.mrb[0].mxu0 %v1502
        %v2066 = vpop.f32.mrb[0].mxu0
        %v2067 = vadd.f32 0.0, %v2066
        %v2068 = vpop.f32.mrb[0].mxu0
        %v2069 = vpop.f32.mrb[0].mxu0
        %v2070 = vadd.f32 0.0, %v2069
        %v2071 = vpop.f32.mrb[0].mxu0
        %2072 = vmatprep.mubr.bf16.mxu0 0
        %2073 = vmatmul.mubr.bf16.gmra.mrb[0].mxu0 %v1505
        %v2074 = vpop.f32.mrb[0].mxu0
        %v2075 = vadd.f32 0.0, %v2074
        %v2076 = vpop.f32.mrb[0].mxu0
        %v2077 = vpop.f32.mrb[0].mxu0
        %v2078 = vadd.f32 0.0, %v2077
        %v2079 = vpop.f32.mrb[0].mxu0
        %2080 = vmatprep.mubr.bf16.mxu0 0
        %2081 = vmatmul.mubr.bf16.gmra.mrb[0].mxu0 %v1508
        %v2082 = vpop.f32.mrb[0].mxu0
        %v2083 = vadd.f32 0.0, %v2082
        %v2084 = vpop.f32.mrb[0].mxu0
        %v2085 = vpop.f32.mrb[0].mxu0
        %v2086 = vadd.f32 0.0, %v2085
        %v2087 = vpop.f32.mrb[0].mxu0
        %2088 = vmatprep.mubr.bf16.mxu0 0
        %2089 = vmatmul.mubr.bf16.gmra.mrb[0].mxu0 %v1511
        %v2090 = vpop.f32.mrb[0].mxu0
        %v2091 = vadd.f32 0.0, %v2090
        %v2092 = vpop.f32.mrb[0].mxu0
        %v2093 = vpop.f32.mrb[0].mxu0
        %v2094 = vadd.f32 0.0, %v2093
        %v2095 = vpop.f32.mrb[0].mxu0
        %2096 = vmatprep.mubr.bf16.mxu0 0
        %2097 = vmatmul.mubr.bf16.gmra.mrb[0].mxu0 %v1514
        %v2098 = vpop.f32.mrb[0].mxu0
        %v2099 = vadd.f32 0.0, %v2098
        %v2100 = vpop.f32.mrb[0].mxu0
        %v2101 = vpop.f32.mrb[0].mxu0
        %v2102 = vadd.f32 0.0, %v2101
        %v2103 = vpop.f32.mrb[0].mxu0
        %2104 = vmatprep.mubr.bf16.mxu0 0
        %2105 = vmatmul.mubr.bf16.gmra.mrb[0].mxu0 %v1517
        %v2106 = vpop.f32.mrb[0].mxu0
        %v2107 = vadd.f32 0.0, %v2106
        %v2108 = vpop.f32.mrb[0].mxu0
        %v2109 = vpop.f32.mrb[0].mxu0
        %v2110 = vadd.f32 0.0, %v2109
        %v2111 = vpop.f32.mrb[0].mxu0
        %2112 = vmatprep.mubr.bf16.mxu0 0
        %2113 = vmatmul.mubr.bf16.gmra.mrb[0].mxu0 %v1520
        %v2114 = vpop.f32.mrb[0].mxu0
        %v2115 = vadd.f32 0.0, %v2114
        %v2116 = vpop.f32.mrb[0].mxu0
        %v2117 = vpop.f32.mrb[0].mxu0
        %v2118 = vadd.f32 0.0, %v2117
        %v2119 = vpop.f32.mrb[0].mxu0
        %2120 = vmatprep.mubr.bf16.mxu0 0
        %2121 = vmatmul.mubr.bf16.gmra.mrb[0].mxu0 %v1523
        %v2122 = vpop.f32.mrb[0].mxu0
        %v2123 = vadd.f32 0.0, %v2122
        %v2124 = vpop.f32.mrb[0].mxu0
        %v2125 = vpop.f32.mrb[0].mxu0
        %v2126 = vadd.f32 0.0, %v2125
        %v2127 = vpop.f32.mrb[0].mxu0
        %2128 = vmatprep.mubr.bf16.mxu0 0
        %2129 = vmatmul.mubr.bf16.gmra.mrb[0].mxu0 %v1751
        %v2130 = vpop.f32.mrb[0].mxu0
        %v2131 = vadd.f32 0.0, %v2130
        %v2132 = vpop.f32.mrb[0].mxu0
        %v2133 = vpop.f32.mrb[0].mxu0
        %v2134 = vadd.f32 0.0, %v2133
        %v2135 = vpop.f32.mrb[0].mxu0
        %2136 = vmatprep.mubr.bf16.mxu0 0
        %2137 = vmatmul.mubr.bf16.gmra.mrb[0].mxu0 %v1979
        %v2138 = vpop.f32.mrb[0].mxu0
        %v2139 = vadd.f32 0.0, %v2138
        %v2140 = vpop.f32.mrb[0].mxu0
        %v2141 = vpop.f32.mrb[0].mxu0
        %v2142 = vadd.f32 0.0, %v2141
        %v2143 = vpop.f32.mrb[0].mxu0
        %2144 = vdwg.mxu0
        %v2145 = vadd.f32 %v1917, %v2019
        %v2146 = vadd.f32 %v1918, %v2022
        %v2147 = vadd.f32 %v1919, %v2027
        %v2148 = vadd.f32 %v1920, %v2030
        %v2149 = vadd.f32 %v1921, %v2035
        %v2150 = vadd.f32 %v1922, %v2038
        %v2151 = vadd.f32 %v1923, %v2043
        %v2152 = vadd.f32 %v1924, %v2046
        %v2153 = vadd.f32 %v1925, %v2051
        %v2154 = vadd.f32 %v1926, %v2054
        %v2155 = vadd.f32 %v1927, %v2059
        %v2156 = vadd.f32 %v1928, %v2062
        %v2157 = vadd.f32 %v1929, %v2067
        %v2158 = vadd.f32 %v1930, %v2070
        %v2159 = vadd.f32 %v1931, %v2075
        %v2160 = vadd.f32 %v1932, %v2078
        %v2161 = vadd.f32 %v1933, %v2083
        %v2162 = vadd.f32 %v1934, %v2086
        %v2163 = vadd.f32 %v1935, %v2091
        %v2164 = vadd.f32 %v1936, %v2094
        %v2165 = vadd.f32 %v1937, %v2099
        %v2166 = vadd.f32 %v1938, %v2102
        %v2167 = vadd.f32 %v1939, %v2107
        %v2168 = vadd.f32 %v1940, %v2110
        %v2169 = vadd.f32 %v1941, %v2115
        %v2170 = vadd.f32 %v1942, %v2118
        %v2171 = vadd.f32 %v1943, %v2123
        %v2172 = vadd.f32 %v1944, %v2126
        %v2173 = vadd.f32 %v1945, %v2131
        %v2174 = vadd.f32 %v1946, %v2134
        %v2175 = vadd.f32 %v1947, %v2139
        %v2176 = vadd.f32 %v1948, %v2142
        %vm2193 = vcmask 1042432
        %vm2194 = vcmask 1046532
        %vm2195 = vmor %vm2193, %vm2194
        %v2196 = vrot.slane %v311, 5
        %v2197 = vrot.slane %v2196, 4
        %v2198 = vrot.slane %v312, 5
        %v2199 = vsel %vm2195, %v2197, %v2198
        %v2200 = vrot.slane %v2198, 4
        %v2201 = vrot.slane %v313, 5
        %v2202 = vsel %vm2195, %v2200, %v2201
        %v2203 = vrot.slane %v314, 5
        %v2204 = vrot.slane %v2203, 4
        %v2205 = vrot.slane %v315, 5
        %v2206 = vsel %vm2195, %v2204, %v2205
        %v2207 = vrot.slane %v2205, 4
        %v2208 = vrot.slane %v316, 5
        %v2209 = vsel %vm2195, %v2207, %v2208
        %v2210 = vrot.slane %v317, 5
        %v2211 = vrot.slane %v2210, 4
        %v2212 = vrot.slane %v318, 5
        %v2213 = vsel %vm2195, %v2211, %v2212
        %v2214 = vrot.slane %v2212, 4
        %v2215 = vrot.slane %v319, 5
        %v2216 = vsel %vm2195, %v2214, %v2215
        %v2217 = vrot.slane %v320, 5
        %v2218 = vrot.slane %v2217, 4
        %v2219 = vrot.slane %v321, 5
        %v2220 = vsel %vm2195, %v2218, %v2219
        %v2221 = vrot.slane %v2219, 4
        %v2222 = vrot.slane %v322, 5
        %v2223 = vsel %vm2195, %v2221, %v2222
        %v2224 = vrot.slane %v323, 5
        %v2225 = vrot.slane %v2224, 4
        %v2226 = vrot.slane %v324, 5
        %v2227 = vsel %vm2195, %v2225, %v2226
        %v2228 = vrot.slane %v2226, 4
        %v2229 = vrot.slane %v325, 5
        %v2230 = vsel %vm2195, %v2228, %v2229
        %v2231 = vrot.slane %v326, 5
        %v2232 = vrot.slane %v2231, 4
        %v2233 = vrot.slane %v327, 5
        %v2234 = vsel %vm2195, %v2232, %v2233
        %v2235 = vrot.slane %v2233, 4
        %v2236 = vrot.slane %v328, 5
        %v2237 = vsel %vm2195, %v2235, %v2236
        %v2238 = vrot.slane %v329, 5
        %v2239 = vrot.slane %v2238, 4
        %v2240 = vrot.slane %v330, 5
        %v2241 = vsel %vm2195, %v2239, %v2240
        %v2242 = vrot.slane %v2240, 4
        %v2243 = vrot.slane %v331, 5
        %v2244 = vsel %vm2195, %v2242, %v2243
        %v2245 = vrot.slane %v332, 5
        %v2246 = vrot.slane %v2245, 4
        %v2247 = vrot.slane %v333, 5
        %v2248 = vsel %vm2195, %v2246, %v2247
        %v2249 = vrot.slane %v2247, 4
        %v2250 = vrot.slane %v334, 5
        %v2251 = vsel %vm2195, %v2249, %v2250
        %v2252 = vrot.slane %v335, 5
        %v2253 = vrot.slane %v2252, 4
        %v2254 = vrot.slane %v336, 5
        %v2255 = vsel %vm2195, %v2253, %v2254
        %v2256 = vrot.slane %v2254, 4
        %v2257 = vrot.slane %v337, 5
        %v2258 = vsel %vm2195, %v2256, %v2257
        %v2259 = vrot.slane %v338, 5
        %v2260 = vrot.slane %v2259, 4
        %v2261 = vrot.slane %v339, 5
        %v2262 = vsel %vm2195, %v2260, %v2261
        %v2263 = vrot.slane %v2261, 4
        %v2264 = vrot.slane %v340, 5
        %v2265 = vsel %vm2195, %v2263, %v2264
        %v2266 = vrot.slane %v341, 5
        %v2267 = vrot.slane %v2266, 4
        %v2268 = vrot.slane %v342, 5
        %v2269 = vsel %vm2195, %v2267, %v2268
        %v2270 = vrot.slane %v2268, 4
        %v2271 = vrot.slane %v343, 5
        %v2272 = vsel %vm2195, %v2270, %v2271
        %v2273 = vrot.slane %v344, 5
        %v2274 = vrot.slane %v2273, 4
        %v2275 = vrot.slane %v345, 5
        %v2276 = vsel %vm2195, %v2274, %v2275
        %v2277 = vrot.slane %v2275, 4
        %v2278 = vrot.slane %v346, 5
        %v2279 = vsel %vm2195, %v2277, %v2278
        %v2280 = vrot.slane %v347, 5
        %v2281 = vrot.slane %v2280, 4
        %v2282 = vrot.slane %v348, 5
        %v2283 = vsel %vm2195, %v2281, %v2282
        %v2284 = vrot.slane %v2282, 4
        %v2285 = vrot.slane %v349, 5
        %v2286 = vsel %vm2195, %v2284, %v2285
        %v2287 = vrot.slane %v350, 5
        %v2288 = vrot.slane %v2287, 4
        %v2289 = vrot.slane %v351, 5
        %v2290 = vsel %vm2195, %v2288, %v2289
        %v2291 = vrot.slane %v2289, 4
        %v2292 = vrot.slane %v352, 5
        %v2293 = vsel %vm2195, %v2291, %v2292
        %v2294 = vrot.slane %v353, 5
        %v2295 = vrot.slane %v2294, 4
        %v2296 = vrot.slane %v354, 5
        %v2297 = vsel %vm2195, %v2295, %v2296
        %v2298 = vrot.slane %v2296, 4
        %v2299 = vrot.slane %v355, 5
        %v2300 = vsel %vm2195, %v2298, %v2299
        %v2301 = vrot.slane %v356, 5
        %v2302 = vrot.slane %v2301, 4
        %v2303 = vrot.slane %v357, 5
        %v2304 = vsel %vm2195, %v2302, %v2303
        %v2305 = vrot.slane %v2303, 4
        %v2306 = vrot.slane %v358, 5
        %v2307 = vsel %vm2195, %v2305, %v2306
        %s2308 = scalar_lea.vmem [#allocation7], 4
        %v2309 = vld [vmem:[%s2308] sm:$0x3]
        %v2310 = vunpack.c.l.b16 %v2199
        %v2311 = vunpack.c.l.b16 %v2202
        %v2312 = vunpack.c.l.b16 %v2206
        %v2313 = vunpack.c.l.b16 %v2209
        %v2314 = vunpack.c.l.b16 %v2213
        %v2315 = vunpack.c.l.b16 %v2216
        %v2316 = vunpack.c.l.b16 %v2220
        %v2317 = vunpack.c.l.b16 %v2223
        %v2318 = vunpack.c.l.b16 %v2227
        %v2319 = vunpack.c.l.b16 %v2230
        %v2320 = vunpack.c.l.b16 %v2234
        %v2321 = vunpack.c.l.b16 %v2237
        %v2322 = vunpack.c.l.b16 %v2241
        %v2323 = vunpack.c.l.b16 %v2244
        %v2324 = vunpack.c.l.b16 %v2248
        %v2325 = vunpack.c.l.b16 %v2251
        %v2326 = vunpack.c.l.b16 %v2255
        %v2327 = vunpack.c.l.b16 %v2258
        %v2328 = vunpack.c.l.b16 %v2262
        %v2329 = vunpack.c.l.b16 %v2265
        %v2330 = vunpack.c.l.b16 %v2269
        %v2331 = vunpack.c.l.b16 %v2272
        %v2332 = vunpack.c.l.b16 %v2276
        %v2333 = vunpack.c.l.b16 %v2279
        %v2334 = vunpack.c.l.b16 %v2283
        %v2335 = vunpack.c.l.b16 %v2286
        %v2336 = vunpack.c.l.b16 %v2290
        %v2337 = vunpack.c.l.b16 %v2293
        %v2338 = vunpack.c.l.b16 %v2297
        %v2339 = vunpack.c.l.b16 %v2300
        %v2340 = vunpack.c.l.b16 %v2304
        %v2341 = vunpack.c.l.b16 %v2307
        %v2342 = vpack.c.b16 %v2311, %v2310
        %v2343 = vpack.c.b16 %v2313, %v2312
        %v2344 = vpack.c.b16 %v2315, %v2314
        %v2345 = vpack.c.b16 %v2317, %v2316
        %v2346 = vpack.c.b16 %v2319, %v2318
        %v2347 = vpack.c.b16 %v2321, %v2320
        %v2348 = vpack.c.b16 %v2323, %v2322
        %v2349 = vpack.c.b16 %v2325, %v2324
        %v2350 = vpack.c.b16 %v2327, %v2326
        %v2351 = vpack.c.b16 %v2329, %v2328
        %v2352 = vpack.c.b16 %v2331, %v2330
        %v2353 = vpack.c.b16 %v2333, %v2332
        %v2354 = vpack.c.b16 %v2335, %v2334
        %v2355 = vpack.c.b16 %v2337, %v2336
        %v2356 = vpack.c.b16 %v2339, %v2338
        %v2357 = vpack.c.b16 %v2341, %v2340
        %v2359 = vsel %vm448, %v2342, 0
        %v2362 = vsel %vm448, %v2343, 0
        %v2365 = vsel %vm448, %v2344, 0
        %v2368 = vsel %vm448, %v2345, 0
        %v2371 = vsel %vm448, %v2346, 0
        %v2374 = vsel %vm448, %v2347, 0
        %v2377 = vsel %vm448, %v2348, 0
        %v2380 = vsel %vm448, %v2349, 0
        %v2383 = vsel %vm448, %v2350, 0
        %v2386 = vsel %vm448, %v2351, 0
        %v2389 = vsel %vm448, %v2352, 0
        %v2392 = vsel %vm448, %v2353, 0
        %v2395 = vsel %vm448, %v2354, 0
        %v2398 = vsel %vm448, %v2355, 0
        %v2401 = vsel %vm448, %v2356, 0
        %v2404 = vsel %vm448, %v2357, 0
        %v2407 = vsel %vm497, %v2309, 0
        %2409 = vmatprep.subr.bf16.mxu0 0
        %2410 = vmatpush1.bf16.msra.mxu0 %v2407
        %2411 = vmatprep.subr.bf16.mxu0 0
        %2412 = vmatpush1.bf16.msra.mxu0 0
        %2413 = vmatprep.subr.bf16.mxu0 0
        %2414 = vmatpush1.bf16.msra.mxu0 0
        %2415 = vmatprep.subr.bf16.mxu0 0
        %2416 = vmatpush1.bf16.msra.mxu0 0
        %2417 = vmatprep.subr.bf16.mxu0 0
        %2418 = vmatpush1.bf16.msra.mxu0 0
        %2419 = vmatprep.subr.bf16.mxu0 0
        %2420 = vmatpush1.bf16.msra.mxu0 0
        %2421 = vmatprep.subr.bf16.mxu0 0
        %2422 = vmatpush1.bf16.msra.mxu0 0
        %2423 = vmatprep.subr.bf16.mxu0 0
        %2424 = vmatpush1.bf16.msra.mxu0 0
        %2425 = vmatprep.subr.bf16.mxu0 0
        %2426 = vmatpush1.bf16.msra.mxu0 0
        %2427 = vmatprep.subr.bf16.mxu0 0
        %2428 = vmatpush1.bf16.msra.mxu0 0
        %2429 = vmatprep.subr.bf16.mxu0 0
        %2430 = vmatpush1.bf16.msra.mxu0 0
        %2431 = vmatprep.subr.bf16.mxu0 0
        %2432 = vmatpush1.bf16.msra.mxu0 0
        %2433 = vmatprep.subr.bf16.mxu0 0
        %2434 = vmatpush1.bf16.msra.mxu0 0
        %2435 = vmatprep.subr.bf16.mxu0 0
        %2436 = vmatpush1.bf16.msra.mxu0 0
        %2437 = vmatprep.subr.bf16.mxu0 0
        %2438 = vmatpush1.bf16.msra.mxu0 0
        %2439 = vmatprep.subr.bf16.mxu0 0
        %2440 = vmatpush1.bf16.msra.mxu0 0
        %2441 = vmatprep.mubr.bf16.mxu0 0
        %2442 = vmatmul.mubr.bf16.gmra.mrb[0].mxu0 %v2359
        %v2443 = vpop.f32.mrb[0].mxu0
        %v2444 = vadd.f32 0.0, %v2443
        %v2445 = vpop.f32.mrb[0].mxu0
        %v2446 = vpop.f32.mrb[0].mxu0
        %v2447 = vadd.f32 0.0, %v2446
        %v2448 = vpop.f32.mrb[0].mxu0
        %2449 = vmatprep.mubr.bf16.mxu0 0
        %2450 = vmatmul.mubr.bf16.gmra.mrb[0].mxu0 %v2362
        %v2451 = vpop.f32.mrb[0].mxu0
        %v2452 = vadd.f32 0.0, %v2451
        %v2453 = vpop.f32.mrb[0].mxu0
        %v2454 = vpop.f32.mrb[0].mxu0
        %v2455 = vadd.f32 0.0, %v2454
        %v2456 = vpop.f32.mrb[0].mxu0
        %2457 = vmatprep.mubr.bf16.mxu0 0
        %2458 = vmatmul.mubr.bf16.gmra.mrb[0].mxu0 %v2365
        %v2459 = vpop.f32.mrb[0].mxu0
        %v2460 = vadd.f32 0.0, %v2459
        %v2461 = vpop.f32.mrb[0].mxu0
        %v2462 = vpop.f32.mrb[0].mxu0
        %v2463 = vadd.f32 0.0, %v2462
        %v2464 = vpop.f32.mrb[0].mxu0
        %2465 = vmatprep.mubr.bf16.mxu0 0
        %2466 = vmatmul.mubr.bf16.gmra.mrb[0].mxu0 %v2368
        %v2467 = vpop.f32.mrb[0].mxu0
        %v2468 = vadd.f32 0.0, %v2467
        %v2469 = vpop.f32.mrb[0].mxu0
        %v2470 = vpop.f32.mrb[0].mxu0
        %v2471 = vadd.f32 0.0, %v2470
        %v2472 = vpop.f32.mrb[0].mxu0
        %2473 = vmatprep.mubr.bf16.mxu0 0
        %2474 = vmatmul.mubr.bf16.gmra.mrb[0].mxu0 %v2371
        %v2475 = vpop.f32.mrb[0].mxu0
        %v2476 = vadd.f32 0.0, %v2475
        %v2477 = vpop.f32.mrb[0].mxu0
        %v2478 = vpop.f32.mrb[0].mxu0
        %v2479 = vadd.f32 0.0, %v2478
        %v2480 = vpop.f32.mrb[0].mxu0
        %2481 = vmatprep.mubr.bf16.mxu0 0
        %2482 = vmatmul.mubr.bf16.gmra.mrb[0].mxu0 %v2374
        %v2483 = vpop.f32.mrb[0].mxu0
        %v2484 = vadd.f32 0.0, %v2483
        %v2485 = vpop.f32.mrb[0].mxu0
        %v2486 = vpop.f32.mrb[0].mxu0
        %v2487 = vadd.f32 0.0, %v2486
        %v2488 = vpop.f32.mrb[0].mxu0
        %2489 = vmatprep.mubr.bf16.mxu0 0
        %2490 = vmatmul.mubr.bf16.gmra.mrb[0].mxu0 %v2377
        %v2491 = vpop.f32.mrb[0].mxu0
        %v2492 = vadd.f32 0.0, %v2491
        %v2493 = vpop.f32.mrb[0].mxu0
        %v2494 = vpop.f32.mrb[0].mxu0
        %v2495 = vadd.f32 0.0, %v2494
        %v2496 = vpop.f32.mrb[0].mxu0
        %2497 = vmatprep.mubr.bf16.mxu0 0
        %2498 = vmatmul.mubr.bf16.gmra.mrb[0].mxu0 %v2380
        %v2499 = vpop.f32.mrb[0].mxu0
        %v2500 = vadd.f32 0.0, %v2499
        %v2501 = vpop.f32.mrb[0].mxu0
        %v2502 = vpop.f32.mrb[0].mxu0
        %v2503 = vadd.f32 0.0, %v2502
        %v2504 = vpop.f32.mrb[0].mxu0
        %2505 = vmatprep.mubr.bf16.mxu0 0
        %2506 = vmatmul.mubr.bf16.gmra.mrb[0].mxu0 %v2383
        %v2507 = vpop.f32.mrb[0].mxu0
        %v2508 = vadd.f32 0.0, %v2507
        %v2509 = vpop.f32.mrb[0].mxu0
        %v2510 = vpop.f32.mrb[0].mxu0
        %v2511 = vadd.f32 0.0, %v2510
        %v2512 = vpop.f32.mrb[0].mxu0
        %2513 = vmatprep.mubr.bf16.mxu0 0
        %2514 = vmatmul.mubr.bf16.gmra.mrb[0].mxu0 %v2386
        %v2515 = vpop.f32.mrb[0].mxu0
        %v2516 = vadd.f32 0.0, %v2515
        %v2517 = vpop.f32.mrb[0].mxu0
        %v2518 = vpop.f32.mrb[0].mxu0
        %v2519 = vadd.f32 0.0, %v2518
        %v2520 = vpop.f32.mrb[0].mxu0
        %2521 = vmatprep.mubr.bf16.mxu0 0
        %2522 = vmatmul.mubr.bf16.gmra.mrb[0].mxu0 %v2389
        %v2523 = vpop.f32.mrb[0].mxu0
        %v2524 = vadd.f32 0.0, %v2523
        %v2525 = vpop.f32.mrb[0].mxu0
        %v2526 = vpop.f32.mrb[0].mxu0
        %v2527 = vadd.f32 0.0, %v2526
        %v2528 = vpop.f32.mrb[0].mxu0
        %2529 = vmatprep.mubr.bf16.mxu0 0
        %2530 = vmatmul.mubr.bf16.gmra.mrb[0].mxu0 %v2392
        %v2531 = vpop.f32.mrb[0].mxu0
        %v2532 = vadd.f32 0.0, %v2531
        %v2533 = vpop.f32.mrb[0].mxu0
        %v2534 = vpop.f32.mrb[0].mxu0
        %v2535 = vadd.f32 0.0, %v2534
        %v2536 = vpop.f32.mrb[0].mxu0
        %2537 = vmatprep.mubr.bf16.mxu0 0
        %2538 = vmatmul.mubr.bf16.gmra.mrb[0].mxu0 %v2395
        %v2539 = vpop.f32.mrb[0].mxu0
        %v2540 = vadd.f32 0.0, %v2539
        %v2541 = vpop.f32.mrb[0].mxu0
        %v2542 = vpop.f32.mrb[0].mxu0
        %v2543 = vadd.f32 0.0, %v2542
        %v2544 = vpop.f32.mrb[0].mxu0
        %2545 = vmatprep.mubr.bf16.mxu0 0
        %2546 = vmatmul.mubr.bf16.gmra.mrb[0].mxu0 %v2398
        %v2547 = vpop.f32.mrb[0].mxu0
        %v2548 = vadd.f32 0.0, %v2547
        %v2549 = vpop.f32.mrb[0].mxu0
        %v2550 = vpop.f32.mrb[0].mxu0
        %v2551 = vadd.f32 0.0, %v2550
        %v2552 = vpop.f32.mrb[0].mxu0
        %2553 = vmatprep.mubr.bf16.mxu0 0
        %2554 = vmatmul.mubr.bf16.gmra.mrb[0].mxu0 %v2401
        %v2555 = vpop.f32.mrb[0].mxu0
        %v2556 = vadd.f32 0.0, %v2555
        %v2557 = vpop.f32.mrb[0].mxu0
        %v2558 = vpop.f32.mrb[0].mxu0
        %v2559 = vadd.f32 0.0, %v2558
        %v2560 = vpop.f32.mrb[0].mxu0
        %2561 = vmatprep.mubr.bf16.mxu0 0
        %2562 = vmatmul.mubr.bf16.gmra.mrb[0].mxu0 %v2404
        %v2563 = vpop.f32.mrb[0].mxu0
        %v2564 = vadd.f32 0.0, %v2563
        %v2565 = vpop.f32.mrb[0].mxu0
        %v2566 = vpop.f32.mrb[0].mxu0
        %v2567 = vadd.f32 0.0, %v2566
        %v2568 = vpop.f32.mrb[0].mxu0
        %2569 = vdwg.mxu0
        %v2570 = vadd.f32 %v2145, %v2444
        %v2571 = vadd.f32 %v2146, %v2447
        %v2572 = vadd.f32 %v2147, %v2452
        %v2573 = vadd.f32 %v2148, %v2455
        %v2574 = vadd.f32 %v2149, %v2460
        %v2575 = vadd.f32 %v2150, %v2463
        %v2576 = vadd.f32 %v2151, %v2468
        %v2577 = vadd.f32 %v2152, %v2471
        %v2578 = vadd.f32 %v2153, %v2476
        %v2579 = vadd.f32 %v2154, %v2479
        %v2580 = vadd.f32 %v2155, %v2484
        %v2581 = vadd.f32 %v2156, %v2487
        %v2582 = vadd.f32 %v2157, %v2492
        %v2583 = vadd.f32 %v2158, %v2495
        %v2584 = vadd.f32 %v2159, %v2500
        %v2585 = vadd.f32 %v2160, %v2503
        %v2586 = vadd.f32 %v2161, %v2508
        %v2587 = vadd.f32 %v2162, %v2511
        %v2588 = vadd.f32 %v2163, %v2516
        %v2589 = vadd.f32 %v2164, %v2519
        %v2590 = vadd.f32 %v2165, %v2524
        %v2591 = vadd.f32 %v2166, %v2527
        %v2592 = vadd.f32 %v2167, %v2532
        %v2593 = vadd.f32 %v2168, %v2535
        %v2594 = vadd.f32 %v2169, %v2540
        %v2595 = vadd.f32 %v2170, %v2543
        %v2596 = vadd.f32 %v2171, %v2548
        %v2597 = vadd.f32 %v2172, %v2551
        %v2598 = vadd.f32 %v2173, %v2556
        %v2599 = vadd.f32 %v2174, %v2559
        %v2600 = vadd.f32 %v2175, %v2564
        %v2601 = vadd.f32 %v2176, %v2567
        %v2603 = vrot.slane %v359, 5
        %v2604 = vrot.slane %v2603, 4
        %v2605 = vrot.slane %v360, 5
        %v2606 = vsel %vm2195, %v2604, %v2605
        %v2607 = vrot.slane %v2605, 4
        %v2608 = vrot.slane %v361, 5
        %v2609 = vsel %vm2195, %v2607, %v2608
        %s2610 = scalar_lea.vmem [#allocation7], 10
        %v2611 = vld [vmem:[%s2610] sm:$0x3]
        %v2612 = vunpack.c.l.b16 %v2606
        %v2613 = vunpack.c.l.b16 %v2609
        %v2614 = vpack.c.b16 %v2613, %v2612
        %v2616 = vsel %vm448, %v2614, 0
        %v2619 = vsel %vm497, %v2611, 0
        %2621 = vmatprep.subr.bf16.mxu0 0
        %2622 = vmatpush1.bf16.msra.mxu0 %v2619
        %2623 = vmatprep.subr.bf16.mxu0 0
        %2624 = vmatpush1.bf16.msra.mxu0 0
        %2625 = vmatprep.subr.bf16.mxu0 0
        %2626 = vmatpush1.bf16.msra.mxu0 0
        %2627 = vmatprep.subr.bf16.mxu0 0
        %2628 = vmatpush1.bf16.msra.mxu0 0
        %2629 = vmatprep.subr.bf16.mxu0 0
        %2630 = vmatpush1.bf16.msra.mxu0 0
        %2631 = vmatprep.subr.bf16.mxu0 0
        %2632 = vmatpush1.bf16.msra.mxu0 0
        %2633 = vmatprep.subr.bf16.mxu0 0
        %2634 = vmatpush1.bf16.msra.mxu0 0
        %2635 = vmatprep.subr.bf16.mxu0 0
        %2636 = vmatpush1.bf16.msra.mxu0 0
        %2637 = vmatprep.subr.bf16.mxu0 0
        %2638 = vmatpush1.bf16.msra.mxu0 0
        %2639 = vmatprep.subr.bf16.mxu0 0
        %2640 = vmatpush1.bf16.msra.mxu0 0
        %2641 = vmatprep.subr.bf16.mxu0 0
        %2642 = vmatpush1.bf16.msra.mxu0 0
        %2643 = vmatprep.subr.bf16.mxu0 0
        %2644 = vmatpush1.bf16.msra.mxu0 0
        %2645 = vmatprep.subr.bf16.mxu0 0
        %2646 = vmatpush1.bf16.msra.mxu0 0
        %2647 = vmatprep.subr.bf16.mxu0 0
        %2648 = vmatpush1.bf16.msra.mxu0 0
        %2649 = vmatprep.subr.bf16.mxu0 0
        %2650 = vmatpush1.bf16.msra.mxu0 0
        %2651 = vmatprep.subr.bf16.mxu0 0
        %2652 = vmatpush1.bf16.msra.mxu0 0
        %2653 = vmatprep.mubr.bf16.mxu0 0
        %2654 = vmatmul.mubr.bf16.gmra.mrb[0].mxu0 %v2362
        %v2655 = vpop.f32.mrb[0].mxu0
        %v2656 = vadd.f32 0.0, %v2655
        %v2657 = vpop.f32.mrb[0].mxu0
        %v2658 = vpop.f32.mrb[0].mxu0
        %v2659 = vadd.f32 0.0, %v2658
        %v2660 = vpop.f32.mrb[0].mxu0
        %2661 = vmatprep.mubr.bf16.mxu0 0
        %2662 = vmatmul.mubr.bf16.gmra.mrb[0].mxu0 %v2365
        %v2663 = vpop.f32.mrb[0].mxu0
        %v2664 = vadd.f32 0.0, %v2663
        %v2665 = vpop.f32.mrb[0].mxu0
        %v2666 = vpop.f32.mrb[0].mxu0
        %v2667 = vadd.f32 0.0, %v2666
        %v2668 = vpop.f32.mrb[0].mxu0
        %2669 = vmatprep.mubr.bf16.mxu0 0
        %2670 = vmatmul.mubr.bf16.gmra.mrb[0].mxu0 %v2368
        %v2671 = vpop.f32.mrb[0].mxu0
        %v2672 = vadd.f32 0.0, %v2671
        %v2673 = vpop.f32.mrb[0].mxu0
        %v2674 = vpop.f32.mrb[0].mxu0
        %v2675 = vadd.f32 0.0, %v2674
        %v2676 = vpop.f32.mrb[0].mxu0
        %2677 = vmatprep.mubr.bf16.mxu0 0
        %2678 = vmatmul.mubr.bf16.gmra.mrb[0].mxu0 %v2371
        %v2679 = vpop.f32.mrb[0].mxu0
        %v2680 = vadd.f32 0.0, %v2679
        %v2681 = vpop.f32.mrb[0].mxu0
        %v2682 = vpop.f32.mrb[0].mxu0
        %v2683 = vadd.f32 0.0, %v2682
        %v2684 = vpop.f32.mrb[0].mxu0
        %2685 = vmatprep.mubr.bf16.mxu0 0
        %2686 = vmatmul.mubr.bf16.gmra.mrb[0].mxu0 %v2374
        %v2687 = vpop.f32.mrb[0].mxu0
        %v2688 = vadd.f32 0.0, %v2687
        %v2689 = vpop.f32.mrb[0].mxu0
        %v2690 = vpop.f32.mrb[0].mxu0
        %v2691 = vadd.f32 0.0, %v2690
        %v2692 = vpop.f32.mrb[0].mxu0
        %2693 = vmatprep.mubr.bf16.mxu0 0
        %2694 = vmatmul.mubr.bf16.gmra.mrb[0].mxu0 %v2377
        %v2695 = vpop.f32.mrb[0].mxu0
        %v2696 = vadd.f32 0.0, %v2695
        %v2697 = vpop.f32.mrb[0].mxu0
        %v2698 = vpop.f32.mrb[0].mxu0
        %v2699 = vadd.f32 0.0, %v2698
        %v2700 = vpop.f32.mrb[0].mxu0
        %2701 = vmatprep.mubr.bf16.mxu0 0
        %2702 = vmatmul.mubr.bf16.gmra.mrb[0].mxu0 %v2380
        %v2703 = vpop.f32.mrb[0].mxu0
        %v2704 = vadd.f32 0.0, %v2703
        %v2705 = vpop.f32.mrb[0].mxu0
        %v2706 = vpop.f32.mrb[0].mxu0
        %v2707 = vadd.f32 0.0, %v2706
        %v2708 = vpop.f32.mrb[0].mxu0
        %2709 = vmatprep.mubr.bf16.mxu0 0
        %2710 = vmatmul.mubr.bf16.gmra.mrb[0].mxu0 %v2383
        %v2711 = vpop.f32.mrb[0].mxu0
        %v2712 = vadd.f32 0.0, %v2711
        %v2713 = vpop.f32.mrb[0].mxu0
        %v2714 = vpop.f32.mrb[0].mxu0
        %v2715 = vadd.f32 0.0, %v2714
        %v2716 = vpop.f32.mrb[0].mxu0
        %2717 = vmatprep.mubr.bf16.mxu0 0
        %2718 = vmatmul.mubr.bf16.gmra.mrb[0].mxu0 %v2386
        %v2719 = vpop.f32.mrb[0].mxu0
        %v2720 = vadd.f32 0.0, %v2719
        %v2721 = vpop.f32.mrb[0].mxu0
        %v2722 = vpop.f32.mrb[0].mxu0
        %v2723 = vadd.f32 0.0, %v2722
        %v2724 = vpop.f32.mrb[0].mxu0
        %2725 = vmatprep.mubr.bf16.mxu0 0
        %2726 = vmatmul.mubr.bf16.gmra.mrb[0].mxu0 %v2389
        %v2727 = vpop.f32.mrb[0].mxu0
        %v2728 = vadd.f32 0.0, %v2727
        %v2729 = vpop.f32.mrb[0].mxu0
        %v2730 = vpop.f32.mrb[0].mxu0
        %v2731 = vadd.f32 0.0, %v2730
        %v2732 = vpop.f32.mrb[0].mxu0
        %2733 = vmatprep.mubr.bf16.mxu0 0
        %2734 = vmatmul.mubr.bf16.gmra.mrb[0].mxu0 %v2392
        %v2735 = vpop.f32.mrb[0].mxu0
        %v2736 = vadd.f32 0.0, %v2735
        %v2737 = vpop.f32.mrb[0].mxu0
        %v2738 = vpop.f32.mrb[0].mxu0
        %v2739 = vadd.f32 0.0, %v2738
        %v2740 = vpop.f32.mrb[0].mxu0
        %2741 = vmatprep.mubr.bf16.mxu0 0
        %2742 = vmatmul.mubr.bf16.gmra.mrb[0].mxu0 %v2395
        %v2743 = vpop.f32.mrb[0].mxu0
        %v2744 = vadd.f32 0.0, %v2743
        %v2745 = vpop.f32.mrb[0].mxu0
        %v2746 = vpop.f32.mrb[0].mxu0
        %v2747 = vadd.f32 0.0, %v2746
        %v2748 = vpop.f32.mrb[0].mxu0
        %2749 = vmatprep.mubr.bf16.mxu0 0
        %2750 = vmatmul.mubr.bf16.gmra.mrb[0].mxu0 %v2398
        %v2751 = vpop.f32.mrb[0].mxu0
        %v2752 = vadd.f32 0.0, %v2751
        %v2753 = vpop.f32.mrb[0].mxu0
        %v2754 = vpop.f32.mrb[0].mxu0
        %v2755 = vadd.f32 0.0, %v2754
        %v2756 = vpop.f32.mrb[0].mxu0
        %2757 = vmatprep.mubr.bf16.mxu0 0
        %2758 = vmatmul.mubr.bf16.gmra.mrb[0].mxu0 %v2401
        %v2759 = vpop.f32.mrb[0].mxu0
        %v2760 = vadd.f32 0.0, %v2759
        %v2761 = vpop.f32.mrb[0].mxu0
        %v2762 = vpop.f32.mrb[0].mxu0
        %v2763 = vadd.f32 0.0, %v2762
        %v2764 = vpop.f32.mrb[0].mxu0
        %2765 = vmatprep.mubr.bf16.mxu0 0
        %2766 = vmatmul.mubr.bf16.gmra.mrb[0].mxu0 %v2404
        %v2767 = vpop.f32.mrb[0].mxu0
        %v2768 = vadd.f32 0.0, %v2767
        %v2769 = vpop.f32.mrb[0].mxu0
        %v2770 = vpop.f32.mrb[0].mxu0
        %v2771 = vadd.f32 0.0, %v2770
        %v2772 = vpop.f32.mrb[0].mxu0
        %2773 = vmatprep.mubr.bf16.mxu0 0
        %2774 = vmatmul.mubr.bf16.gmra.mrb[0].mxu0 %v2616
        %v2775 = vpop.f32.mrb[0].mxu0
        %v2776 = vadd.f32 0.0, %v2775
        %v2777 = vpop.f32.mrb[0].mxu0
        %v2778 = vpop.f32.mrb[0].mxu0
        %v2779 = vadd.f32 0.0, %v2778
        %v2780 = vpop.f32.mrb[0].mxu0
        %2781 = vdwg.mxu0
        %v2782 = vadd.f32 %v2570, %v2656
        %v2783 = vadd.f32 %v2571, %v2659
        %v2784 = vadd.f32 %v2572, %v2664
        %v2785 = vadd.f32 %v2573, %v2667
        %v2786 = vadd.f32 %v2574, %v2672
        %v2787 = vadd.f32 %v2575, %v2675
        %v2788 = vadd.f32 %v2576, %v2680
        %v2789 = vadd.f32 %v2577, %v2683
        %v2790 = vadd.f32 %v2578, %v2688
        %v2791 = vadd.f32 %v2579, %v2691
        %v2792 = vadd.f32 %v2580, %v2696
        %v2793 = vadd.f32 %v2581, %v2699
        %v2794 = vadd.f32 %v2582, %v2704
        %v2795 = vadd.f32 %v2583, %v2707
        %v2796 = vadd.f32 %v2584, %v2712
        %v2797 = vadd.f32 %v2585, %v2715
        %v2798 = vadd.f32 %v2586, %v2720
        %v2799 = vadd.f32 %v2587, %v2723
        %v2800 = vadd.f32 %v2588, %v2728
        %v2801 = vadd.f32 %v2589, %v2731
        %v2802 = vadd.f32 %v2590, %v2736
        %v2803 = vadd.f32 %v2591, %v2739
        %v2804 = vadd.f32 %v2592, %v2744
        %v2805 = vadd.f32 %v2593, %v2747
        %v2806 = vadd.f32 %v2594, %v2752
        %v2807 = vadd.f32 %v2595, %v2755
        %v2808 = vadd.f32 %v2596, %v2760
        %v2809 = vadd.f32 %v2597, %v2763
        %v2810 = vadd.f32 %v2598, %v2768
        %v2811 = vadd.f32 %v2599, %v2771
        %v2812 = vadd.f32 %v2600, %v2776
        %v2813 = vadd.f32 %v2601, %v2779
        %v2815 = vrot.slane %v362, 5
        %v2816 = vrot.slane %v2815, 4
        %v2817 = vrot.slane %v363, 5
        %v2818 = vsel %vm2195, %v2816, %v2817
        %v2819 = vrot.slane %v2817, 4
        %v2820 = vrot.slane %v364, 5
        %v2821 = vsel %vm2195, %v2819, %v2820
        %s2822 = scalar_lea.vmem [#allocation7], 16
        %v2823 = vld [vmem:[%s2822] sm:$0x3]
        %v2824 = vunpack.c.l.b16 %v2818
        %v2825 = vunpack.c.l.b16 %v2821
        %v2826 = vpack.c.b16 %v2825, %v2824
        %v2828 = vsel %vm448, %v2826, 0
        %v2831 = vsel %vm497, %v2823, 0
        %2833 = vmatprep.subr.bf16.mxu0 0
        %2834 = vmatpush1.bf16.msra.mxu0 %v2831
        %2835 = vmatprep.subr.bf16.mxu0 0
        %2836 = vmatpush1.bf16.msra.mxu0 0
        %2837 = vmatprep.subr.bf16.mxu0 0
        %2838 = vmatpush1.bf16.msra.mxu0 0
        %2839 = vmatprep.subr.bf16.mxu0 0
        %2840 = vmatpush1.bf16.msra.mxu0 0
        %2841 = vmatprep.subr.bf16.mxu0 0
        %2842 = vmatpush1.bf16.msra.mxu0 0
        %2843 = vmatprep.subr.bf16.mxu0 0
        %2844 = vmatpush1.bf16.msra.mxu0 0
        %2845 = vmatprep.subr.bf16.mxu0 0
        %2846 = vmatpush1.bf16.msra.mxu0 0
        %2847 = vmatprep.subr.bf16.mxu0 0
        %2848 = vmatpush1.bf16.msra.mxu0 0
        %2849 = vmatprep.subr.bf16.mxu0 0
        %2850 = vmatpush1.bf16.msra.mxu0 0
        %2851 = vmatprep.subr.bf16.mxu0 0
        %2852 = vmatpush1.bf16.msra.mxu0 0
        %2853 = vmatprep.subr.bf16.mxu0 0
        %2854 = vmatpush1.bf16.msra.mxu0 0
        %2855 = vmatprep.subr.bf16.mxu0 0
        %2856 = vmatpush1.bf16.msra.mxu0 0
        %2857 = vmatprep.subr.bf16.mxu0 0
        %2858 = vmatpush1.bf16.msra.mxu0 0
        %2859 = vmatprep.subr.bf16.mxu0 0
        %2860 = vmatpush1.bf16.msra.mxu0 0
        %2861 = vmatprep.subr.bf16.mxu0 0
        %2862 = vmatpush1.bf16.msra.mxu0 0
        %2863 = vmatprep.subr.bf16.mxu0 0
        %2864 = vmatpush1.bf16.msra.mxu0 0
        %2865 = vmatprep.mubr.bf16.mxu0 0
        %2866 = vmatmul.mubr.bf16.gmra.mrb[0].mxu0 %v2365
        %v2867 = vpop.f32.mrb[0].mxu0
        %v2868 = vadd.f32 0.0, %v2867
        %v2869 = vpop.f32.mrb[0].mxu0
        %v2870 = vpop.f32.mrb[0].mxu0
        %v2871 = vadd.f32 0.0, %v2870
        %v2872 = vpop.f32.mrb[0].mxu0
        %2873 = vmatprep.mubr.bf16.mxu0 0
        %2874 = vmatmul.mubr.bf16.gmra.mrb[0].mxu0 %v2368
        %v2875 = vpop.f32.mrb[0].mxu0
        %v2876 = vadd.f32 0.0, %v2875
        %v2877 = vpop.f32.mrb[0].mxu0
        %v2878 = vpop.f32.mrb[0].mxu0
        %v2879 = vadd.f32 0.0, %v2878
        %v2880 = vpop.f32.mrb[0].mxu0
        %2881 = vmatprep.mubr.bf16.mxu0 0
        %2882 = vmatmul.mubr.bf16.gmra.mrb[0].mxu0 %v2371
        %v2883 = vpop.f32.mrb[0].mxu0
        %v2884 = vadd.f32 0.0, %v2883
        %v2885 = vpop.f32.mrb[0].mxu0
        %v2886 = vpop.f32.mrb[0].mxu0
        %v2887 = vadd.f32 0.0, %v2886
        %v2888 = vpop.f32.mrb[0].mxu0
        %2889 = vmatprep.mubr.bf16.mxu0 0
        %2890 = vmatmul.mubr.bf16.gmra.mrb[0].mxu0 %v2374
        %v2891 = vpop.f32.mrb[0].mxu0
        %v2892 = vadd.f32 0.0, %v2891
        %v2893 = vpop.f32.mrb[0].mxu0
        %v2894 = vpop.f32.mrb[0].mxu0
        %v2895 = vadd.f32 0.0, %v2894
        %v2896 = vpop.f32.mrb[0].mxu0
        %2897 = vmatprep.mubr.bf16.mxu0 0
        %2898 = vmatmul.mubr.bf16.gmra.mrb[0].mxu0 %v2377
        %v2899 = vpop.f32.mrb[0].mxu0
        %v2900 = vadd.f32 0.0, %v2899
        %v2901 = vpop.f32.mrb[0].mxu0
        %v2902 = vpop.f32.mrb[0].mxu0
        %v2903 = vadd.f32 0.0, %v2902
        %v2904 = vpop.f32.mrb[0].mxu0
        %2905 = vmatprep.mubr.bf16.mxu0 0
        %2906 = vmatmul.mubr.bf16.gmra.mrb[0].mxu0 %v2380
        %v2907 = vpop.f32.mrb[0].mxu0
        %v2908 = vadd.f32 0.0, %v2907
        %v2909 = vpop.f32.mrb[0].mxu0
        %v2910 = vpop.f32.mrb[0].mxu0
        %v2911 = vadd.f32 0.0, %v2910
        %v2912 = vpop.f32.mrb[0].mxu0
        %2913 = vmatprep.mubr.bf16.mxu0 0
        %2914 = vmatmul.mubr.bf16.gmra.mrb[0].mxu0 %v2383
        %v2915 = vpop.f32.mrb[0].mxu0
        %v2916 = vadd.f32 0.0, %v2915
        %v2917 = vpop.f32.mrb[0].mxu0
        %v2918 = vpop.f32.mrb[0].mxu0
        %v2919 = vadd.f32 0.0, %v2918
        %v2920 = vpop.f32.mrb[0].mxu0
        %2921 = vmatprep.mubr.bf16.mxu0 0
        %2922 = vmatmul.mubr.bf16.gmra.mrb[0].mxu0 %v2386
        %v2923 = vpop.f32.mrb[0].mxu0
        %v2924 = vadd.f32 0.0, %v2923
        %v2925 = vpop.f32.mrb[0].mxu0
        %v2926 = vpop.f32.mrb[0].mxu0
        %v2927 = vadd.f32 0.0, %v2926
        %v2928 = vpop.f32.mrb[0].mxu0
        %2929 = vmatprep.mubr.bf16.mxu0 0
        %2930 = vmatmul.mubr.bf16.gmra.mrb[0].mxu0 %v2389
        %v2931 = vpop.f32.mrb[0].mxu0
        %v2932 = vadd.f32 0.0, %v2931
        %v2933 = vpop.f32.mrb[0].mxu0
        %v2934 = vpop.f32.mrb[0].mxu0
        %v2935 = vadd.f32 0.0, %v2934
        %v2936 = vpop.f32.mrb[0].mxu0
        %2937 = vmatprep.mubr.bf16.mxu0 0
        %2938 = vmatmul.mubr.bf16.gmra.mrb[0].mxu0 %v2392
        %v2939 = vpop.f32.mrb[0].mxu0
        %v2940 = vadd.f32 0.0, %v2939
        %v2941 = vpop.f32.mrb[0].mxu0
        %v2942 = vpop.f32.mrb[0].mxu0
        %v2943 = vadd.f32 0.0, %v2942
        %v2944 = vpop.f32.mrb[0].mxu0
        %2945 = vmatprep.mubr.bf16.mxu0 0
        %2946 = vmatmul.mubr.bf16.gmra.mrb[0].mxu0 %v2395
        %v2947 = vpop.f32.mrb[0].mxu0
        %v2948 = vadd.f32 0.0, %v2947
        %v2949 = vpop.f32.mrb[0].mxu0
        %v2950 = vpop.f32.mrb[0].mxu0
        %v2951 = vadd.f32 0.0, %v2950
        %v2952 = vpop.f32.mrb[0].mxu0
        %2953 = vmatprep.mubr.bf16.mxu0 0
        %2954 = vmatmul.mubr.bf16.gmra.mrb[0].mxu0 %v2398
        %v2955 = vpop.f32.mrb[0].mxu0
        %v2956 = vadd.f32 0.0, %v2955
        %v2957 = vpop.f32.mrb[0].mxu0
        %v2958 = vpop.f32.mrb[0].mxu0
        %v2959 = vadd.f32 0.0, %v2958
        %v2960 = vpop.f32.mrb[0].mxu0
        %2961 = vmatprep.mubr.bf16.mxu0 0
        %2962 = vmatmul.mubr.bf16.gmra.mrb[0].mxu0 %v2401
        %v2963 = vpop.f32.mrb[0].mxu0
        %v2964 = vadd.f32 0.0, %v2963
        %v2965 = vpop.f32.mrb[0].mxu0
        %v2966 = vpop.f32.mrb[0].mxu0
        %v2967 = vadd.f32 0.0, %v2966
        %v2968 = vpop.f32.mrb[0].mxu0
        %2969 = vmatprep.mubr.bf16.mxu0 0
        %2970 = vmatmul.mubr.bf16.gmra.mrb[0].mxu0 %v2404
        %v2971 = vpop.f32.mrb[0].mxu0
        %v2972 = vadd.f32 0.0, %v2971
        %v2973 = vpop.f32.mrb[0].mxu0
        %v2974 = vpop.f32.mrb[0].mxu0
        %v2975 = vadd.f32 0.0, %v2974
        %v2976 = vpop.f32.mrb[0].mxu0
        %2977 = vmatprep.mubr.bf16.mxu0 0
        %2978 = vmatmul.mubr.bf16.gmra.mrb[0].mxu0 %v2616
        %v2979 = vpop.f32.mrb[0].mxu0
        %v2980 = vadd.f32 0.0, %v2979
        %v2981 = vpop.f32.mrb[0].mxu0
        %v2982 = vpop.f32.mrb[0].mxu0
        %v2983 = vadd.f32 0.0, %v2982
        %v2984 = vpop.f32.mrb[0].mxu0
        %2985 = vmatprep.mubr.bf16.mxu0 0
        %2986 = vmatmul.mubr.bf16.gmra.mrb[0].mxu0 %v2828
        %v2987 = vpop.f32.mrb[0].mxu0
        %v2988 = vadd.f32 0.0, %v2987
        %v2989 = vpop.f32.mrb[0].mxu0
        %v2990 = vpop.f32.mrb[0].mxu0
        %v2991 = vadd.f32 0.0, %v2990
        %v2992 = vpop.f32.mrb[0].mxu0
        %2993 = vdwg.mxu0
        %v2994 = vadd.f32 %v2782, %v2868
        %v2995 = vadd.f32 %v2783, %v2871
        %v2996 = vadd.f32 %v2784, %v2876
        %v2997 = vadd.f32 %v2785, %v2879
        %v2998 = vadd.f32 %v2786, %v2884
        %v2999 = vadd.f32 %v2787, %v2887
        %v3000 = vadd.f32 %v2788, %v2892
        %v3001 = vadd.f32 %v2789, %v2895
        %v3002 = vadd.f32 %v2790, %v2900
        %v3003 = vadd.f32 %v2791, %v2903
        %v3004 = vadd.f32 %v2792, %v2908
        %v3005 = vadd.f32 %v2793, %v2911
        %v3006 = vadd.f32 %v2794, %v2916
        %v3007 = vadd.f32 %v2795, %v2919
        %v3008 = vadd.f32 %v2796, %v2924
        %v3009 = vadd.f32 %v2797, %v2927
        %v3010 = vadd.f32 %v2798, %v2932
        %v3011 = vadd.f32 %v2799, %v2935
        %v3012 = vadd.f32 %v2800, %v2940
        %v3013 = vadd.f32 %v2801, %v2943
        %v3014 = vadd.f32 %v2802, %v2948
        %v3015 = vadd.f32 %v2803, %v2951
        %v3016 = vadd.f32 %v2804, %v2956
        %v3017 = vadd.f32 %v2805, %v2959
        %v3018 = vadd.f32 %v2806, %v2964
        %v3019 = vadd.f32 %v2807, %v2967
        %v3020 = vadd.f32 %v2808, %v2972
        %v3021 = vadd.f32 %v2809, %v2975
        %v3022 = vadd.f32 %v2810, %v2980
        %v3023 = vadd.f32 %v2811, %v2983
        %v3024 = vadd.f32 %v2812, %v2988
        %v3025 = vadd.f32 %v2813, %v2991
        %v3026 = vpack.c.bf16 %v2995, %v2994
        %v3027 = vpack.c.bf16 %v2997, %v2996
        %v3028 = vpack.c.bf16 %v2999, %v2998
        %v3029 = vpack.c.bf16 %v3001, %v3000
        %v3030 = vpack.c.bf16 %v3003, %v3002
        %v3031 = vpack.c.bf16 %v3005, %v3004
        %v3032 = vpack.c.bf16 %v3007, %v3006
        %v3033 = vpack.c.bf16 %v3009, %v3008
        %v3034 = vpack.c.bf16 %v3011, %v3010
        %v3035 = vpack.c.bf16 %v3013, %v3012
        %v3036 = vpack.c.bf16 %v3015, %v3014
        %v3037 = vpack.c.bf16 %v3017, %v3016
        %v3038 = vpack.c.bf16 %v3019, %v3018
        %v3039 = vpack.c.bf16 %v3021, %v3020
        %v3040 = vpack.c.bf16 %v3023, %v3022
        %v3041 = vpack.c.bf16 %v3025, %v3024
        %v3058 = vunpack.c.l.b16 %v3026
        %v3059 = vunpack.c.h.b16 %v3026
        %v3060 = vunpack.c.l.b16 %v3027
        %v3061 = vunpack.c.h.b16 %v3027
        %v3062 = vunpack.c.l.b16 %v3028
        %v3063 = vunpack.c.h.b16 %v3028
        %v3064 = vunpack.c.l.b16 %v3029
        %v3065 = vunpack.c.h.b16 %v3029
        %v3066 = vunpack.c.l.b16 %v3030
        %v3067 = vunpack.c.h.b16 %v3030
        %v3068 = vunpack.c.l.b16 %v3031
        %v3069 = vunpack.c.h.b16 %v3031
        %v3070 = vunpack.c.l.b16 %v3032
        %v3071 = vunpack.c.h.b16 %v3032
        %v3072 = vunpack.c.l.b16 %v3033
        %v3073 = vunpack.c.h.b16 %v3033
        %v3074 = vunpack.c.l.b16 %v3034
        %v3075 = vunpack.c.h.b16 %v3034
        %v3076 = vunpack.c.l.b16 %v3035
        %v3077 = vunpack.c.h.b16 %v3035
        %v3078 = vunpack.c.l.b16 %v3036
        %v3079 = vunpack.c.h.b16 %v3036
        %v3080 = vunpack.c.l.b16 %v3037
        %v3081 = vunpack.c.h.b16 %v3037
        %v3082 = vunpack.c.l.b16 %v3038
        %v3083 = vunpack.c.h.b16 %v3038
        %v3084 = vunpack.c.l.b16 %v3039
        %v3085 = vunpack.c.h.b16 %v3039
        %v3086 = vunpack.c.l.b16 %v3040
        %v3087 = vunpack.c.h.b16 %v3040
        %v3088 = vunpack.c.l.b16 %v3041
        %v3089 = vunpack.c.h.b16 %v3041
        %v3090 = vpack.c.b16 %v3058, %v3058
        %v3091 = vpack.c.b16 %v3059, %v3059
        %v3092 = vpack.c.b16 %v3060, %v3060
        %v3093 = vpack.c.b16 %v3061, %v3061
        %v3094 = vpack.c.b16 %v3062, %v3062
        %v3095 = vpack.c.b16 %v3063, %v3063
        %v3096 = vpack.c.b16 %v3064, %v3064
        %v3097 = vpack.c.b16 %v3065, %v3065
        %v3098 = vpack.c.b16 %v3066, %v3066
        %v3099 = vpack.c.b16 %v3067, %v3067
        %v3100 = vpack.c.b16 %v3068, %v3068
        %v3101 = vpack.c.b16 %v3069, %v3069
        %v3102 = vpack.c.b16 %v3070, %v3070
        %v3103 = vpack.c.b16 %v3071, %v3071
        %v3104 = vpack.c.b16 %v3072, %v3072
        %v3105 = vpack.c.b16 %v3073, %v3073
        %v3106 = vpack.c.b16 %v3074, %v3074
        %v3107 = vpack.c.b16 %v3075, %v3075
        %v3108 = vpack.c.b16 %v3076, %v3076
        %v3109 = vpack.c.b16 %v3077, %v3077
        %v3110 = vpack.c.b16 %v3078, %v3078
        %v3111 = vpack.c.b16 %v3079, %v3079
        %v3112 = vpack.c.b16 %v3080, %v3080
        %v3113 = vpack.c.b16 %v3081, %v3081
        %v3114 = vpack.c.b16 %v3082, %v3082
        %v3115 = vpack.c.b16 %v3083, %v3083
        %v3116 = vpack.c.b16 %v3084, %v3084
        %v3117 = vpack.c.b16 %v3085, %v3085
        %v3118 = vpack.c.b16 %v3086, %v3086
        %v3119 = vpack.c.b16 %v3087, %v3087
        %v3120 = vpack.c.b16 %v3088, %v3088
        %v3121 = vpack.c.b16 %v3089, %v3089
        %3154 = vst [vmem:[%s299] sm:$0xf] %v3090
        %3155 = vst [vmem:[%s299 + $0x4] sm:$0xf] %v3091
        %3156 = vst [vmem:[%s299 + $0x8] sm:$0xf] %v3092
        %3157 = vst [vmem:[%s299 + $0xc] sm:$0xf] %v3093
        %3158 = vst [vmem:[%s299 + $0x10] sm:$0xf] %v3094
        %3159 = vst [vmem:[%s299 + $0x14] sm:$0xf] %v3095
        %3160 = vst [vmem:[%s299 + $0x18] sm:$0xf] %v3096
        %3161 = vst [vmem:[%s299 + $0x1c] sm:$0xf] %v3097
        %3162 = vst [vmem:[%s299 + $0x20] sm:$0xf] %v3098
        %3163 = vst [vmem:[%s299 + $0x24] sm:$0xf] %v3099
        %3164 = vst [vmem:[%s299 + $0x28] sm:$0xf] %v3100
        %3165 = vst [vmem:[%s299 + $0x2c] sm:$0xf] %v3101
        %3166 = vst [vmem:[%s299 + $0x30] sm:$0xf] %v3102
        %3167 = vst [vmem:[%s299 + $0x34] sm:$0xf] %v3103
        %3168 = vst [vmem:[%s299 + $0x38] sm:$0xf] %v3104
        %3169 = vst [vmem:[%s299 + $0x3c] sm:$0xf] %v3105
        %3170 = vst [vmem:[%s299 + $0x40] sm:$0xf] %v3106
        %3171 = vst [vmem:[%s299 + $0x44] sm:$0xf] %v3107
        %3172 = vst [vmem:[%s299 + $0x48] sm:$0xf] %v3108
        %3173 = vst [vmem:[%s299 + $0x4c] sm:$0xf] %v3109
        %3174 = vst [vmem:[%s299 + $0x50] sm:$0xf] %v3110
        %3175 = vst [vmem:[%s299 + $0x54] sm:$0xf] %v3111
        %3176 = vst [vmem:[%s299 + $0x58] sm:$0xf] %v3112
        %3177 = vst [vmem:[%s299 + $0x5c] sm:$0xf] %v3113
        %3178 = vst [vmem:[%s299 + $0x60] sm:$0xf] %v3114
        %3179 = vst [vmem:[%s299 + $0x64] sm:$0xf] %v3115
        %3180 = vst [vmem:[%s299 + $0x68] sm:$0xf] %v3116
        %3181 = vst [vmem:[%s299 + $0x6c] sm:$0xf] %v3117
        %3182 = vst [vmem:[%s299 + $0x70] sm:$0xf] %v3118
        %3183 = vst [vmem:[%s299 + $0x74] sm:$0xf] %v3119
        %3184 = vst [vmem:[%s299 + $0x78] sm:$0xf] %v3120
        %3185 = vst [vmem:[%s299 + $0x7c] sm:$0xf] %v3121
        %v3186 = vadd.f32 %v2994, %v2995
        %v3187 = vadd.f32 %v3186, %v2996
        %v3188 = vadd.f32 %v3187, %v2997
        %v3189 = vadd.f32 %v3188, %v2998
        %v3190 = vadd.f32 %v3189, %v2999
        %v3191 = vadd.f32 %v3190, %v3000
        %v3192 = vadd.f32 %v3191, %v3001
        %v3193 = vadd.f32 %v3192, %v3002
        %v3194 = vadd.f32 %v3193, %v3003
        %v3195 = vadd.f32 %v3194, %v3004
        %v3196 = vadd.f32 %v3195, %v3005
        %v3197 = vadd.f32 %v3196, %v3006
        %v3198 = vadd.f32 %v3197, %v3007
        %v3199 = vadd.f32 %v3198, %v3008
        %v3200 = vadd.f32 %v3199, %v3009
        %v3201 = vadd.f32 %v3200, %v3010
        %v3202 = vadd.f32 %v3201, %v3011
        %v3203 = vadd.f32 %v3202, %v3012
        %v3204 = vadd.f32 %v3203, %v3013
        %v3205 = vadd.f32 %v3204, %v3014
        %v3206 = vadd.f32 %v3205, %v3015
        %v3207 = vadd.f32 %v3206, %v3016
        %v3208 = vadd.f32 %v3207, %v3017
        %v3209 = vadd.f32 %v3208, %v3018
        %v3210 = vadd.f32 %v3209, %v3019
        %v3211 = vadd.f32 %v3210, %v3020
        %v3212 = vadd.f32 %v3211, %v3021
        %v3213 = vadd.f32 %v3212, %v3022
        %v3214 = vadd.f32 %v3213, %v3023
        %v3215 = vadd.f32 %v3214, %v3024
        %v3216 = vadd.f32 %v3215, %v3025
        %v3217 = vrot.slane %v3216, 4
        %v3218 = vadd.f32 %v3216, %v3217
        %v3219 = vrot.slane %v3218, 2
        %v3220 = vadd.f32 %v3218, %v3219
        %v3221 = vrot.slane %v3220, 1
        %v3222 = vadd.f32 %v3220, %v3221
        %v3223 = vmul.f32 %v2994, %v2994
        %v3224 = vmul.f32 %v2995, %v2995
        %v3225 = vmul.f32 %v2996, %v2996
        %v3226 = vmul.f32 %v2997, %v2997
        %v3227 = vmul.f32 %v2998, %v2998
        %v3228 = vmul.f32 %v2999, %v2999
        %v3229 = vmul.f32 %v3000, %v3000
        %v3230 = vmul.f32 %v3001, %v3001
        %v3231 = vmul.f32 %v3002, %v3002
        %v3232 = vmul.f32 %v3003, %v3003
        %v3233 = vmul.f32 %v3004, %v3004
        %v3234 = vmul.f32 %v3005, %v3005
        %v3235 = vmul.f32 %v3006, %v3006
        %v3236 = vmul.f32 %v3007, %v3007
        %v3237 = vmul.f32 %v3008, %v3008
        %v3238 = vmul.f32 %v3009, %v3009
        %v3239 = vmul.f32 %v3010, %v3010
        %v3240 = vmul.f32 %v3011, %v3011
        %v3241 = vmul.f32 %v3012, %v3012
        %v3242 = vmul.f32 %v3013, %v3013
        %v3243 = vmul.f32 %v3014, %v3014
        %v3244 = vmul.f32 %v3015, %v3015
        %v3245 = vmul.f32 %v3016, %v3016
        %v3246 = vmul.f32 %v3017, %v3017
        %v3247 = vmul.f32 %v3018, %v3018
        %v3248 = vmul.f32 %v3019, %v3019
        %v3249 = vmul.f32 %v3020, %v3020
        %v3250 = vmul.f32 %v3021, %v3021
        %v3251 = vmul.f32 %v3022, %v3022
        %v3252 = vmul.f32 %v3023, %v3023
        %v3253 = vmul.f32 %v3024, %v3024
        %v3254 = vmul.f32 %v3025, %v3025
        %v3255 = vadd.f32 %v3223, %v3224
        %v3256 = vadd.f32 %v3255, %v3225
        %v3257 = vadd.f32 %v3256, %v3226
        %v3258 = vadd.f32 %v3257, %v3227
        %v3259 = vadd.f32 %v3258, %v3228
        %v3260 = vadd.f32 %v3259, %v3229
        %v3261 = vadd.f32 %v3260, %v3230
        %v3262 = vadd.f32 %v3261, %v3231
        %v3263 = vadd.f32 %v3262, %v3232
        %v3264 = vadd.f32 %v3263, %v3233
        %v3265 = vadd.f32 %v3264, %v3234
        %v3266 = vadd.f32 %v3265, %v3235
        %v3267 = vadd.f32 %v3266, %v3236
        %v3268 = vadd.f32 %v3267, %v3237
        %v3269 = vadd.f32 %v3268, %v3238
        %v3270 = vadd.f32 %v3269, %v3239
        %v3271 = vadd.f32 %v3270, %v3240
        %v3272 = vadd.f32 %v3271, %v3241
        %v3273 = vadd.f32 %v3272, %v3242
        %v3274 = vadd.f32 %v3273, %v3243
        %v3275 = vadd.f32 %v3274, %v3244
        %v3276 = vadd.f32 %v3275, %v3245
        %v3277 = vadd.f32 %v3276, %v3246
        %v3278 = vadd.f32 %v3277, %v3247
        %v3279 = vadd.f32 %v3278, %v3248
        %v3280 = vadd.f32 %v3279, %v3249
        %v3281 = vadd.f32 %v3280, %v3250
        %v3282 = vadd.f32 %v3281, %v3251
        %v3283 = vadd.f32 %v3282, %v3252
        %v3284 = vadd.f32 %v3283, %v3253
        %v3285 = vadd.f32 %v3284, %v3254
        %v3286 = vrot.slane %v3285, 4
        %v3287 = vadd.f32 %v3285, %v3286
        %v3288 = vrot.slane %v3287, 2
        %v3289 = vadd.f32 %v3287, %v3288
        %v3290 = vrot.slane %v3289, 1
        %v3291 = vadd.f32 %v3289, %v3290
        %vm3292 = vcmask 1040384
        %v3293 = vsel %vm3292, %v3222, %v3291
        %3294 = vst [vmem:[%s306] sm:$0x3] %v3293
        %s3295 = sand.u32 %s127, 1
        %s3296 = scalar_lea.sflag [#allocation4], %s3295
        %s3297 = sand.u32 %s127, 1
        %s3298 = smul.addr %s3297, 128
        %s3299 = scalar_lea.vmem [#allocation8], %s3298
        %s3300 = sand.u32 %s155, 1
        %s3301 = scalar_lea.sflag [#allocation10], %s3300
        %s3302 = sand.u32 %s155, 1
        %s3303 = smul.addr %s3302, 2
        %s3304 = scalar_lea.vmem [#allocation9], %s3303
        // Predicated region
        $region45: #{conv_block.2} parent=31 // pred_check
          %p3305 = pneg %p137
        $region46: #{conv_block.2} parent=31 // pred_check_branch
          %3307 = sbr.rel (%p3305) target = $region48
        $region47: #{conv_block.2} parent=31 // pred_region
          %s3308 = smul.u32 16, %s33
          %s3310 = ssub.s32 2048, 2048
          %3311 = vsyncadd %s3296, %s3310
          %s3312 = smul.addr %s3308, 2
          %s3313 = smul.addr %s32, 32
          %s3314 = sadd.s32 %s3312, %s3313
          %s3315 = smul.addr %s3314, 64
          %s3316 = scalar_lea.hbm %s3, %s3315
          %s3317 = sshll.u32 %s3299, 4
          %s3318 = int_to_ptr.vmem [resolvable:$true] %s3317
          %3323 = dma.vmem_to_hbm [thread:$0]  %s3318, 2048, %s3316, %s3296, 64, 64, 4
        $region48: #{conv_block.2} parent=31 // pred_fallthru
          _
        // Predicated region
        $region49: #{conv_block.2} parent=31 // pred_check
          %p3324 = pneg %p165
        $region50: #{conv_block.2} parent=31 // pred_check_branch
          %3326 = sbr.rel (%p3324) target = $region52
        $region51: #{conv_block.2} parent=31 // pred_region
          %s3328 = ssub.s32 32, 32
          %3329 = vsyncadd %s3301, %s3328
          %s3330 = sadd.s32 %s33, %s32
          %s3331 = smul.addr %s3330, 32
          %s3332 = scalar_lea.hbm %s4, %s3331
          %s3334 = sshll.u32 %s3304, 4
          %s3335 = int_to_ptr.vmem [resolvable:$true] %s3334
          %3337 = dma.vmem_to_hbm [thread:$0]  %s3335, 32, %s3332, %s3301
        $region52: #{conv_block.2} parent=31 // pred_fallthru
          _
      $region32: #{conv_block.2} parent=5 // pred_fallthru
        _
      %p3338 = scmp.le.s32.totalorder 2, %s23
      // Predicated region
      $region53: #{conv_block.2} parent=5 // pred_check
        %p3339 = pneg %p3338
      $region54: #{conv_block.2} parent=5 // pred_check_branch
        %3341 = sbr.rel (%p3339) target = $region56
      $region55: #{conv_block.2} parent=5 // pred_region
        %s3342 = ssub.s32 %s23, 2
        // Predicated region
        $region57: #{conv_block.2} parent=55 // pred_check
          %p3343 = pneg %p143
        $region58: #{conv_block.2} parent=55 // pred_check_branch
          %3345 = sbr.rel (%p3343) target = $region60
        $region59: #{conv_block.2} parent=55 // pred_region
          %s3346 = sand.u32 %s128, 1
          %s3347 = scalar_lea.sflag [#allocation4], %s3346
          %s3348 = sand.u32 %s128, 1
          %s3349 = smul.addr %s3348, 128
          %s3350 = scalar_lea.vmem [#allocation8], %s3349
          %3351 = dma.done %s3347, 2048
        $region60: #{conv_block.2} parent=55 // pred_fallthru
          _
        // Predicated region
        $region61: #{conv_block.2} parent=55 // pred_check
          %p3352 = pneg %p171
        $region62: #{conv_block.2} parent=55 // pred_check_branch
          %3354 = sbr.rel (%p3352) target = $region64
        $region63: #{conv_block.2} parent=55 // pred_region
          %s3355 = sand.u32 %s156, 1
          %s3356 = scalar_lea.sflag [#allocation10], %s3355
          %s3357 = sand.u32 %s156, 1
          %s3358 = smul.addr %s3357, 2
          %s3359 = scalar_lea.vmem [#allocation9], %s3358
          %3360 = dma.done %s3356, 32
        $region64: #{conv_block.2} parent=55 // pred_fallthru
          _
      $region56: #{conv_block.2} parent=5 // pred_fallthru
        _
    $region6: #{conv_block.2} parent=1 // loop_footer
      %s27 = sadd.s32 1, %s23
    $region7: #{conv_block.2} parent=1 // loop_footer_branch
      %22 = sbr.rel target = $region3
    $region8: #{conv_block.2} parent=1 // loop_exit
      _
    %3361 = vsyncpa [#allocation3], 1
    %s3362 = scalar_lea.sflag [#allocation3], 1
    %3363 = vsyncpa %s3362, 1
    %3364 = vsyncpa [#allocation6], 1
    %s3365 = scalar_lea.sflag [#allocation6], 1
    %3366 = vsyncpa %s3365, 1
    %3367 = vsyncpa [#allocation4], 1
    %s3368 = scalar_lea.sflag [#allocation4], 1
    %3369 = vsyncpa %s3368, 1
    %3370 = vsyncpa [#allocation10], 1
    %s3371 = scalar_lea.sflag [#allocation10], 1
    %3372 = vsyncpa %s3371, 1

</llo_original>
